<compile_context>
chip_gen: v7x
topology: tpu7x:2x2x1
jax: 0.10.0
libtpu: 0.0.40
codegen_flags: <defaults>
</compile_context>

<pallas_src>
import jax
import jax.numpy as jnp
from jax.experimental import pallas as pl
from jax.experimental.pallas import tpu as pltpu


# ---------------------------- Pallas kernels ----------------------------

def _fc_kernel(z_ref, w_ref, b_ref, o_ref):
    # (B, K) @ (K, tn) + (1, tn); lane-dense on the padded out_features axis.
    o_ref[...] = (
        jnp.dot(z_ref[...], w_ref[...], preferred_element_type=jnp.float32)
        + b_ref[...]
    )


def _conv_gemm_kernel(p_ref, w_ref, b_ref, o_ref, s_ref):
    # p_ref: (K, tm) bf16 patches, w_ref: (Cout, K) bf16, b_ref: (Cout, 1) f32.
    # Output is (Cout, tm): large M axis on the 128 lanes -> dense stores.
    y = (jnp.dot(w_ref[...], p_ref[...], preferred_element_type=jnp.float32)
         + b_ref[...])
    o_ref[...] = y
    # Fused BatchNorm partial statistics for this tile (lane-axis reduction).
    s_ref[:, 0:1] = jnp.sum(y, axis=1, keepdims=True)
    s_ref[:, 1:2] = jnp.sum(y * y, axis=1, keepdims=True)


def _affine_kernel(x_ref, sc_ref, sh_ref, o_ref):
    # BatchNorm normalize + affine folded into y = x * scale + shift.
    # LeakyReLU(negative_slope=1) is the identity -> intentionally omitted.
    o_ref[...] = x_ref[...] * sc_ref[...] + sh_ref[...]


# ----------------------------- call wrappers -----------------------------

def _round_up(x, m):
    return ((x + m - 1) // m) * m


def _pick_tile(mp):
    for t in (512, 256, 128):
        if mp % t == 0:
            return t
    return mp


def pallas_fc(z, w_bf16, b_pad):
    B, Kd = z.shape
    OFp = w_bf16.shape[1]
    tn = _pick_tile(OFp)
    return pl.pallas_call(
        _fc_kernel,
        out_shape=jax.ShapeDtypeStruct((B, OFp), jnp.float32),
        grid=(OFp // tn,),
        in_specs=[
            pl.BlockSpec((B, Kd), lambda i: (0, 0)),
            pl.BlockSpec((Kd, tn), lambda i: (0, i)),
            pl.BlockSpec((1, tn), lambda i: (0, i)),
        ],
        out_specs=pl.BlockSpec((B, tn), lambda i: (0, i)),
        compiler_params=pltpu.CompilerParams(dimension_semantics=("parallel",)),
    )(z.astype(jnp.bfloat16), w_bf16, b_pad)


def pallas_conv_gemm(patches, weights, bias, tm):
    """patches (P, K, Mp) bf16, weights (P, Cout, K) bf16, bias (Cout, 1) f32.

    Returns conv output (P, Cout, Mp) f32 and per-tile partial BN stats
    (P, Mt, Cout, 2) f32 (sum, sum-of-squares)."""
    P, K, Mp = patches.shape
    Cout = weights.shape[1]
    Mt = Mp // tm
    flops = 2 * P * Cout * K * Mp
    bytes_accessed = (patches.size * 2 + weights.size * 2
                      + P * Cout * Mp * 4 + P * Mt * Cout * 2 * 4)
    return pl.pallas_call(
        _conv_gemm_kernel,
        out_shape=(
            jax.ShapeDtypeStruct((P, Cout, Mp), jnp.float32),
            jax.ShapeDtypeStruct((P, Mt, Cout, 2), jnp.float32),
        ),
        grid=(P, Mt),
        in_specs=[
            pl.BlockSpec((None, K, tm), lambda p, m: (p, 0, m)),
            pl.BlockSpec((None, Cout, K), lambda p, m: (p, 0, 0)),
            pl.BlockSpec((Cout, 1), lambda p, m: (0, 0)),
        ],
        out_specs=(
            pl.BlockSpec((None, Cout, tm), lambda p, m: (p, 0, m)),
            pl.BlockSpec((None, None, Cout, 2), lambda p, m: (p, m, 0, 0)),
        ),
        compiler_params=pltpu.CompilerParams(
            dimension_semantics=("parallel", "parallel")),
        cost_estimate=pl.CostEstimate(flops=flops, transcendentals=0,
                                      bytes_accessed=bytes_accessed),
    )(patches, weights, bias)


def pallas_affine(x, scale, shift, tm):
    P, Cout, Mp = x.shape
    Mt = Mp // tm
    return pl.pallas_call(
        _affine_kernel,
        out_shape=jax.ShapeDtypeStruct((P, Cout, Mp), jnp.float32),
        grid=(P, Mt),
        in_specs=[
            pl.BlockSpec((None, Cout, tm), lambda p, m: (p, 0, m)),
            pl.BlockSpec((Cout, 1), lambda p, m: (0, 0)),
            pl.BlockSpec((Cout, 1), lambda p, m: (0, 0)),
        ],
        out_specs=pl.BlockSpec((None, Cout, tm), lambda p, m: (p, 0, m)),
        compiler_params=pltpu.CompilerParams(
            dimension_semantics=("parallel", "parallel")),
    )(x, scale, shift)


# ----------------------- conv lowering (JAX glue) ------------------------

def _im2col_cm(xp, taps, out_h, out_w, mp):
    """Channel-major im2col: xp (Cin, N, Hp, Wp) -> (len(taps)*Cin, mp)."""
    cin, n = xp.shape[0], xp.shape[1]
    m = n * out_h * out_w
    cols = [xp[:, :, dy:dy + out_h, dx:dx + out_w].reshape(cin, m)
            for dy, dx in taps]
    p = jnp.concatenate(cols, axis=0)
    if mp > m:
        p = jnp.pad(p, ((0, 0), (0, mp - m)))
    return p


def decoder_block_forward(x_cm, blk):
    """ConvTranspose2d(4, stride=2, pad=1) + BatchNorm2d (batch stats) + LeakyReLU(1)."""
    _, N, H, W = x_cm.shape
    Cout = blk["gamma"].shape[0]
    M = N * H * W
    Mp = _round_up(M, 128)
    tm = _pick_tile(Mp)

    xp = jnp.pad(x_cm, ((0, 0), (0, 0), (1, 1), (1, 1)))
    phase_patches = []
    for a in (0, 1):
        for b in (0, 1):
            taps = [(a + dr, b + ds) for dr in (0, 1) for ds in (0, 1)]
            phase_patches.append(_im2col_cm(xp, taps, H, W, Mp))
    patches = jnp.stack(phase_patches, axis=0).astype(jnp.bfloat16)  # (4, 4*Cin, Mp)

    # ConvTranspose bias cancels exactly under training-mode BatchNorm; using a
    # zero bias also keeps the M-padding columns at exactly 0 so the fused
    # statistics need no correction.
    zero_bias = jnp.zeros((Cout, 1), jnp.float32)
    conv, stats = pallas_conv_gemm(patches, blk["w_phases"], zero_bias, tm)

    s = jnp.sum(stats, axis=(0, 1))                       # (Cout, 2)
    cnt = 4.0 * M                                          # = N * (2H) * (2W)
    mean = s[:, 0] / cnt
    var = jnp.maximum(s[:, 1] / cnt - mean * mean, 0.0)    # biased variance
    scale = blk["gamma"] * jax.lax.rsqrt(var + 1e-5)
    shift = blk["beta"] - mean * scale

    y = pallas_affine(conv, scale.reshape(Cout, 1), shift.reshape(Cout, 1), tm)

    # interleave the 4 sub-pixel phases back to (Cout, N, 2H, 2W)
    y = y[:, :, :M].reshape(2, 2, Cout, N, H, W)
    y = jnp.transpose(y, (2, 3, 4, 0, 5, 1)).reshape(Cout, N, 2 * H, 2 * W)
    return y


def final_conv_forward(x_cm, params):
    """ReflectionPad2d(2) + Conv2d(base_channels, out_channels, kernel_size=5)."""
    _, N, H, W = x_cm.shape
    Cout = params["final_b_raw"].shape[0]
    M = N * H * W
    Mp = _round_up(M, 128)
    tm = _pick_tile(Mp)
    xp = jnp.pad(x_cm, ((0, 0), (0, 0), (2, 2), (2, 2)), mode="reflect")
    taps = [(kh, kw) for kh in range(5) for kw in range(5)]
    patches = _im2col_cm(xp, taps, H, W, Mp)[None].astype(jnp.bfloat16)  # (1, 25*Cin, Mp)
    conv, _ = pallas_conv_gemm(patches, params["final_w"], params["final_b"], tm)
    y = conv[0, :, :M].reshape(Cout, N, H, W)
    return jnp.transpose(y, (1, 0, 2, 3))                  # -> NCHW


def decoder_forward(params, z):
    B = z.shape[0]
    ls = params["latent_size"]
    cin = params["conv_in_channels"]

    h = pallas_fc(z, params["fc_w"], params["fc_b"])[:, :params["fc_out"]]
    # x.view(B, conv_in_channels, latent_size, latent_size) -> channel-major
    x = jnp.transpose(h.reshape(B, cin, ls, ls), (1, 0, 2, 3))

    # TODO(synk): ResnetBlock source is not provided with the reference module;
    # every ResnetBlock is treated as an identity passthrough.
    for blk in params["blocks"]:
        x = decoder_block_forward(x, blk)

    return final_conv_forward(x, params)


# --------------------- weight prebake + initialization --------------------

def _bake_deconv_weight(w):
    """ConvTranspose2d weight (Cin, Cout, 4, 4) -> (4 phases, Cout, 4*Cin)
    sub-pixel GEMM matrices (K axis is tap-major, channel-minor)."""
    phases = []
    for a in (0, 1):
        for b in (0, 1):
            taps = []
            for dr in (0, 1):
                for ds in (0, 1):
                    kh = 3 - a - 2 * dr
                    kw = 3 - b - 2 * ds
                    taps.append(w[:, :, kh, kw])              # (Cin, Cout)
            phases.append(jnp.concatenate(taps, axis=0).T)    # (Cout, 4*Cin)
    return jnp.stack(phases, axis=0)                          # (4, Cout, 4*Cin)


def _bake_conv_weight(w):
    """Conv2d weight (Cout, Cin, KH, KW) -> (1, Cout, KH*KW*Cin) GEMM matrix."""
    Cout, Cin, KH, KW = w.shape
    wm = jnp.transpose(w, (2, 3, 1, 0)).reshape(KH * KW * Cin, Cout)
    return wm.T[None]


def init_decoder_params(key, *, image_size, out_channels, latent_dim,
                        base_channels, num_layers, duplicate_layer_set):
    total_layers = num_layers + len(
        [l for l in range(num_layers) if l in duplicate_layer_set])
    assert image_size % 2 ** total_layers == 0 and image_size > 0
    latent_size = image_size // 2 ** total_layers
    conv_in_channels = base_channels * 2 ** num_layers
    fc_out = conv_in_channels * latent_size ** 2
    fc_out_p = _round_up(fc_out, 128)

    def nrm(k, shape, scale=0.1):
        return scale * jax.random.normal(k, shape, jnp.float32)

    keys = iter(jax.random.split(key, 64))
    fc_w = nrm(next(keys), (latent_dim, fc_out))      # y = z @ W + b
    fc_b = nrm(next(keys), (fc_out,))
    params = {
        "fc_w_raw": fc_w, "fc_b_raw": fc_b,
        "fc_w": jnp.pad(fc_w, ((0, 0), (0, fc_out_p - fc_out))).astype(jnp.bfloat16),
        "fc_b": jnp.pad(fc_b, (0, fc_out_p - fc_out)).reshape(1, fc_out_p),
        "fc_out": fc_out,
        "latent_size": latent_size,
        "conv_in_channels": conv_in_channels,
        "blocks": [],
    }
    for i in range(num_layers):
        channels = base_channels * 2 ** (num_layers - 1 - i)
        specs = [(channels * 2, channels)]
        if i in duplicate_layer_set:
            specs.append((channels, channels))
        for cin_b, cout_b in specs:
            w = nrm(next(keys), (cin_b, cout_b, 4, 4))   # ConvTranspose2d layout
            b = nrm(next(keys), (cout_b,))
            params["blocks"].append({
                "w_raw": w, "b_raw": b,
                "w_phases": _bake_deconv_weight(w).astype(jnp.bfloat16),
                "gamma": jnp.ones((cout_b,), jnp.float32),   # BatchNorm2d defaults
                "beta": jnp.zeros((cout_b,), jnp.float32),
            })
    fw = nrm(next(keys), (out_channels, base_channels, 5, 5))
    fb = nrm(next(keys), (out_channels,))
    params["final_w_raw"] = fw
    params["final_b_raw"] = fb
    params["final_w"] = _bake_conv_weight(fw).astype(jnp.bfloat16)
    params["final_b"] = fb.reshape(out_channels, 1)
    return params


# ----------------------- pure-JAX (f32) reference -------------------------

def reference_forward(params, z):
    B = z.shape[0]
    ls = params["latent_size"]
    cin = params["conv_in_channels"]
    x = z @ params["fc_w_raw"] + params["fc_b_raw"]
    x = x.reshape(B, cin, ls, ls)
    for blk in params["blocks"]:
        w = blk["w_raw"]                                   # (Cin, Cout, 4, 4)
        wk = jnp.transpose(w, (1, 0, 2, 3))[:, :, ::-1, ::-1]
        y = jax.lax.conv_general_dilated(
            x, wk, window_strides=(1, 1), padding=[(2, 2), (2, 2)],
            lhs_dilation=(2, 2),
            dimension_numbers=("NCHW", "OIHW", "NCHW"))
        y = y + blk["b_raw"][None, :, None, None]
        mean = jnp.mean(y, axis=(0, 2, 3), keepdims=True)
        var = jnp.mean((y - mean) ** 2, axis=(0, 2, 3), keepdims=True)
        y = (y - mean) * jax.lax.rsqrt(var + 1e-5)
        x = y * blk["gamma"][None, :, None, None] + blk["beta"][None, :, None, None]
        # LeakyReLU(negative_slope=1) == identity
    xp = jnp.pad(x, ((0, 0), (0, 0), (2, 2), (2, 2)), mode="reflect")
    y = jax.lax.conv_general_dilated(
        xp, params["final_w_raw"], (1, 1), "VALID",
        dimension_numbers=("NCHW", "OIHW", "NCHW"))
    return y + params["final_b_raw"][None, :, None, None]


# --------------------------------- main ----------------------------------

if __name__ == "__main__":
    cfg = dict(image_size=32, out_channels=3, latent_dim=32,
               base_channels=4, num_layers=3, duplicate_layer_set=[2])
    key = jax.random.PRNGKey(0)
    k_params, k_z = jax.random.split(key)
    params = init_decoder_params(k_params, **cfg)
    z = jax.random.normal(k_z, (2, cfg["latent_dim"]), jnp.float32)

    fwd = jax.jit(lambda zz: decoder_forward(params, zz))
    out = jax.block_until_ready(fwd(z))

    assert out.shape == (2, cfg["out_channels"], cfg["image_size"], cfg["image_size"])
    assert out.dtype == jnp.float32
    assert bool(jnp.all(jnp.isfinite(out)))

    # Correctness check vs. a pure-JAX f32 reference (the Pallas path feeds the
    # MXU bf16 operands, so compare with a generous relative-RMS tolerance).
    ref = jax.block_until_ready(jax.jit(lambda zz: reference_forward(params, zz))(z))
    rel_rms = float(jnp.sqrt(jnp.mean((out - ref) ** 2))
                    / (jnp.sqrt(jnp.mean(ref ** 2)) + 1e-8))
    assert rel_rms < 0.1, f"mismatch vs reference: rel RMS {rel_rms:.4f}"

    print("KERNEL_OK")
</pallas_src>

<mosaic_0001>
module attributes {stable_mosaic.version = 11 : i64} {
  func.func @_fc_kernel(%arg0: i32, %arg1: memref<2x32xbf16, #tpu.memory_space<vmem>>, %arg2: memref<32x128xbf16, #tpu.memory_space<vmem>>, %arg3: memref<1x128xf32, #tpu.memory_space<vmem>>, %arg4: memref<2x128xf32, #tpu.memory_space<vmem>>) attributes {dimension_semantics = [#tpu.dimension_semantics<parallel>], iteration_bounds = array<i64: 1>, scalar_prefetch = 0 : i64, scratch_operands = 0 : i64, tpu.core_type = #tpu.core_type<tc>, window_params = [{pipeline_mode = #tpu.pipeline_mode<synchronous>, transform_indices = @transform_0, window_bounds = array<i64: 2, 32>}, {transform_indices = @transform_1, window_bounds = array<i64: 32, 128>}, {transform_indices = @transform_2, window_bounds = array<i64: 1, 128>}, {transform_indices = @transform_3, window_bounds = array<i64: 2, 128>}]} {
    %c0 = arith.constant 0 : index
    %c0_0 = arith.constant 0 : index
    %0 = vector.load %arg1[%c0, %c0_0] : memref<2x32xbf16, #tpu.memory_space<vmem>>, vector<2x32xbf16>
    %c0_1 = arith.constant 0 : index
    %c0_2 = arith.constant 0 : index
    %1 = vector.load %arg2[%c0_1, %c0_2] : memref<32x128xbf16, #tpu.memory_space<vmem>>, vector<32x128xbf16>
    %cst = arith.constant dense<0.000000e+00> : vector<2x128xf32>
    %2 = tpu.matmul %0, %1, %cst {dimension_numbers = #tpu.dot_dimension_numbers<[1], [0], [0], [1], [0, 0, 1, 1], [], []>} : vector<2x32xbf16>, vector<32x128xbf16>, vector<2x128xf32> -> vector<2x128xf32>
    %c0_3 = arith.constant 0 : index
    %c0_4 = arith.constant 0 : index
    %3 = vector.load %arg3[%c0_3, %c0_4] : memref<1x128xf32, #tpu.memory_space<vmem>>, vector<1x128xf32>
    %4 = vector.broadcast %3 : vector<1x128xf32> to vector<2x128xf32>
    %5 = arith.addf %2, %4 : vector<2x128xf32>
    %c0_5 = arith.constant 0 : index
    %c0_6 = arith.constant 0 : index
    %6 = vector.load %arg4[%c0_5, %c0_6] : memref<2x128xf32, #tpu.memory_space<vmem>>, vector<2x128xf32>
    tpu.vector_store %arg4[%c0_5, %c0_6], %5 {strides = array<i32>} : memref<2x128xf32, #tpu.memory_space<vmem>>, vector<2x128xf32>,
    return
  }
  func.func @transform_0(%arg0: i32) -> (i32, i32) {
    %c0_i32 = arith.constant 0 : i32
    %c0_i32_0 = arith.constant 0 : i32
    %c0_i32_1 = arith.constant 0 : i32
    return %c0_i32, %c0_i32_0 : i32, i32
  }
  func.func @transform_1(%arg0: i32) -> (i32, i32) {
    %c0_i32 = arith.constant 0 : i32
    %c0_i32_0 = arith.constant 0 : i32
    return %c0_i32, %arg0 : i32, i32
  }
  func.func @transform_2(%arg0: i32) -> (i32, i32) {
    %c0_i32 = arith.constant 0 : i32
    %c0_i32_0 = arith.constant 0 : i32
    return %c0_i32, %arg0 : i32, i32
  }
  func.func @transform_3(%arg0: i32) -> (i32, i32) {
    %c0_i32 = arith.constant 0 : i32
    %c0_i32_0 = arith.constant 0 : i32
    return %c0_i32, %arg0 : i32, i32
  }
}

module attributes {stable_mosaic.version = 11 : i64} {
  func.func @_conv_gemm_kernel(%arg0: i32, %arg1: i32, %arg2: memref<1x128x128xbf16, #tpu.memory_space<vmem>>, %arg3: memref<1x16x128xbf16, #tpu.memory_space<vmem>>, %arg4: memref<16x1xf32, #tpu.memory_space<vmem>>, %arg5: memref<1x16x128xf32, #tpu.memory_space<vmem>>, %arg6: memref<1x1x16x2xf32, #tpu.memory_space<vmem>>) attributes {dimension_semantics = [#tpu.dimension_semantics<parallel>, #tpu.dimension_semantics<parallel>], iteration_bounds = array<i64: 4, 1>, scalar_prefetch = 0 : i64, scratch_operands = 0 : i64, tpu.core_type = #tpu.core_type<tc>, window_params = [{transform_indices = @transform_0, window_bounds = array<i64: 1, 128, 128>}, {transform_indices = @transform_1, window_bounds = array<i64: 1, 16, 128>}, {pipeline_mode = #tpu.pipeline_mode<synchronous>, transform_indices = @transform_2, window_bounds = array<i64: 16, 1>}, {transform_indices = @transform_3, window_bounds = array<i64: 1, 16, 128>}, {transform_indices = @transform_4, window_bounds = array<i64: 1, 1, 16, 2>}]} {
    %c0 = arith.constant 0 : index
    %c0_0 = arith.constant 0 : index
    %c0_1 = arith.constant 0 : index
    %0 = vector.load %arg3[%c0, %c0_0, %c0_1] : memref<1x16x128xbf16, #tpu.memory_space<vmem>>, vector<1x16x128xbf16>
    %1 = vector.shape_cast %0 : vector<1x16x128xbf16> to vector<16x128xbf16>
    %c0_2 = arith.constant 0 : index
    %c0_3 = arith.constant 0 : index
    %c0_4 = arith.constant 0 : index
    %2 = vector.load %arg2[%c0_2, %c0_3, %c0_4] : memref<1x128x128xbf16, #tpu.memory_space<vmem>>, vector<1x128x128xbf16>
    %3 = vector.shape_cast %2 : vector<1x128x128xbf16> to vector<128x128xbf16>
    %cst = arith.constant dense<0.000000e+00> : vector<16x128xf32>
    %4 = tpu.matmul %1, %3, %cst {dimension_numbers = #tpu.dot_dimension_numbers<[1], [0], [0], [1], [0, 0, 1, 1], [], []>} : vector<16x128xbf16>, vector<128x128xbf16>, vector<16x128xf32> -> vector<16x128xf32>
    %c0_5 = arith.constant 0 : index
    %c0_6 = arith.constant 0 : index
    %5 = vector.load %arg4[%c0_5, %c0_6] : memref<16x1xf32, #tpu.memory_space<vmem>>, vector<16x1xf32>
    %6 = vector.broadcast %5 : vector<16x1xf32> to vector<16x128xf32>
    %7 = arith.addf %4, %6 : vector<16x128xf32>
    %c0_7 = arith.constant 0 : index
    %c0_8 = arith.constant 0 : index
    %c0_9 = arith.constant 0 : index
    %8 = vector.load %arg5[%c0_7, %c0_8, %c0_9] : memref<1x16x128xf32, #tpu.memory_space<vmem>>, vector<1x16x128xf32>
    %9 = vector.shape_cast %8 : vector<1x16x128xf32> to vector<16x128xf32>
    %10 = vector.shape_cast %7 : vector<16x128xf32> to vector<1x16x128xf32>
    tpu.vector_store %arg5[%c0_7, %c0_8, %c0_9], %10 {strides = array<i32>} : memref<1x16x128xf32, #tpu.memory_space<vmem>>, vector<1x16x128xf32>,
    %cst_10 = arith.constant dense<0.000000e+00> : vector<16xf32>
    %11 = vector.multi_reduction <add>, %7, %cst_10 [1] : vector<16x128xf32> to vector<16xf32>
    %12 = vector.shape_cast %11 : vector<16xf32> to vector<16x1xf32>
    %c0_11 = arith.constant 0 : index
    %c0_12 = arith.constant 0 : index
    %c0_13 = arith.constant 0 : index
    %c0_14 = arith.constant 0 : index
    %13 = vector.load %arg6[%c0_11, %c0_12, %c0_13, %c0_14] : memref<1x1x16x2xf32, #tpu.memory_space<vmem>>, vector<1x1x16x1xf32>
    %14 = vector.shape_cast %13 : vector<1x1x16x1xf32> to vector<16x1xf32>
    %15 = vector.shape_cast %12 : vector<16x1xf32> to vector<1x1x16x1xf32>
    tpu.vector_store %arg6[%c0_11, %c0_12, %c0_13, %c0_14], %15 {strides = array<i32>} : memref<1x1x16x2xf32, #tpu.memory_space<vmem>>, vector<1x1x16x1xf32>,
    %16 = arith.mulf %7, %7 : vector<16x128xf32>
    %cst_15 = arith.constant dense<0.000000e+00> : vector<16xf32>
    %17 = vector.multi_reduction <add>, %16, %cst_15 [1] : vector<16x128xf32> to vector<16xf32>
    %18 = vector.shape_cast %17 : vector<16xf32> to vector<16x1xf32>
    %c0_16 = arith.constant 0 : index
    %c0_17 = arith.constant 0 : index
    %c0_18 = arith.constant 0 : index
    %c1 = arith.constant 1 : index
    %19 = vector.load %arg6[%c0_16, %c0_17, %c0_18, %c1] : memref<1x1x16x2xf32, #tpu.memory_space<vmem>>, vector<1x1x16x1xf32>
    %20 = vector.shape_cast %19 : vector<1x1x16x1xf32> to vector<16x1xf32>
    %21 = vector.shape_cast %18 : vector<16x1xf32> to vector<1x1x16x1xf32>
    tpu.vector_store %arg6[%c0_16, %c0_17, %c0_18, %c1], %21 {strides = array<i32>} : memref<1x1x16x2xf32, #tpu.memory_space<vmem>>, vector<1x1x16x1xf32>,
    return
  }
  func.func @transform_0(%arg0: i32, %arg1: i32) -> (i32, i32, i32) {
    %c0_i32 = arith.constant 0 : i32
    %c0_i32_0 = arith.constant 0 : i32
    return %arg0, %c0_i32, %arg1 : i32, i32, i32
  }
  func.func @transform_1(%arg0: i32, %arg1: i32) -> (i32, i32, i32) {
    %c0_i32 = arith.constant 0 : i32
    %c0_i32_0 = arith.constant 0 : i32
    %c0_i32_1 = arith.constant 0 : i32
    return %arg0, %c0_i32, %c0_i32_0 : i32, i32, i32
  }
  func.func @transform_2(%arg0: i32, %arg1: i32) -> (i32, i32) {
    %c0_i32 = arith.constant 0 : i32
    %c0_i32_0 = arith.constant 0 : i32
    %c0_i32_1 = arith.constant 0 : i32
    return %c0_i32, %c0_i32_0 : i32, i32
  }
  func.func @transform_3(%arg0: i32, %arg1: i32) -> (i32, i32, i32) {
    %c0_i32 = arith.constant 0 : i32
    %c0_i32_0 = arith.constant 0 : i32
    return %arg0, %c0_i32, %arg1 : i32, i32, i32
  }
  func.func @transform_4(%arg0: i32, %arg1: i32) -> (i32, i32, i32, i32) {
    %c0_i32 = arith.constant 0 : i32
    %c0_i32_0 = arith.constant 0 : i32
    %c0_i32_1 = arith.constant 0 : i32
    return %arg0, %arg1, %c0_i32, %c0_i32_0 : i32, i32, i32, i32
  }
}

module attributes {stable_mosaic.version = 11 : i64} {
  func.func @_affine_kernel(%arg0: i32, %arg1: i32, %arg2: memref<1x16x128xf32, #tpu.memory_space<vmem>>, %arg3: memref<16x1xf32, #tpu.memory_space<vmem>>, %arg4: memref<16x1xf32, #tpu.memory_space<vmem>>, %arg5: memref<1x16x128xf32, #tpu.memory_space<vmem>>) attributes {dimension_semantics = [#tpu.dimension_semantics<parallel>, #tpu.dimension_semantics<parallel>], iteration_bounds = array<i64: 4, 1>, scalar_prefetch = 0 : i64, scratch_operands = 0 : i64, tpu.core_type = #tpu.core_type<tc>, window_params = [{transform_indices = @transform_0, window_bounds = array<i64: 1, 16, 128>}, {pipeline_mode = #tpu.pipeline_mode<synchronous>, transform_indices = @transform_1, window_bounds = array<i64: 16, 1>}, {pipeline_mode = #tpu.pipeline_mode<synchronous>, transform_indices = @transform_2, window_bounds = array<i64: 16, 1>}, {transform_indices = @transform_3, window_bounds = array<i64: 1, 16, 128>}]} {
    %c0 = arith.constant 0 : index
    %c0_0 = arith.constant 0 : index
    %c0_1 = arith.constant 0 : index
    %0 = vector.load %arg2[%c0, %c0_0, %c0_1] : memref<1x16x128xf32, #tpu.memory_space<vmem>>, vector<1x16x128xf32>
    %1 = vector.shape_cast %0 : vector<1x16x128xf32> to vector<16x128xf32>
    %c0_2 = arith.constant 0 : index
    %c0_3 = arith.constant 0 : index
    %2 = vector.load %arg3[%c0_2, %c0_3] : memref<16x1xf32, #tpu.memory_space<vmem>>, vector<16x1xf32>
    %3 = vector.broadcast %2 : vector<16x1xf32> to vector<16x128xf32>
    %4 = arith.mulf %1, %3 : vector<16x128xf32>
    %c0_4 = arith.constant 0 : index
    %c0_5 = arith.constant 0 : index
    %5 = vector.load %arg4[%c0_4, %c0_5] : memref<16x1xf32, #tpu.memory_space<vmem>>, vector<16x1xf32>
    %6 = vector.broadcast %5 : vector<16x1xf32> to vector<16x128xf32>
    %7 = arith.addf %4, %6 : vector<16x128xf32>
    %c0_6 = arith.constant 0 : index
    %c0_7 = arith.constant 0 : index
    %c0_8 = arith.constant 0 : index
    %8 = vector.load %arg5[%c0_6, %c0_7, %c0_8] : memref<1x16x128xf32, #tpu.memory_space<vmem>>, vector<1x16x128xf32>
    %9 = vector.shape_cast %8 : vector<1x16x128xf32> to vector<16x128xf32>
    %10 = vector.shape_cast %7 : vector<16x128xf32> to vector<1x16x128xf32>
    tpu.vector_store %arg5[%c0_6, %c0_7, %c0_8], %10 {strides = array<i32>} : memref<1x16x128xf32, #tpu.memory_space<vmem>>, vector<1x16x128xf32>,
    return
  }
  func.func @transform_0(%arg0: i32, %arg1: i32) -> (i32, i32, i32) {
    %c0_i32 = arith.constant 0 : i32
    %c0_i32_0 = arith.constant 0 : i32
    return %arg0, %c0_i32, %arg1 : i32, i32, i32
  }
  func.func @transform_1(%arg0: i32, %arg1: i32) -> (i32, i32) {
    %c0_i32 = arith.constant 0 : i32
    %c0_i32_0 = arith.constant 0 : i32
    %c0_i32_1 = arith.constant 0 : i32
    return %c0_i32, %c0_i32_0 : i32, i32
  }
  func.func @transform_2(%arg0: i32, %arg1: i32) -> (i32, i32) {
    %c0_i32 = arith.constant 0 : i32
    %c0_i32_0 = arith.constant 0 : i32
    %c0_i32_1 = arith.constant 0 : i32
    return %c0_i32, %c0_i32_0 : i32, i32
  }
  func.func @transform_3(%arg0: i32, %arg1: i32) -> (i32, i32, i32) {
    %c0_i32 = arith.constant 0 : i32
    %c0_i32_0 = arith.constant 0 : i32
    return %arg0, %c0_i32, %arg1 : i32, i32, i32
  }
}

module attributes {stable_mosaic.version = 11 : i64} {
  func.func @_conv_gemm_kernel(%arg0: i32, %arg1: i32, %arg2: memref<1x64x128xbf16, #tpu.memory_space<vmem>>, %arg3: memref<1x8x64xbf16, #tpu.memory_space<vmem>>, %arg4: memref<8x1xf32, #tpu.memory_space<vmem>>, %arg5: memref<1x8x128xf32, #tpu.memory_space<vmem>>, %arg6: memref<1x1x8x2xf32, #tpu.memory_space<vmem>>) attributes {dimension_semantics = [#tpu.dimension_semantics<parallel>, #tpu.dimension_semantics<parallel>], iteration_bounds = array<i64: 4, 1>, scalar_prefetch = 0 : i64, scratch_operands = 0 : i64, tpu.core_type = #tpu.core_type<tc>, window_params = [{transform_indices = @transform_0, window_bounds = array<i64: 1, 64, 128>}, {transform_indices = @transform_1, window_bounds = array<i64: 1, 8, 64>}, {pipeline_mode = #tpu.pipeline_mode<synchronous>, transform_indices = @transform_2, window_bounds = array<i64: 8, 1>}, {transform_indices = @transform_3, window_bounds = array<i64: 1, 8, 128>}, {transform_indices = @transform_4, window_bounds = array<i64: 1, 1, 8, 2>}]} {
    %c0 = arith.constant 0 : index
    %c0_0 = arith.constant 0 : index
    %c0_1 = arith.constant 0 : index
    %0 = vector.load %arg3[%c0, %c0_0, %c0_1] : memref<1x8x64xbf16, #tpu.memory_space<vmem>>, vector<1x8x64xbf16>
    %1 = vector.shape_cast %0 : vector<1x8x64xbf16> to vector<8x64xbf16>
    %c0_2 = arith.constant 0 : index
    %c0_3 = arith.constant 0 : index
    %c0_4 = arith.constant 0 : index
    %2 = vector.load %arg2[%c0_2, %c0_3, %c0_4] : memref<1x64x128xbf16, #tpu.memory_space<vmem>>, vector<1x64x128xbf16>
    %3 = vector.shape_cast %2 : vector<1x64x128xbf16> to vector<64x128xbf16>
    %cst = arith.constant dense<0.000000e+00> : vector<8x128xf32>
    %4 = tpu.matmul %1, %3, %cst {dimension_numbers = #tpu.dot_dimension_numbers<[1], [0], [0], [1], [0, 0, 1, 1], [], []>} : vector<8x64xbf16>, vector<64x128xbf16>, vector<8x128xf32> -> vector<8x128xf32>
    %c0_5 = arith.constant 0 : index
    %c0_6 = arith.constant 0 : index
    %5 = vector.load %arg4[%c0_5, %c0_6] : memref<8x1xf32, #tpu.memory_space<vmem>>, vector<8x1xf32>
    %6 = vector.broadcast %5 : vector<8x1xf32> to vector<8x128xf32>
    %7 = arith.addf %4, %6 : vector<8x128xf32>
    %c0_7 = arith.constant 0 : index
    %c0_8 = arith.constant 0 : index
    %c0_9 = arith.constant 0 : index
    %8 = vector.load %arg5[%c0_7, %c0_8, %c0_9] : memref<1x8x128xf32, #tpu.memory_space<vmem>>, vector<1x8x128xf32>
    %9 = vector.shape_cast %8 : vector<1x8x128xf32> to vector<8x128xf32>
    %10 = vector.shape_cast %7 : vector<8x128xf32> to vector<1x8x128xf32>
    tpu.vector_store %arg5[%c0_7, %c0_8, %c0_9], %10 {strides = array<i32>} : memref<1x8x128xf32, #tpu.memory_space<vmem>>, vector<1x8x128xf32>,
    %cst_10 = arith.constant dense<0.000000e+00> : vector<8xf32>
    %11 = vector.multi_reduction <add>, %7, %cst_10 [1] : vector<8x128xf32> to vector<8xf32>
    %12 = vector.shape_cast %11 : vector<8xf32> to vector<8x1xf32>
    %c0_11 = arith.constant 0 : index
    %c0_12 = arith.constant 0 : index
    %c0_13 = arith.constant 0 : index
    %c0_14 = arith.constant 0 : index
    %13 = vector.load %arg6[%c0_11, %c0_12, %c0_13, %c0_14] : memref<1x1x8x2xf32, #tpu.memory_space<vmem>>, vector<1x1x8x1xf32>
    %14 = vector.shape_cast %13 : vector<1x1x8x1xf32> to vector<8x1xf32>
    %15 = vector.shape_cast %12 : vector<8x1xf32> to vector<1x1x8x1xf32>
    tpu.vector_store %arg6[%c0_11, %c0_12, %c0_13, %c0_14], %15 {strides = array<i32>} : memref<1x1x8x2xf32, #tpu.memory_space<vmem>>, vector<1x1x8x1xf32>,
    %16 = arith.mulf %7, %7 : vector<8x128xf32>
    %cst_15 = arith.constant dense<0.000000e+00> : vector<8xf32>
    %17 = vector.multi_reduction <add>, %16, %cst_15 [1] : vector<8x128xf32> to vector<8xf32>
    %18 = vector.shape_cast %17 : vector<8xf32> to vector<8x1xf32>
    %c0_16 = arith.constant 0 : index
    %c0_17 = arith.constant 0 : index
    %c0_18 = arith.constant 0 : index
    %c1 = arith.constant 1 : index
    %19 = vector.load %arg6[%c0_16, %c0_17, %c0_18, %c1] : memref<1x1x8x2xf32, #tpu.memory_space<vmem>>, vector<1x1x8x1xf32>
    %20 = vector.shape_cast %19 : vector<1x1x8x1xf32> to vector<8x1xf32>
    %21 = vector.shape_cast %18 : vector<8x1xf32> to vector<1x1x8x1xf32>
    tpu.vector_store %arg6[%c0_16, %c0_17, %c0_18, %c1], %21 {strides = array<i32>} : memref<1x1x8x2xf32, #tpu.memory_space<vmem>>, vector<1x1x8x1xf32>,
    return
  }
  func.func @transform_0(%arg0: i32, %arg1: i32) -> (i32, i32, i32) {
    %c0_i32 = arith.constant 0 : i32
    %c0_i32_0 = arith.constant 0 : i32
    return %arg0, %c0_i32, %arg1 : i32, i32, i32
  }
  func.func @transform_1(%arg0: i32, %arg1: i32) -> (i32, i32, i32) {
    %c0_i32 = arith.constant 0 : i32
    %c0_i32_0 = arith.constant 0 : i32
    %c0_i32_1 = arith.constant 0 : i32
    return %arg0, %c0_i32, %c0_i32_0 : i32, i32, i32
  }
  func.func @transform_2(%arg0: i32, %arg1: i32) -> (i32, i32) {
    %c0_i32 = arith.constant 0 : i32
    %c0_i32_0 = arith.constant 0 : i32
    %c0_i32_1 = arith.constant 0 : i32
    return %c0_i32, %c0_i32_0 : i32, i32
  }
  func.func @transform_3(%arg0: i32, %arg1: i32) -> (i32, i32, i32) {
    %c0_i32 = arith.constant 0 : i32
    %c0_i32_0 = arith.constant 0 : i32
    return %arg0, %c0_i32, %arg1 : i32, i32, i32
  }
  func.func @transform_4(%arg0: i32, %arg1: i32) -> (i32, i32, i32, i32) {
    %c0_i32 = arith.constant 0 : i32
    %c0_i32_0 = arith.constant 0 : i32
    %c0_i32_1 = arith.constant 0 : i32
    return %arg0, %arg1, %c0_i32, %c0_i32_0 : i32, i32, i32, i32
  }
}

module attributes {stable_mosaic.version = 11 : i64} {
  func.func @_affine_kernel(%arg0: i32, %arg1: i32, %arg2: memref<1x8x128xf32, #tpu.memory_space<vmem>>, %arg3: memref<8x1xf32, #tpu.memory_space<vmem>>, %arg4: memref<8x1xf32, #tpu.memory_space<vmem>>, %arg5: memref<1x8x128xf32, #tpu.memory_space<vmem>>) attributes {dimension_semantics = [#tpu.dimension_semantics<parallel>, #tpu.dimension_semantics<parallel>], iteration_bounds = array<i64: 4, 1>, scalar_prefetch = 0 : i64, scratch_operands = 0 : i64, tpu.core_type = #tpu.core_type<tc>, window_params = [{transform_indices = @transform_0, window_bounds = array<i64: 1, 8, 128>}, {pipeline_mode = #tpu.pipeline_mode<synchronous>, transform_indices = @transform_1, window_bounds = array<i64: 8, 1>}, {pipeline_mode = #tpu.pipeline_mode<synchronous>, transform_indices = @transform_2, window_bounds = array<i64: 8, 1>}, {transform_indices = @transform_3, window_bounds = array<i64: 1, 8, 128>}]} {
    %c0 = arith.constant 0 : index
    %c0_0 = arith.constant 0 : index
    %c0_1 = arith.constant 0 : index
    %0 = vector.load %arg2[%c0, %c0_0, %c0_1] : memref<1x8x128xf32, #tpu.memory_space<vmem>>, vector<1x8x128xf32>
    %1 = vector.shape_cast %0 : vector<1x8x128xf32> to vector<8x128xf32>
    %c0_2 = arith.constant 0 : index
    %c0_3 = arith.constant 0 : index
    %2 = vector.load %arg3[%c0_2, %c0_3] : memref<8x1xf32, #tpu.memory_space<vmem>>, vector<8x1xf32>
    %3 = vector.broadcast %2 : vector<8x1xf32> to vector<8x128xf32>
    %4 = arith.mulf %1, %3 : vector<8x128xf32>
    %c0_4 = arith.constant 0 : index
    %c0_5 = arith.constant 0 : index
    %5 = vector.load %arg4[%c0_4, %c0_5] : memref<8x1xf32, #tpu.memory_space<vmem>>, vector<8x1xf32>
    %6 = vector.broadcast %5 : vector<8x1xf32> to vector<8x128xf32>
    %7 = arith.addf %4, %6 : vector<8x128xf32>
    %c0_6 = arith.constant 0 : index
    %c0_7 = arith.constant 0 : index
    %c0_8 = arith.constant 0 : index
    %8 = vector.load %arg5[%c0_6, %c0_7, %c0_8] : memref<1x8x128xf32, #tpu.memory_space<vmem>>, vector<1x8x128xf32>
    %9 = vector.shape_cast %8 : vector<1x8x128xf32> to vector<8x128xf32>
    %10 = vector.shape_cast %7 : vector<8x128xf32> to vector<1x8x128xf32>
    tpu.vector_store %arg5[%c0_6, %c0_7, %c0_8], %10 {strides = array<i32>} : memref<1x8x128xf32, #tpu.memory_space<vmem>>, vector<1x8x128xf32>,
    return
  }
  func.func @transform_0(%arg0: i32, %arg1: i32) -> (i32, i32, i32) {
    %c0_i32 = arith.constant 0 : i32
    %c0_i32_0 = arith.constant 0 : i32
    return %arg0, %c0_i32, %arg1 : i32, i32, i32
  }
  func.func @transform_1(%arg0: i32, %arg1: i32) -> (i32, i32) {
    %c0_i32 = arith.constant 0 : i32
    %c0_i32_0 = arith.constant 0 : i32
    %c0_i32_1 = arith.constant 0 : i32
    return %c0_i32, %c0_i32_0 : i32, i32
  }
  func.func @transform_2(%arg0: i32, %arg1: i32) -> (i32, i32) {
    %c0_i32 = arith.constant 0 : i32
    %c0_i32_0 = arith.constant 0 : i32
    %c0_i32_1 = arith.constant 0 : i32
    return %c0_i32, %c0_i32_0 : i32, i32
  }
  func.func @transform_3(%arg0: i32, %arg1: i32) -> (i32, i32, i32) {
    %c0_i32 = arith.constant 0 : i32
    %c0_i32_0 = arith.constant 0 : i32
    return %arg0, %c0_i32, %arg1 : i32, i32, i32
  }
}

module attributes {stable_mosaic.version = 11 : i64} {
  func.func @_affine_kernel(%arg0: i32, %arg1: i32, %arg2: memref<1x4x128xf32, #tpu.memory_space<vmem>>, %arg3: memref<4x1xf32, #tpu.memory_space<vmem>>, %arg4: memref<4x1xf32, #tpu.memory_space<vmem>>, %arg5: memref<1x4x128xf32, #tpu.memory_space<vmem>>) attributes {dimension_semantics = [#tpu.dimension_semantics<parallel>, #tpu.dimension_semantics<parallel>], iteration_bounds = array<i64: 4, 1>, scalar_prefetch = 0 : i64, scratch_operands = 0 : i64, tpu.core_type = #tpu.core_type<tc>, window_params = [{transform_indices = @transform_0, window_bounds = array<i64: 1, 4, 128>}, {pipeline_mode = #tpu.pipeline_mode<synchronous>, transform_indices = @transform_1, window_bounds = array<i64: 4, 1>}, {pipeline_mode = #tpu.pipeline_mode<synchronous>, transform_indices = @transform_2, window_bounds = array<i64: 4, 1>}, {transform_indices = @transform_3, window_bounds = array<i64: 1, 4, 128>}]} {
    %c0 = arith.constant 0 : index
    %c0_0 = arith.constant 0 : index
    %c0_1 = arith.constant 0 : index
    %0 = vector.load %arg2[%c0, %c0_0, %c0_1] : memref<1x4x128xf32, #tpu.memory_space<vmem>>, vector<1x4x128xf32>
    %1 = vector.shape_cast %0 : vector<1x4x128xf32> to vector<4x128xf32>
    %c0_2 = arith.constant 0 : index
    %c0_3 = arith.constant 0 : index
    %2 = vector.load %arg3[%c0_2, %c0_3] : memref<4x1xf32, #tpu.memory_space<vmem>>, vector<4x1xf32>
    %3 = vector.broadcast %2 : vector<4x1xf32> to vector<4x128xf32>
    %4 = arith.mulf %1, %3 : vector<4x128xf32>
    %c0_4 = arith.constant 0 : index
    %c0_5 = arith.constant 0 : index
    %5 = vector.load %arg4[%c0_4, %c0_5] : memref<4x1xf32, #tpu.memory_space<vmem>>, vector<4x1xf32>
    %6 = vector.broadcast %5 : vector<4x1xf32> to vector<4x128xf32>
    %7 = arith.addf %4, %6 : vector<4x128xf32>
    %c0_6 = arith.constant 0 : index
    %c0_7 = arith.constant 0 : index
    %c0_8 = arith.constant 0 : index
    %8 = vector.load %arg5[%c0_6, %c0_7, %c0_8] : memref<1x4x128xf32, #tpu.memory_space<vmem>>, vector<1x4x128xf32>
    %9 = vector.shape_cast %8 : vector<1x4x128xf32> to vector<4x128xf32>
    %10 = vector.shape_cast %7 : vector<4x128xf32> to vector<1x4x128xf32>
    tpu.vector_store %arg5[%c0_6, %c0_7, %c0_8], %10 {strides = array<i32>} : memref<1x4x128xf32, #tpu.memory_space<vmem>>, vector<1x4x128xf32>,
    return
  }
  func.func @transform_0(%arg0: i32, %arg1: i32) -> (i32, i32, i32) {
    %c0_i32 = arith.constant 0 : i32
    %c0_i32_0 = arith.constant 0 : i32
    return %arg0, %c0_i32, %arg1 : i32, i32, i32
  }
  func.func @transform_1(%arg0: i32, %arg1: i32) -> (i32, i32) {
    %c0_i32 = arith.constant 0 : i32
    %c0_i32_0 = arith.constant 0 : i32
    %c0_i32_1 = arith.constant 0 : i32
    return %c0_i32, %c0_i32_0 : i32, i32
  }
  func.func @transform_2(%arg0: i32, %arg1: i32) -> (i32, i32) {
    %c0_i32 = arith.constant 0 : i32
    %c0_i32_0 = arith.constant 0 : i32
    %c0_i32_1 = arith.constant 0 : i32
    return %c0_i32, %c0_i32_0 : i32, i32
  }
  func.func @transform_3(%arg0: i32, %arg1: i32) -> (i32, i32, i32) {
    %c0_i32 = arith.constant 0 : i32
    %c0_i32_0 = arith.constant 0 : i32
    return %arg0, %c0_i32, %arg1 : i32, i32, i32
  }
}

module attributes {stable_mosaic.version = 11 : i64} {
  func.func @_conv_gemm_kernel(%arg0: i32, %arg1: i32, %arg2: memref<1x32x128xbf16, #tpu.memory_space<vmem>>, %arg3: memref<1x4x32xbf16, #tpu.memory_space<vmem>>, %arg4: memref<4x1xf32, #tpu.memory_space<vmem>>, %arg5: memref<1x4x128xf32, #tpu.memory_space<vmem>>, %arg6: memref<1x1x4x2xf32, #tpu.memory_space<vmem>>) attributes {dimension_semantics = [#tpu.dimension_semantics<parallel>, #tpu.dimension_semantics<parallel>], iteration_bounds = array<i64: 4, 1>, scalar_prefetch = 0 : i64, scratch_operands = 0 : i64, tpu.core_type = #tpu.core_type<tc>, window_params = [{transform_indices = @transform_0, window_bounds = array<i64: 1, 32, 128>}, {transform_indices = @transform_1, window_bounds = array<i64: 1, 4, 32>}, {pipeline_mode = #tpu.pipeline_mode<synchronous>, transform_indices = @transform_2, window_bounds = array<i64: 4, 1>}, {transform_indices = @transform_3, window_bounds = array<i64: 1, 4, 128>}, {transform_indices = @transform_4, window_bounds = array<i64: 1, 1, 4, 2>}]} {
    %c0 = arith.constant 0 : index
    %c0_0 = arith.constant 0 : index
    %c0_1 = arith.constant 0 : index
    %0 = vector.load %arg3[%c0, %c0_0, %c0_1] : memref<1x4x32xbf16, #tpu.memory_space<vmem>>, vector<1x4x32xbf16>
    %1 = vector.shape_cast %0 : vector<1x4x32xbf16> to vector<4x32xbf16>
    %c0_2 = arith.constant 0 : index
    %c0_3 = arith.constant 0 : index
    %c0_4 = arith.constant 0 : index
    %2 = vector.load %arg2[%c0_2, %c0_3, %c0_4] : memref<1x32x128xbf16, #tpu.memory_space<vmem>>, vector<1x32x128xbf16>
    %3 = vector.shape_cast %2 : vector<1x32x128xbf16> to vector<32x128xbf16>
    %cst = arith.constant dense<0.000000e+00> : vector<4x128xf32>
    %4 = tpu.matmul %1, %3, %cst {dimension_numbers = #tpu.dot_dimension_numbers<[1], [0], [0], [1], [0, 0, 1, 1], [], []>} : vector<4x32xbf16>, vector<32x128xbf16>, vector<4x128xf32> -> vector<4x128xf32>
    %c0_5 = arith.constant 0 : index
    %c0_6 = arith.constant 0 : index
    %5 = vector.load %arg4[%c0_5, %c0_6] : memref<4x1xf32, #tpu.memory_space<vmem>>, vector<4x1xf32>
    %6 = vector.broadcast %5 : vector<4x1xf32> to vector<4x128xf32>
    %7 = arith.addf %4, %6 : vector<4x128xf32>
    %c0_7 = arith.constant 0 : index
    %c0_8 = arith.constant 0 : index
    %c0_9 = arith.constant 0 : index
    %8 = vector.load %arg5[%c0_7, %c0_8, %c0_9] : memref<1x4x128xf32, #tpu.memory_space<vmem>>, vector<1x4x128xf32>
    %9 = vector.shape_cast %8 : vector<1x4x128xf32> to vector<4x128xf32>
    %10 = vector.shape_cast %7 : vector<4x128xf32> to vector<1x4x128xf32>
    tpu.vector_store %arg5[%c0_7, %c0_8, %c0_9], %10 {strides = array<i32>} : memref<1x4x128xf32, #tpu.memory_space<vmem>>, vector<1x4x128xf32>,
    %cst_10 = arith.constant dense<0.000000e+00> : vector<4xf32>
    %11 = vector.multi_reduction <add>, %7, %cst_10 [1] : vector<4x128xf32> to vector<4xf32>
    %12 = vector.shape_cast %11 : vector<4xf32> to vector<4x1xf32>
    %c0_11 = arith.constant 0 : index
    %c0_12 = arith.constant 0 : index
    %c0_13 = arith.constant 0 : index
    %c0_14 = arith.constant 0 : index
    %13 = vector.load %arg6[%c0_11, %c0_12, %c0_13, %c0_14] : memref<1x1x4x2xf32, #tpu.memory_space<vmem>>, vector<1x1x4x1xf32>
    %14 = vector.shape_cast %13 : vector<1x1x4x1xf32> to vector<4x1xf32>
    %15 = vector.shape_cast %12 : vector<4x1xf32> to vector<1x1x4x1xf32>
    tpu.vector_store %arg6[%c0_11, %c0_12, %c0_13, %c0_14], %15 {strides = array<i32>} : memref<1x1x4x2xf32, #tpu.memory_space<vmem>>, vector<1x1x4x1xf32>,
    %16 = arith.mulf %7, %7 : vector<4x128xf32>
    %cst_15 = arith.constant dense<0.000000e+00> : vector<4xf32>
    %17 = vector.multi_reduction <add>, %16, %cst_15 [1] : vector<4x128xf32> to vector<4xf32>
    %18 = vector.shape_cast %17 : vector<4xf32> to vector<4x1xf32>
    %c0_16 = arith.constant 0 : index
    %c0_17 = arith.constant 0 : index
    %c0_18 = arith.constant 0 : index
    %c1 = arith.constant 1 : index
    %19 = vector.load %arg6[%c0_16, %c0_17, %c0_18, %c1] : memref<1x1x4x2xf32, #tpu.memory_space<vmem>>, vector<1x1x4x1xf32>
    %20 = vector.shape_cast %19 : vector<1x1x4x1xf32> to vector<4x1xf32>
    %21 = vector.shape_cast %18 : vector<4x1xf32> to vector<1x1x4x1xf32>
    tpu.vector_store %arg6[%c0_16, %c0_17, %c0_18, %c1], %21 {strides = array<i32>} : memref<1x1x4x2xf32, #tpu.memory_space<vmem>>, vector<1x1x4x1xf32>,
    return
  }
  func.func @transform_0(%arg0: i32, %arg1: i32) -> (i32, i32, i32) {
    %c0_i32 = arith.constant 0 : i32
    %c0_i32_0 = arith.constant 0 : i32
    return %arg0, %c0_i32, %arg1 : i32, i32, i32
  }
  func.func @transform_1(%arg0: i32, %arg1: i32) -> (i32, i32, i32) {
    %c0_i32 = arith.constant 0 : i32
    %c0_i32_0 = arith.constant 0 : i32
    %c0_i32_1 = arith.constant 0 : i32
    return %arg0, %c0_i32, %c0_i32_0 : i32, i32, i32
  }
  func.func @transform_2(%arg0: i32, %arg1: i32) -> (i32, i32) {
    %c0_i32 = arith.constant 0 : i32
    %c0_i32_0 = arith.constant 0 : i32
    %c0_i32_1 = arith.constant 0 : i32
    return %c0_i32, %c0_i32_0 : i32, i32
  }
  func.func @transform_3(%arg0: i32, %arg1: i32) -> (i32, i32, i32) {
    %c0_i32 = arith.constant 0 : i32
    %c0_i32_0 = arith.constant 0 : i32
    return %arg0, %c0_i32, %arg1 : i32, i32, i32
  }
  func.func @transform_4(%arg0: i32, %arg1: i32) -> (i32, i32, i32, i32) {
    %c0_i32 = arith.constant 0 : i32
    %c0_i32_0 = arith.constant 0 : i32
    %c0_i32_1 = arith.constant 0 : i32
    return %arg0, %arg1, %c0_i32, %c0_i32_0 : i32, i32, i32, i32
  }
}

module attributes {stable_mosaic.version = 11 : i64} {
  func.func @_conv_gemm_kernel(%arg0: i32, %arg1: i32, %arg2: memref<1x16x512xbf16, #tpu.memory_space<vmem>>, %arg3: memref<1x4x16xbf16, #tpu.memory_space<vmem>>, %arg4: memref<4x1xf32, #tpu.memory_space<vmem>>, %arg5: memref<1x4x512xf32, #tpu.memory_space<vmem>>, %arg6: memref<1x1x4x2xf32, #tpu.memory_space<vmem>>) attributes {dimension_semantics = [#tpu.dimension_semantics<parallel>, #tpu.dimension_semantics<parallel>], iteration_bounds = array<i64: 4, 1>, scalar_prefetch = 0 : i64, scratch_operands = 0 : i64, tpu.core_type = #tpu.core_type<tc>, window_params = [{transform_indices = @transform_0, window_bounds = array<i64: 1, 16, 512>}, {transform_indices = @transform_1, window_bounds = array<i64: 1, 4, 16>}, {pipeline_mode = #tpu.pipeline_mode<synchronous>, transform_indices = @transform_2, window_bounds = array<i64: 4, 1>}, {transform_indices = @transform_3, window_bounds = array<i64: 1, 4, 512>}, {transform_indices = @transform_4, window_bounds = array<i64: 1, 1, 4, 2>}]} {
    %c0 = arith.constant 0 : index
    %c0_0 = arith.constant 0 : index
    %c0_1 = arith.constant 0 : index
    %0 = vector.load %arg3[%c0, %c0_0, %c0_1] : memref<1x4x16xbf16, #tpu.memory_space<vmem>>, vector<1x4x16xbf16>
    %1 = vector.shape_cast %0 : vector<1x4x16xbf16> to vector<4x16xbf16>
    %c0_2 = arith.constant 0 : index
    %c0_3 = arith.constant 0 : index
    %c0_4 = arith.constant 0 : index
    %2 = vector.load %arg2[%c0_2, %c0_3, %c0_4] : memref<1x16x512xbf16, #tpu.memory_space<vmem>>, vector<1x16x512xbf16>
    %3 = vector.shape_cast %2 : vector<1x16x512xbf16> to vector<16x512xbf16>
    %cst = arith.constant dense<0.000000e+00> : vector<4x512xf32>
    %4 = tpu.matmul %1, %3, %cst {dimension_numbers = #tpu.dot_dimension_numbers<[1], [0], [0], [1], [0, 0, 1, 1], [], []>} : vector<4x16xbf16>, vector<16x512xbf16>, vector<4x512xf32> -> vector<4x512xf32>
    %c0_5 = arith.constant 0 : index
    %c0_6 = arith.constant 0 : index
    %5 = vector.load %arg4[%c0_5, %c0_6] : memref<4x1xf32, #tpu.memory_space<vmem>>, vector<4x1xf32>
    %6 = vector.broadcast %5 : vector<4x1xf32> to vector<4x512xf32>
    %7 = arith.addf %4, %6 : vector<4x512xf32>
    %c0_7 = arith.constant 0 : index
    %c0_8 = arith.constant 0 : index
    %c0_9 = arith.constant 0 : index
    %8 = vector.load %arg5[%c0_7, %c0_8, %c0_9] : memref<1x4x512xf32, #tpu.memory_space<vmem>>, vector<1x4x512xf32>
    %9 = vector.shape_cast %8 : vector<1x4x512xf32> to vector<4x512xf32>
    %10 = vector.shape_cast %7 : vector<4x512xf32> to vector<1x4x512xf32>
    tpu.vector_store %arg5[%c0_7, %c0_8, %c0_9], %10 {strides = array<i32>} : memref<1x4x512xf32, #tpu.memory_space<vmem>>, vector<1x4x512xf32>,
    %cst_10 = arith.constant dense<0.000000e+00> : vector<4xf32>
    %11 = vector.multi_reduction <add>, %7, %cst_10 [1] : vector<4x512xf32> to vector<4xf32>
    %12 = vector.shape_cast %11 : vector<4xf32> to vector<4x1xf32>
    %c0_11 = arith.constant 0 : index
    %c0_12 = arith.constant 0 : index
    %c0_13 = arith.constant 0 : index
    %c0_14 = arith.constant 0 : index
    %13 = vector.load %arg6[%c0_11, %c0_12, %c0_13, %c0_14] : memref<1x1x4x2xf32, #tpu.memory_space<vmem>>, vector<1x1x4x1xf32>
    %14 = vector.shape_cast %13 : vector<1x1x4x1xf32> to vector<4x1xf32>
    %15 = vector.shape_cast %12 : vector<4x1xf32> to vector<1x1x4x1xf32>
    tpu.vector_store %arg6[%c0_11, %c0_12, %c0_13, %c0_14], %15 {strides = array<i32>} : memref<1x1x4x2xf32, #tpu.memory_space<vmem>>, vector<1x1x4x1xf32>,
    %16 = arith.mulf %7, %7 : vector<4x512xf32>
    %cst_15 = arith.constant dense<0.000000e+00> : vector<4xf32>
    %17 = vector.multi_reduction <add>, %16, %cst_15 [1] : vector<4x512xf32> to vector<4xf32>
    %18 = vector.shape_cast %17 : vector<4xf32> to vector<4x1xf32>
    %c0_16 = arith.constant 0 : index
    %c0_17 = arith.constant 0 : index
    %c0_18 = arith.constant 0 : index
    %c1 = arith.constant 1 : index
    %19 = vector.load %arg6[%c0_16, %c0_17, %c0_18, %c1] : memref<1x1x4x2xf32, #tpu.memory_space<vmem>>, vector<1x1x4x1xf32>
    %20 = vector.shape_cast %19 : vector<1x1x4x1xf32> to vector<4x1xf32>
    %21 = vector.shape_cast %18 : vector<4x1xf32> to vector<1x1x4x1xf32>
    tpu.vector_store %arg6[%c0_16, %c0_17, %c0_18, %c1], %21 {strides = array<i32>} : memref<1x1x4x2xf32, #tpu.memory_space<vmem>>, vector<1x1x4x1xf32>,
    return
  }
  func.func @transform_0(%arg0: i32, %arg1: i32) -> (i32, i32, i32) {
    %c0_i32 = arith.constant 0 : i32
    %c0_i32_0 = arith.constant 0 : i32
    return %arg0, %c0_i32, %arg1 : i32, i32, i32
  }
  func.func @transform_1(%arg0: i32, %arg1: i32) -> (i32, i32, i32) {
    %c0_i32 = arith.constant 0 : i32
    %c0_i32_0 = arith.constant 0 : i32
    %c0_i32_1 = arith.constant 0 : i32
    return %arg0, %c0_i32, %c0_i32_0 : i32, i32, i32
  }
  func.func @transform_2(%arg0: i32, %arg1: i32) -> (i32, i32) {
    %c0_i32 = arith.constant 0 : i32
    %c0_i32_0 = arith.constant 0 : i32
    %c0_i32_1 = arith.constant 0 : i32
    return %c0_i32, %c0_i32_0 : i32, i32
  }
  func.func @transform_3(%arg0: i32, %arg1: i32) -> (i32, i32, i32) {
    %c0_i32 = arith.constant 0 : i32
    %c0_i32_0 = arith.constant 0 : i32
    return %arg0, %c0_i32, %arg1 : i32, i32, i32
  }
  func.func @transform_4(%arg0: i32, %arg1: i32) -> (i32, i32, i32, i32) {
    %c0_i32 = arith.constant 0 : i32
    %c0_i32_0 = arith.constant 0 : i32
    %c0_i32_1 = arith.constant 0 : i32
    return %arg0, %arg1, %c0_i32, %c0_i32_0 : i32, i32, i32, i32
  }
}

module attributes {stable_mosaic.version = 11 : i64} {
  func.func @_affine_kernel(%arg0: i32, %arg1: i32, %arg2: memref<1x4x512xf32, #tpu.memory_space<vmem>>, %arg3: memref<4x1xf32, #tpu.memory_space<vmem>>, %arg4: memref<4x1xf32, #tpu.memory_space<vmem>>, %arg5: memref<1x4x512xf32, #tpu.memory_space<vmem>>) attributes {dimension_semantics = [#tpu.dimension_semantics<parallel>, #tpu.dimension_semantics<parallel>], iteration_bounds = array<i64: 4, 1>, scalar_prefetch = 0 : i64, scratch_operands = 0 : i64, tpu.core_type = #tpu.core_type<tc>, window_params = [{transform_indices = @transform_0, window_bounds = array<i64: 1, 4, 512>}, {pipeline_mode = #tpu.pipeline_mode<synchronous>, transform_indices = @transform_1, window_bounds = array<i64: 4, 1>}, {pipeline_mode = #tpu.pipeline_mode<synchronous>, transform_indices = @transform_2, window_bounds = array<i64: 4, 1>}, {transform_indices = @transform_3, window_bounds = array<i64: 1, 4, 512>}]} {
    %c0 = arith.constant 0 : index
    %c0_0 = arith.constant 0 : index
    %c0_1 = arith.constant 0 : index
    %0 = vector.load %arg2[%c0, %c0_0, %c0_1] : memref<1x4x512xf32, #tpu.memory_space<vmem>>, vector<1x4x512xf32>
    %1 = vector.shape_cast %0 : vector<1x4x512xf32> to vector<4x512xf32>
    %c0_2 = arith.constant 0 : index
    %c0_3 = arith.constant 0 : index
    %2 = vector.load %arg3[%c0_2, %c0_3] : memref<4x1xf32, #tpu.memory_space<vmem>>, vector<4x1xf32>
    %3 = vector.broadcast %2 : vector<4x1xf32> to vector<4x512xf32>
    %4 = arith.mulf %1, %3 : vector<4x512xf32>
    %c0_4 = arith.constant 0 : index
    %c0_5 = arith.constant 0 : index
    %5 = vector.load %arg4[%c0_4, %c0_5] : memref<4x1xf32, #tpu.memory_space<vmem>>, vector<4x1xf32>
    %6 = vector.broadcast %5 : vector<4x1xf32> to vector<4x512xf32>
    %7 = arith.addf %4, %6 : vector<4x512xf32>
    %c0_6 = arith.constant 0 : index
    %c0_7 = arith.constant 0 : index
    %c0_8 = arith.constant 0 : index
    %8 = vector.load %arg5[%c0_6, %c0_7, %c0_8] : memref<1x4x512xf32, #tpu.memory_space<vmem>>, vector<1x4x512xf32>
    %9 = vector.shape_cast %8 : vector<1x4x512xf32> to vector<4x512xf32>
    %10 = vector.shape_cast %7 : vector<4x512xf32> to vector<1x4x512xf32>
    tpu.vector_store %arg5[%c0_6, %c0_7, %c0_8], %10 {strides = array<i32>} : memref<1x4x512xf32, #tpu.memory_space<vmem>>, vector<1x4x512xf32>,
    return
  }
  func.func @transform_0(%arg0: i32, %arg1: i32) -> (i32, i32, i32) {
    %c0_i32 = arith.constant 0 : i32
    %c0_i32_0 = arith.constant 0 : i32
    return %arg0, %c0_i32, %arg1 : i32, i32, i32
  }
  func.func @transform_1(%arg0: i32, %arg1: i32) -> (i32, i32) {
    %c0_i32 = arith.constant 0 : i32
    %c0_i32_0 = arith.constant 0 : i32
    %c0_i32_1 = arith.constant 0 : i32
    return %c0_i32, %c0_i32_0 : i32, i32
  }
  func.func @transform_2(%arg0: i32, %arg1: i32) -> (i32, i32) {
    %c0_i32 = arith.constant 0 : i32
    %c0_i32_0 = arith.constant 0 : i32
    %c0_i32_1 = arith.constant 0 : i32
    return %c0_i32, %c0_i32_0 : i32, i32
  }
  func.func @transform_3(%arg0: i32, %arg1: i32) -> (i32, i32, i32) {
    %c0_i32 = arith.constant 0 : i32
    %c0_i32_0 = arith.constant 0 : i32
    return %arg0, %c0_i32, %arg1 : i32, i32, i32
  }
}

module attributes {stable_mosaic.version = 11 : i64} {
  func.func @_conv_gemm_kernel(%arg0: i32, %arg1: i32, %arg2: memref<1x100x512xbf16, #tpu.memory_space<vmem>>, %arg3: memref<1x3x100xbf16, #tpu.memory_space<vmem>>, %arg4: memref<3x1xf32, #tpu.memory_space<vmem>>, %arg5: memref<1x3x512xf32, #tpu.memory_space<vmem>>, %arg6: memref<1x1x3x2xf32, #tpu.memory_space<vmem>>) attributes {dimension_semantics = [#tpu.dimension_semantics<parallel>, #tpu.dimension_semantics<parallel>], iteration_bounds = array<i64: 1, 4>, scalar_prefetch = 0 : i64, scratch_operands = 0 : i64, tpu.core_type = #tpu.core_type<tc>, window_params = [{transform_indices = @transform_0, window_bounds = array<i64: 1, 100, 512>}, {transform_indices = @transform_1, window_bounds = array<i64: 1, 3, 100>}, {pipeline_mode = #tpu.pipeline_mode<synchronous>, transform_indices = @transform_2, window_bounds = array<i64: 3, 1>}, {transform_indices = @transform_3, window_bounds = array<i64: 1, 3, 512>}, {transform_indices = @transform_4, window_bounds = array<i64: 1, 1, 3, 2>}]} {
    %c0 = arith.constant 0 : index
    %c0_0 = arith.constant 0 : index
    %c0_1 = arith.constant 0 : index
    %0 = vector.load %arg3[%c0, %c0_0, %c0_1] : memref<1x3x100xbf16, #tpu.memory_space<vmem>>, vector<1x3x100xbf16>
    %1 = vector.shape_cast %0 : vector<1x3x100xbf16> to vector<3x100xbf16>
    %c0_2 = arith.constant 0 : index
    %c0_3 = arith.constant 0 : index
    %c0_4 = arith.constant 0 : index
    %2 = vector.load %arg2[%c0_2, %c0_3, %c0_4] : memref<1x100x512xbf16, #tpu.memory_space<vmem>>, vector<1x100x512xbf16>
    %3 = vector.shape_cast %2 : vector<1x100x512xbf16> to vector<100x512xbf16>
    %cst = arith.constant dense<0.000000e+00> : vector<3x512xf32>
    %4 = tpu.matmul %1, %3, %cst {dimension_numbers = #tpu.dot_dimension_numbers<[1], [0], [0], [1], [0, 0, 1, 1], [], []>} : vector<3x100xbf16>, vector<100x512xbf16>, vector<3x512xf32> -> vector<3x512xf32>
    %c0_5 = arith.constant 0 : index
    %c0_6 = arith.constant 0 : index
    %5 = vector.load %arg4[%c0_5, %c0_6] : memref<3x1xf32, #tpu.memory_space<vmem>>, vector<3x1xf32>
    %6 = vector.broadcast %5 : vector<3x1xf32> to vector<3x512xf32>
    %7 = arith.addf %4, %6 : vector<3x512xf32>
    %c0_7 = arith.constant 0 : index
    %c0_8 = arith.constant 0 : index
    %c0_9 = arith.constant 0 : index
    %8 = vector.load %arg5[%c0_7, %c0_8, %c0_9] : memref<1x3x512xf32, #tpu.memory_space<vmem>>, vector<1x3x512xf32>
    %9 = vector.shape_cast %8 : vector<1x3x512xf32> to vector<3x512xf32>
    %10 = vector.shape_cast %7 : vector<3x512xf32> to vector<1x3x512xf32>
    tpu.vector_store %arg5[%c0_7, %c0_8, %c0_9], %10 {strides = array<i32>} : memref<1x3x512xf32, #tpu.memory_space<vmem>>, vector<1x3x512xf32>,
    %cst_10 = arith.constant dense<0.000000e+00> : vector<3xf32>
    %11 = vector.multi_reduction <add>, %7, %cst_10 [1] : vector<3x512xf32> to vector<3xf32>
    %12 = vector.shape_cast %11 : vector<3xf32> to vector<3x1xf32>
    %c0_11 = arith.constant 0 : index
    %c0_12 = arith.constant 0 : index
    %c0_13 = arith.constant 0 : index
    %c0_14 = arith.constant 0 : index
    %13 = vector.load %arg6[%c0_11, %c0_12, %c0_13, %c0_14] : memref<1x1x3x2xf32, #tpu.memory_space<vmem>>, vector<1x1x3x1xf32>
    %14 = vector.shape_cast %13 : vector<1x1x3x1xf32> to vector<3x1xf32>
    %15 = vector.shape_cast %12 : vector<3x1xf32> to vector<1x1x3x1xf32>
    tpu.vector_store %arg6[%c0_11, %c0_12, %c0_13, %c0_14], %15 {strides = array<i32>} : memref<1x1x3x2xf32, #tpu.memory_space<vmem>>, vector<1x1x3x1xf32>,
    %16 = arith.mulf %7, %7 : vector<3x512xf32>
    %cst_15 = arith.constant dense<0.000000e+00> : vector<3xf32>
    %17 = vector.multi_reduction <add>, %16, %cst_15 [1] : vector<3x512xf32> to vector<3xf32>
    %18 = vector.shape_cast %17 : vector<3xf32> to vector<3x1xf32>
    %c0_16 = arith.constant 0 : index
    %c0_17 = arith.constant 0 : index
    %c0_18 = arith.constant 0 : index
    %c1 = arith.constant 1 : index
    %19 = vector.load %arg6[%c0_16, %c0_17, %c0_18, %c1] : memref<1x1x3x2xf32, #tpu.memory_space<vmem>>, vector<1x1x3x1xf32>
    %20 = vector.shape_cast %19 : vector<1x1x3x1xf32> to vector<3x1xf32>
    %21 = vector.shape_cast %18 : vector<3x1xf32> to vector<1x1x3x1xf32>
    tpu.vector_store %arg6[%c0_16, %c0_17, %c0_18, %c1], %21 {strides = array<i32>} : memref<1x1x3x2xf32, #tpu.memory_space<vmem>>, vector<1x1x3x1xf32>,
    return
  }
  func.func @transform_0(%arg0: i32, %arg1: i32) -> (i32, i32, i32) {
    %c0_i32 = arith.constant 0 : i32
    %c0_i32_0 = arith.constant 0 : i32
    return %arg0, %c0_i32, %arg1 : i32, i32, i32
  }
  func.func @transform_1(%arg0: i32, %arg1: i32) -> (i32, i32, i32) {
    %c0_i32 = arith.constant 0 : i32
    %c0_i32_0 = arith.constant 0 : i32
    %c0_i32_1 = arith.constant 0 : i32
    return %arg0, %c0_i32, %c0_i32_0 : i32, i32, i32
  }
  func.func @transform_2(%arg0: i32, %arg1: i32) -> (i32, i32) {
    %c0_i32 = arith.constant 0 : i32
    %c0_i32_0 = arith.constant 0 : i32
    %c0_i32_1 = arith.constant 0 : i32
    return %c0_i32, %c0_i32_0 : i32, i32
  }
  func.func @transform_3(%arg0: i32, %arg1: i32) -> (i32, i32, i32) {
    %c0_i32 = arith.constant 0 : i32
    %c0_i32_0 = arith.constant 0 : i32
    return %arg0, %c0_i32, %arg1 : i32, i32, i32
  }
  func.func @transform_4(%arg0: i32, %arg1: i32) -> (i32, i32, i32, i32) {
    %c0_i32 = arith.constant 0 : i32
    %c0_i32_0 = arith.constant 0 : i32
    %c0_i32_1 = arith.constant 0 : i32
    return %arg0, %arg1, %c0_i32, %c0_i32_0 : i32, i32, i32, i32
  }
}

</mosaic_0001>

<llo_original>
// kernel: _lambda_.10
$region0: #{_lambda_.10}
  #allocation0 [shape = 'u32[]', space=smem, size = 0x4, offset = 0x4, fixed_abs, tag = 'smem constant byte address 0x4 - core index']
  #allocation1 [shape = 'u32[144,128]{1,0:T(1,128)}', space=vmem, size = 0x12000, scoped, tag = 'internal scratch']
  %s0 = inlined_call_operand.vmem [shape: bf16[2,32], index: 0, kind: input, shape index: {}]
  %s1 = inlined_call_operand.vmem [shape: bf16[32,128], index: 1, kind: input, shape index: {}]
  %s2 = inlined_call_operand.vmem [shape: f32[1,128], index: 2, kind: input, shape index: {}]
  %s3 = inlined_call_operand.vmem [shape: f32[2,128], index: 3, kind: output, shape index: {}]
  %s4 = sld [smem:[#allocation0]]
  $region22: #{_lambda_.10} parent=0
    _
  %s6 = ssub.s32 1, %s4
  %s7 = scalar_select 0, %s6, %s4
  // Predicated region
  $region2: #{_lambda_.10} parent=0 // pred_check
    _
  $region3: #{_lambda_.10} parent=0 // pred_check_branch
    %9 = sbr.rel (0) target = $region5
  $region4: #{_lambda_.10} parent=0 // pred_region
    _
  $region5: #{_lambda_.10} parent=0 // pred_fallthru
    _
  // Predicated region
  $region6: #{_lambda_.10} parent=0 // pred_check
    _
  $region7: #{_lambda_.10} parent=0 // pred_check_branch
    %11 = sbr.rel (0) target = $region9
  $region8: #{_lambda_.10} parent=0 // pred_region
    _
  $region9: #{_lambda_.10} parent=0 // pred_fallthru
    _
  // Predicated region
  $region10: #{_lambda_.10} parent=0 // pred_check
    _
  $region11: #{_lambda_.10} parent=0 // pred_check_branch
    %13 = sbr.rel (0) target = $region13
  $region12: #{_lambda_.10} parent=0 // pred_region
    _
  $region13: #{_lambda_.10} parent=0 // pred_fallthru
    _
  %v15 = vld [vmem:[%s0] sm:$0x1]
  %v16 = vld [vmem:[%s1] sm:$0xf]
  %v17 = vld [vmem:[%s1 + $0x4] sm:$0xf]
  %v18 = vld [vmem:[%s1 + $0x8] sm:$0xf]
  %v19 = vld [vmem:[%s1 + $0xc] sm:$0xf]
  %v20 = vld [vmem:[%s2] sm:$0x1]
  %v22 = vlaneseq
  %v23 = vshrl.u32 %v22, 7
  %v24 = vsub.s32 0, %v23
  %v25 = vrot.slane %v20, %v24
  %v31 = vunpack.c.l.b16 %v16
  %v32 = vunpack.c.l.b16 %v17
  %v33 = vunpack.c.l.b16 %v18
  %v34 = vunpack.c.l.b16 %v19
  %v35 = vpack.c.b16 %v32, %v31
  %v36 = vpack.c.b16 %v34, %v33
  %vm39 = vcmask 261120
  %v41 = vsel %vm39, %v15, 0
  %43 = vmatprep.subr.bf16.mxu0 0
  %44 = vmatpush1.bf16.msra.mxu0 %v35
  %45 = vmatprep.subr.bf16.mxu0 0
  %46 = vmatpush1.bf16.msra.mxu0 %v36
  %47 = vmatprep.subr.bf16.mxu0 0
  %48 = vmatpush1.bf16.msra.mxu0 0
  %49 = vmatprep.subr.bf16.mxu0 0
  %50 = vmatpush1.bf16.msra.mxu0 0
  %51 = vmatprep.subr.bf16.mxu0 0
  %52 = vmatpush1.bf16.msra.mxu0 0
  %53 = vmatprep.subr.bf16.mxu0 0
  %54 = vmatpush1.bf16.msra.mxu0 0
  %55 = vmatprep.subr.bf16.mxu0 0
  %56 = vmatpush1.bf16.msra.mxu0 0
  %57 = vmatprep.subr.bf16.mxu0 0
  %58 = vmatpush1.bf16.msra.mxu0 0
  %59 = vmatprep.subr.bf16.mxu0 0
  %60 = vmatpush1.bf16.msra.mxu0 0
  %61 = vmatprep.subr.bf16.mxu0 0
  %62 = vmatpush1.bf16.msra.mxu0 0
  %63 = vmatprep.subr.bf16.mxu0 0
  %64 = vmatpush1.bf16.msra.mxu0 0
  %65 = vmatprep.subr.bf16.mxu0 0
  %66 = vmatpush1.bf16.msra.mxu0 0
  %67 = vmatprep.subr.bf16.mxu0 0
  %68 = vmatpush1.bf16.msra.mxu0 0
  %69 = vmatprep.subr.bf16.mxu0 0
  %70 = vmatpush1.bf16.msra.mxu0 0
  %71 = vmatprep.subr.bf16.mxu0 0
  %72 = vmatpush1.bf16.msra.mxu0 0
  %73 = vmatprep.subr.bf16.mxu0 0
  %74 = vmatpush1.bf16.msra.mxu0 0
  %75 = vmatprep.mubr.bf16.mxu0 0
  %76 = vmatmul.mubr.bf16.gmra.mrb[0].mxu0 %v41
  %v77 = vpop.f32.mrb[0].mxu0
  %v78 = vadd.f32 %v25, %v77
  %v79 = vpop.f32.mrb[0].mxu0
  %v80 = vpop.f32.mrb[0].mxu0
  %v81 = vpop.f32.mrb[0].mxu0
  %82 = vdwg.mxu0
  %83 = vst [vmem:[%s3] sm:$0x3] %v78
  // Predicated region
  $region14: #{_lambda_.10} parent=0 // pred_check
    _
  $region15: #{_lambda_.10} parent=0 // pred_check_branch
    %85 = sbr.rel (0) target = $region17
  $region16: #{_lambda_.10} parent=0 // pred_region
    _
  $region17: #{_lambda_.10} parent=0 // pred_fallthru
    _
  // Predicated region
  $region18: #{_lambda_.10} parent=0 // pred_check
    _
  $region19: #{_lambda_.10} parent=0 // pred_check_branch
    %87 = sbr.rel (0) target = $region21
  $region20: #{_lambda_.10} parent=0 // pred_region
    _
  $region21: #{_lambda_.10} parent=0 // pred_fallthru
    _

// kernel: _lambda_.12
$region0: #{_lambda_.12}
  #allocation0 [shape = 'u32[]', space=smem, size = 0x4, offset = 0x4, fixed_abs, tag = 'smem constant byte address 0x4 - core index']
  #allocation1 [shape = 'u32[144,128]{1,0:T(1,128)}', space=vmem, size = 0x12000, scoped, tag = 'internal scratch']
  %s0 = inlined_call_operand.vmem [shape: f32[4,16,128], index: 0, kind: input, shape index: {}]
  %s1 = inlined_call_operand.vmem [shape: f32[16,1], index: 1, kind: input, shape index: {}]
  %s2 = inlined_call_operand.vmem [shape: f32[16,1], index: 2, kind: input, shape index: {}]
  %s3 = inlined_call_operand.vmem [shape: f32[4,16,128], index: 3, kind: output, shape index: {}]
  %s4 = sld [smem:[#allocation0]]
  $region45: #{_lambda_.12} parent=0
    _
  %s6 = ssub.s32 1, %s4
  %s7 = scalar_select 0, %s6, %s4
  loop: start=0, step=1, limit=6
  $region2: #{_lambda_.12} parent=0 // loop_pre_header
    _
  $region3: #{_lambda_.12} parent=0 // loop_header
    %s9 = sphi 0, %s13
    %p10 = scmp.ge.s32.totalorder %s9, 6
    %s16 = sphi 0, %s28
    %s17 = sphi 0, %s24
    %s18 = sphi 0, %s16
    %s19 = sphi 0, %s17
    %s20 = sphi 0, %s18
    %s21 = sphi 0, %s19
    %s33 = sphi 0, %s35
    %s36 = sphi 0, %s33
    %s37 = sphi 0, %s36
    %s53 = sphi 0, %s37
    %s57 = sphi 0, %s57
    %s59 = sphi 0, %s57
    %s60 = sphi 0, %s59
    %s74 = sphi 0, %s60
    %s78 = sphi 0, %s78
    %s80 = sphi 0, %s78
    %s81 = sphi 0, %s80
    %s95 = sphi 0, %s81
    %s103 = sphi 0, %s105
    %s106 = sphi 0, %s103
    %s107 = sphi 0, %s106
    %s123 = sphi 0, %s107
  $region4: #{_lambda_.12} parent=0 // loop_header_branch
    %12 = sbr.rel (%p10) target = $region8
  $region5: #{_lambda_.12} parent=0 // loop_body
    %s14 = ssub.s32 %s9, 1
    %s15 = ssub.s32 %s9, 2
    %s22 = sadd.s32 1, %s17
    %p23 = scmp.ge.s32.totalorder %s22, 1
    %s24 = scalar_select %p23, 0, %s22
    %s25 = sadd.s32 1, %s16
    %s26 = scalar_select %p23, %s25, %s16
    %p27 = scmp.ge.s32.totalorder %s26, 4
    %s28 = scalar_select %p27, 0, %s26
    %s29 = ssub.s32 %s16, %s28
    %s30 = ssub.s32 %s17, %s24
    %s31 = sor.u32 %s29, %s30
    %p32 = scmp.eq.s32.totalorder %s31, 0
    %s34 = sadd.s32 %s33, 1
    %s35 = scalar_select %p32, %s33, %s34
    %p38 = pneg %p32
    %p39 = scmp.eq.s32.totalorder %s9, 3
    %p40 = por %p38, %p39
    %p41 = scmp.ne.s32.totalorder %s33, %s36
    %p42 = scmp.eq.s32.totalorder %s9, 0
    %p43 = por %p41, %p42
    %p44 = scmp.ne.s32.totalorder %s33, %s36
    %p45 = scmp.eq.s32.totalorder %s14, 3
    %p46 = por %p44, %p45
    %p47 = scmp.ne.s32.totalorder %s36, %s37
    %p48 = scmp.eq.s32.totalorder %s14, 0
    %p49 = por %p47, %p48
    %p50 = scmp.ne.s32.totalorder %s36, %s37
    %p51 = scmp.eq.s32.totalorder %s15, 3
    %p52 = por %p50, %p51
    %p54 = scmp.ne.s32.totalorder %s37, %s53
    %p55 = scmp.eq.s32.totalorder %s15, 0
    %p56 = por %p54, %p55
    %s58 = sadd.s32 %s57, 1
    %p61 = scmp.eq.s32.totalorder %s9, 3
    %p62 = scmp.ne.s32.totalorder %s57, %s59
    %p63 = scmp.eq.s32.totalorder %s9, 0
    %p64 = por %p62, %p63
    %p65 = scmp.ne.s32.totalorder %s57, %s59
    %p66 = scmp.eq.s32.totalorder %s14, 3
    %p67 = por %p65, %p66
    %p68 = scmp.ne.s32.totalorder %s59, %s60
    %p69 = scmp.eq.s32.totalorder %s14, 0
    %p70 = por %p68, %p69
    %p71 = scmp.ne.s32.totalorder %s59, %s60
    %p72 = scmp.eq.s32.totalorder %s15, 3
    %p73 = por %p71, %p72
    %p75 = scmp.ne.s32.totalorder %s60, %s74
    %p76 = scmp.eq.s32.totalorder %s15, 0
    %p77 = por %p75, %p76
    %s79 = sadd.s32 %s78, 1
    %p82 = scmp.eq.s32.totalorder %s9, 3
    %p83 = scmp.ne.s32.totalorder %s78, %s80
    %p84 = scmp.eq.s32.totalorder %s9, 0
    %p85 = por %p83, %p84
    %p86 = scmp.ne.s32.totalorder %s78, %s80
    %p87 = scmp.eq.s32.totalorder %s14, 3
    %p88 = por %p86, %p87
    %p89 = scmp.ne.s32.totalorder %s80, %s81
    %p90 = scmp.eq.s32.totalorder %s14, 0
    %p91 = por %p89, %p90
    %p92 = scmp.ne.s32.totalorder %s80, %s81
    %p93 = scmp.eq.s32.totalorder %s15, 3
    %p94 = por %p92, %p93
    %p96 = scmp.ne.s32.totalorder %s81, %s95
    %p97 = scmp.eq.s32.totalorder %s15, 0
    %p98 = por %p96, %p97
    %s99 = ssub.s32 %s16, %s28
    %s100 = ssub.s32 %s17, %s24
    %s101 = sor.u32 %s99, %s100
    %p102 = scmp.eq.s32.totalorder %s101, 0
    %s104 = sadd.s32 %s103, 1
    %s105 = scalar_select %p102, %s103, %s104
    %p108 = pneg %p102
    %p109 = scmp.eq.s32.totalorder %s9, 3
    %p110 = por %p108, %p109
    %p111 = scmp.ne.s32.totalorder %s103, %s106
    %p112 = scmp.eq.s32.totalorder %s9, 0
    %p113 = por %p111, %p112
    %p114 = scmp.ne.s32.totalorder %s103, %s106
    %p115 = scmp.eq.s32.totalorder %s14, 3
    %p116 = por %p114, %p115
    %p117 = scmp.ne.s32.totalorder %s106, %s107
    %p118 = scmp.eq.s32.totalorder %s14, 0
    %p119 = por %p117, %p118
    %p120 = scmp.ne.s32.totalorder %s106, %s107
    %p121 = scmp.eq.s32.totalorder %s15, 3
    %p122 = por %p120, %p121
    %p124 = scmp.ne.s32.totalorder %s107, %s123
    %p125 = scmp.eq.s32.totalorder %s15, 0
    %p126 = por %p124, %p125
    %p127 = scmp.le.s32.totalorder 1, %s9
    %p128 = scmp.lt.s32.totalorder %s9, 5
    %p129 = pnand %p127, %p128
    %p130 = pneg %p129
    // Predicated region
    $region9: #{_lambda_.12} parent=5 // pred_check
      _
    $region10: #{_lambda_.12} parent=5 // pred_check_branch
      %132 = sbr.rel (%p129) target = $region12
    $region11: #{_lambda_.12} parent=5 // pred_region
      %s133 = ssub.s32 %s9, 1
      // Predicated region
      $region13: #{_lambda_.12} parent=11 // pred_check
        %p134 = pneg %p70
      $region14: #{_lambda_.12} parent=11 // pred_check_branch
        %136 = sbr.rel (%p134) target = $region16
      $region15: #{_lambda_.12} parent=11 // pred_region
        _
      $region16: #{_lambda_.12} parent=11 // pred_fallthru
        _
      // Predicated region
      $region17: #{_lambda_.12} parent=11 // pred_check
        %p137 = pneg %p91
      $region18: #{_lambda_.12} parent=11 // pred_check_branch
        %139 = sbr.rel (%p137) target = $region20
      $region19: #{_lambda_.12} parent=11 // pred_region
        _
      $region20: #{_lambda_.12} parent=11 // pred_fallthru
        _
    $region12: #{_lambda_.12} parent=5 // pred_fallthru
      _
    %p140 = scmp.lt.s32.totalorder %s9, 4
    // Predicated region
    $region21: #{_lambda_.12} parent=5 // pred_check
      %p141 = pneg %p140
    $region22: #{_lambda_.12} parent=5 // pred_check_branch
      %143 = sbr.rel (%p141) target = $region24
    $region23: #{_lambda_.12} parent=5 // pred_region
      // Predicated region
      $region25: #{_lambda_.12} parent=23 // pred_check
        %p144 = pneg %p43
      $region26: #{_lambda_.12} parent=23 // pred_check_branch
        %146 = sbr.rel (%p144) target = $region28
      $region27: #{_lambda_.12} parent=23 // pred_region
        %p147 = scmp.lt.s32.totalorder %s16, 3
        %s148 = scalar_select %p147, %s16, 3
        %p149 = scmp.lt.s32.totalorder %s17, 0
        %s150 = scalar_select %p149, %s17, 0
        %s151 = smul.addr %s148, 2
        %s152 = sadd.s32 %s150, %s151
        %s153 = smul.addr %s152, 8
        %s154 = scalar_lea.vmem %s0, %s153
      $region28: #{_lambda_.12} parent=23 // pred_fallthru
        _
    $region24: #{_lambda_.12} parent=5 // pred_fallthru
      _
    %p155 = scmp.le.s32.totalorder 1, %s9
    %p156 = scmp.lt.s32.totalorder %s9, 5
    %p157 = pnand %p155, %p156
    %p158 = pneg %p157
    // Predicated region
    $region29: #{_lambda_.12} parent=5 // pred_check
      _
    $region30: #{_lambda_.12} parent=5 // pred_check_branch
      %160 = sbr.rel (%p157) target = $region32
    $region31: #{_lambda_.12} parent=5 // pred_region
      %s161 = ssub.s32 %s9, 1
      %p162 = scmp.lt.s32.totalorder %s18, 3
      %s163 = scalar_select %p162, %s18, 3
      %p164 = scmp.lt.s32.totalorder %s19, 0
      %s165 = scalar_select %p164, %s19, 0
      %s166 = smul.addr %s163, 2
      %s167 = sadd.s32 %s165, %s166
      %s168 = smul.addr %s167, 8
      %s169 = scalar_lea.vmem %s0, %s168
      %p170 = pneg %p49
      %p171 = pneg %p46
      %p172 = pneg %p70
      %p173 = pneg %p67
      %p174 = pneg %p91
      %p175 = pneg %p88
      %p176 = pneg %p119
      %p177 = pneg %p116
      %p178 = scmp.lt.s32.totalorder %s18, 3
      %s179 = scalar_select %p178, %s18, 3
      %p180 = scmp.lt.s32.totalorder %s19, 0
      %s181 = scalar_select %p180, %s19, 0
      %s182 = smul.addr %s179, 2
      %s183 = sadd.s32 %s181, %s182
      %s184 = smul.addr %s183, 8
      %s185 = scalar_lea.vmem %s3, %s184
      %p186 = scmp.lt.s32.totalorder %s18, 3
      %s187 = scalar_select %p186, %s18, 3
      %p188 = scmp.lt.s32.totalorder %s19, 0
      %s189 = scalar_select %p188, %s19, 0
      %s190 = smul.addr %s187, 2
      %s191 = sadd.s32 %s189, %s190
      %s192 = smul.addr %s191, 8
      %s193 = scalar_lea.vmem %s0, %s192
      %p194 = scmp.lt.s32.totalorder %s18, 3
      %s195 = scalar_select %p194, %s18, 3
      %p196 = scmp.lt.s32.totalorder %s19, 0
      %s197 = scalar_select %p196, %s19, 0
      %s198 = smul.addr %s195, 2
      %s199 = sadd.s32 %s197, %s198
      %s200 = smul.addr %s199, 8
      %s201 = scalar_lea.vmem %s3, %s200
      %v202 = vld [vmem:[%s193] sm:$0xff]
      %v203 = vld [vmem:[%s193 + $0x8] sm:$0xff]
      %v204 = vld [vmem:[%s1] sm:$0xff]
      %v205 = vld [vmem:[%s1 + $0x8] sm:$0xff]
      %207 = vset.pattern.permute.xlu0 0
      %208 = vperm.xlu0 %207, %v204
      %v209 = vpop.permute.xlu0 %208
      %212 = vset.pattern.permute.xlu0 0
      %213 = vperm.xlu0 %212, %v205
      %v214 = vpop.permute.xlu0 %213
      %v216 = vmul.f32 %v202, %v209
      %v217 = vmul.f32 %v203, %v214
      %v218 = vld [vmem:[%s2] sm:$0xff]
      %v219 = vld [vmem:[%s2 + $0x8] sm:$0xff]
      %221 = vset.pattern.permute.xlu0 0
      %222 = vperm.xlu0 %221, %v218
      %v223 = vpop.permute.xlu0 %222
      %226 = vset.pattern.permute.xlu0 0
      %227 = vperm.xlu0 %226, %v219
      %v228 = vpop.permute.xlu0 %227
      %v230 = vadd.f32 %v216, %v223
      %v231 = vadd.f32 %v217, %v228
      %232 = vst [vmem:[%s201] sm:$0xff] %v230
      %233 = vst [vmem:[%s201 + $0x8] sm:$0xff] %v231
      %p234 = scmp.lt.s32.totalorder %s18, 3
      %s235 = scalar_select %p234, %s18, 3
      %p236 = scmp.lt.s32.totalorder %s19, 0
      %s237 = scalar_select %p236, %s19, 0
      %s238 = smul.addr %s235, 2
      %s239 = sadd.s32 %s237, %s238
      %s240 = smul.addr %s239, 8
      %s241 = scalar_lea.vmem %s3, %s240
      // Predicated region
      $region33: #{_lambda_.12} parent=31 // pred_check
        %p242 = pneg %p116
      $region34: #{_lambda_.12} parent=31 // pred_check_branch
        %244 = sbr.rel (%p242) target = $region36
      $region35: #{_lambda_.12} parent=31 // pred_region
        _
      $region36: #{_lambda_.12} parent=31 // pred_fallthru
        _
    $region32: #{_lambda_.12} parent=5 // pred_fallthru
      _
    %p245 = scmp.le.s32.totalorder 2, %s9
    // Predicated region
    $region37: #{_lambda_.12} parent=5 // pred_check
      %p246 = pneg %p245
    $region38: #{_lambda_.12} parent=5 // pred_check_branch
      %248 = sbr.rel (%p246) target = $region40
    $region39: #{_lambda_.12} parent=5 // pred_region
      %s249 = ssub.s32 %s9, 2
      // Predicated region
      $region41: #{_lambda_.12} parent=39 // pred_check
        %p250 = pneg %p122
      $region42: #{_lambda_.12} parent=39 // pred_check_branch
        %252 = sbr.rel (%p250) target = $region44
      $region43: #{_lambda_.12} parent=39 // pred_region
        %p253 = scmp.lt.s32.totalorder %s20, 3
        %s254 = scalar_select %p253, %s20, 3
        %p255 = scmp.lt.s32.totalorder %s21, 0
        %s256 = scalar_select %p255, %s21, 0
        %s257 = smul.addr %s254, 2
        %s258 = sadd.s32 %s256, %s257
        %s259 = smul.addr %s258, 8
        %s260 = scalar_lea.vmem %s3, %s259
      $region44: #{_lambda_.12} parent=39 // pred_fallthru
        _
    $region40: #{_lambda_.12} parent=5 // pred_fallthru
      _
  $region6: #{_lambda_.12} parent=0 // loop_footer
    %s13 = sadd.s32 1, %s9
  $region7: #{_lambda_.12} parent=0 // loop_footer_branch
    %8 = sbr.rel target = $region3
  $region8: #{_lambda_.12} parent=0 // loop_exit
    _

// kernel: _lambda_.11
$region0: #{_lambda_.11}
  #allocation0 [shape = 'u32[]', space=smem, size = 0x4, offset = 0x4, fixed_abs, tag = 'smem constant byte address 0x4 - core index']
  #allocation1 [shape = 'u32[144,128]{1,0:T(1,128)}', space=vmem, size = 0x12000, scoped, tag = 'internal scratch']
  %s0 = inlined_call_operand.vmem [shape: bf16[4,128,128], index: 0, kind: input, shape index: {}]
  %s1 = inlined_call_operand.vmem [shape: bf16[4,16,128], index: 1, kind: input, shape index: {}]
  %s2 = inlined_call_operand.vmem [shape: f32[16,1], index: 2, kind: input, shape index: {}]
  %s3 = inlined_call_operand.vmem [shape: f32[4,16,128], index: 3, kind: output, shape index: {0}]
  %s4 = inlined_call_operand.vmem [shape: f32[4,1,16,2], index: 4, kind: output, shape index: {1}]
  %5 = xla_tuple %s3, %s4
  %s6 = sld [smem:[#allocation0]]
  $region53: #{_lambda_.11} parent=0
    _
  %s8 = ssub.s32 1, %s6
  %s9 = scalar_select 0, %s8, %s6
  loop: start=0, step=1, limit=6
  $region2: #{_lambda_.11} parent=0 // loop_pre_header
    _
  $region3: #{_lambda_.11} parent=0 // loop_header
    %s11 = sphi 0, %s15
    %p12 = scmp.ge.s32.totalorder %s11, 6
    %s18 = sphi 0, %s30
    %s19 = sphi 0, %s26
    %s20 = sphi 0, %s18
    %s21 = sphi 0, %s19
    %s22 = sphi 0, %s20
    %s23 = sphi 0, %s21
    %s35 = sphi 0, %s37
    %s38 = sphi 0, %s35
    %s39 = sphi 0, %s38
    %s55 = sphi 0, %s39
    %s61 = sphi 0, %s63
    %s64 = sphi 0, %s61
    %s65 = sphi 0, %s64
    %s81 = sphi 0, %s65
    %s85 = sphi 0, %s85
    %s87 = sphi 0, %s85
    %s88 = sphi 0, %s87
    %s102 = sphi 0, %s88
    %s110 = sphi 0, %s112
    %s113 = sphi 0, %s110
    %s114 = sphi 0, %s113
    %s130 = sphi 0, %s114
    %s138 = sphi 0, %s140
    %s141 = sphi 0, %s138
    %s142 = sphi 0, %s141
    %s158 = sphi 0, %s142
  $region4: #{_lambda_.11} parent=0 // loop_header_branch
    %14 = sbr.rel (%p12) target = $region8
  $region5: #{_lambda_.11} parent=0 // loop_body
    %s16 = ssub.s32 %s11, 1
    %s17 = ssub.s32 %s11, 2
    %s24 = sadd.s32 1, %s19
    %p25 = scmp.ge.s32.totalorder %s24, 1
    %s26 = scalar_select %p25, 0, %s24
    %s27 = sadd.s32 1, %s18
    %s28 = scalar_select %p25, %s27, %s18
    %p29 = scmp.ge.s32.totalorder %s28, 4
    %s30 = scalar_select %p29, 0, %s28
    %s31 = ssub.s32 %s18, %s30
    %s32 = ssub.s32 %s19, %s26
    %s33 = sor.u32 %s31, %s32
    %p34 = scmp.eq.s32.totalorder %s33, 0
    %s36 = sadd.s32 %s35, 1
    %s37 = scalar_select %p34, %s35, %s36
    %p40 = pneg %p34
    %p41 = scmp.eq.s32.totalorder %s11, 3
    %p42 = por %p40, %p41
    %p43 = scmp.ne.s32.totalorder %s35, %s38
    %p44 = scmp.eq.s32.totalorder %s11, 0
    %p45 = por %p43, %p44
    %p46 = scmp.ne.s32.totalorder %s35, %s38
    %p47 = scmp.eq.s32.totalorder %s16, 3
    %p48 = por %p46, %p47
    %p49 = scmp.ne.s32.totalorder %s38, %s39
    %p50 = scmp.eq.s32.totalorder %s16, 0
    %p51 = por %p49, %p50
    %p52 = scmp.ne.s32.totalorder %s38, %s39
    %p53 = scmp.eq.s32.totalorder %s17, 3
    %p54 = por %p52, %p53
    %p56 = scmp.ne.s32.totalorder %s39, %s55
    %p57 = scmp.eq.s32.totalorder %s17, 0
    %p58 = por %p56, %p57
    %s59 = ssub.s32 %s18, %s30
    %p60 = scmp.eq.s32.totalorder %s59, 0
    %s62 = sadd.s32 %s61, 1
    %s63 = scalar_select %p60, %s61, %s62
    %p66 = pneg %p60
    %p67 = scmp.eq.s32.totalorder %s11, 3
    %p68 = por %p66, %p67
    %p69 = scmp.ne.s32.totalorder %s61, %s64
    %p70 = scmp.eq.s32.totalorder %s11, 0
    %p71 = por %p69, %p70
    %p72 = scmp.ne.s32.totalorder %s61, %s64
    %p73 = scmp.eq.s32.totalorder %s16, 3
    %p74 = por %p72, %p73
    %p75 = scmp.ne.s32.totalorder %s64, %s65
    %p76 = scmp.eq.s32.totalorder %s16, 0
    %p77 = por %p75, %p76
    %p78 = scmp.ne.s32.totalorder %s64, %s65
    %p79 = scmp.eq.s32.totalorder %s17, 3
    %p80 = por %p78, %p79
    %p82 = scmp.ne.s32.totalorder %s65, %s81
    %p83 = scmp.eq.s32.totalorder %s17, 0
    %p84 = por %p82, %p83
    %s86 = sadd.s32 %s85, 1
    %p89 = scmp.eq.s32.totalorder %s11, 3
    %p90 = scmp.ne.s32.totalorder %s85, %s87
    %p91 = scmp.eq.s32.totalorder %s11, 0
    %p92 = por %p90, %p91
    %p93 = scmp.ne.s32.totalorder %s85, %s87
    %p94 = scmp.eq.s32.totalorder %s16, 3
    %p95 = por %p93, %p94
    %p96 = scmp.ne.s32.totalorder %s87, %s88
    %p97 = scmp.eq.s32.totalorder %s16, 0
    %p98 = por %p96, %p97
    %p99 = scmp.ne.s32.totalorder %s87, %s88
    %p100 = scmp.eq.s32.totalorder %s17, 3
    %p101 = por %p99, %p100
    %p103 = scmp.ne.s32.totalorder %s88, %s102
    %p104 = scmp.eq.s32.totalorder %s17, 0
    %p105 = por %p103, %p104
    %s106 = ssub.s32 %s18, %s30
    %s107 = ssub.s32 %s19, %s26
    %s108 = sor.u32 %s106, %s107
    %p109 = scmp.eq.s32.totalorder %s108, 0
    %s111 = sadd.s32 %s110, 1
    %s112 = scalar_select %p109, %s110, %s111
    %p115 = pneg %p109
    %p116 = scmp.eq.s32.totalorder %s11, 3
    %p117 = por %p115, %p116
    %p118 = scmp.ne.s32.totalorder %s110, %s113
    %p119 = scmp.eq.s32.totalorder %s11, 0
    %p120 = por %p118, %p119
    %p121 = scmp.ne.s32.totalorder %s110, %s113
    %p122 = scmp.eq.s32.totalorder %s16, 3
    %p123 = por %p121, %p122
    %p124 = scmp.ne.s32.totalorder %s113, %s114
    %p125 = scmp.eq.s32.totalorder %s16, 0
    %p126 = por %p124, %p125
    %p127 = scmp.ne.s32.totalorder %s113, %s114
    %p128 = scmp.eq.s32.totalorder %s17, 3
    %p129 = por %p127, %p128
    %p131 = scmp.ne.s32.totalorder %s114, %s130
    %p132 = scmp.eq.s32.totalorder %s17, 0
    %p133 = por %p131, %p132
    %s134 = ssub.s32 %s18, %s30
    %s135 = ssub.s32 %s19, %s26
    %s136 = sor.u32 %s134, %s135
    %p137 = scmp.eq.s32.totalorder %s136, 0
    %s139 = sadd.s32 %s138, 1
    %s140 = scalar_select %p137, %s138, %s139
    %p143 = pneg %p137
    %p144 = scmp.eq.s32.totalorder %s11, 3
    %p145 = por %p143, %p144
    %p146 = scmp.ne.s32.totalorder %s138, %s141
    %p147 = scmp.eq.s32.totalorder %s11, 0
    %p148 = por %p146, %p147
    %p149 = scmp.ne.s32.totalorder %s138, %s141
    %p150 = scmp.eq.s32.totalorder %s16, 3
    %p151 = por %p149, %p150
    %p152 = scmp.ne.s32.totalorder %s141, %s142
    %p153 = scmp.eq.s32.totalorder %s16, 0
    %p154 = por %p152, %p153
    %p155 = scmp.ne.s32.totalorder %s141, %s142
    %p156 = scmp.eq.s32.totalorder %s17, 3
    %p157 = por %p155, %p156
    %p159 = scmp.ne.s32.totalorder %s142, %s158
    %p160 = scmp.eq.s32.totalorder %s17, 0
    %p161 = por %p159, %p160
    %p162 = scmp.le.s32.totalorder 1, %s11
    %p163 = scmp.lt.s32.totalorder %s11, 5
    %p164 = pnand %p162, %p163
    %p165 = pneg %p164
    // Predicated region
    $region9: #{_lambda_.11} parent=5 // pred_check
      _
    $region10: #{_lambda_.11} parent=5 // pred_check_branch
      %167 = sbr.rel (%p164) target = $region12
    $region11: #{_lambda_.11} parent=5 // pred_region
      %s168 = ssub.s32 %s11, 1
      // Predicated region
      $region13: #{_lambda_.11} parent=11 // pred_check
        %p169 = pneg %p98
      $region14: #{_lambda_.11} parent=11 // pred_check_branch
        %171 = sbr.rel (%p169) target = $region16
      $region15: #{_lambda_.11} parent=11 // pred_region
        _
      $region16: #{_lambda_.11} parent=11 // pred_fallthru
        _
    $region12: #{_lambda_.11} parent=5 // pred_fallthru
      _
    %p172 = scmp.lt.s32.totalorder %s11, 4
    // Predicated region
    $region17: #{_lambda_.11} parent=5 // pred_check
      %p173 = pneg %p172
    $region18: #{_lambda_.11} parent=5 // pred_check_branch
      %175 = sbr.rel (%p173) target = $region20
    $region19: #{_lambda_.11} parent=5 // pred_region
      // Predicated region
      $region21: #{_lambda_.11} parent=19 // pred_check
        %p176 = pneg %p45
      $region22: #{_lambda_.11} parent=19 // pred_check_branch
        %178 = sbr.rel (%p176) target = $region24
      $region23: #{_lambda_.11} parent=19 // pred_region
        %p179 = scmp.lt.s32.totalorder %s18, 3
        %s180 = scalar_select %p179, %s18, 3
        %p181 = scmp.lt.s32.totalorder %s19, 0
        %s182 = scalar_select %p181, %s19, 0
        %s183 = smul.addr %s180, 16
        %s184 = sadd.s32 %s182, %s183
        %s185 = smul.addr %s184, 4
        %s186 = scalar_lea.vmem %s0, %s185
      $region24: #{_lambda_.11} parent=19 // pred_fallthru
        _
      // Predicated region
      $region25: #{_lambda_.11} parent=19 // pred_check
        %p187 = pneg %p71
      $region26: #{_lambda_.11} parent=19 // pred_check_branch
        %189 = sbr.rel (%p187) target = $region28
      $region27: #{_lambda_.11} parent=19 // pred_region
        %p190 = scmp.lt.s32.totalorder %s18, 3
        %s191 = scalar_select %p190, %s18, 3
        %s192 = smul.addr %s191, 2
        %s193 = smul.addr %s192, 4
        %s194 = scalar_lea.vmem %s1, %s193
      $region28: #{_lambda_.11} parent=19 // pred_fallthru
        _
    $region20: #{_lambda_.11} parent=5 // pred_fallthru
      _
    %p195 = scmp.le.s32.totalorder 1, %s11
    %p196 = scmp.lt.s32.totalorder %s11, 5
    %p197 = pnand %p195, %p196
    %p198 = pneg %p197
    // Predicated region
    $region29: #{_lambda_.11} parent=5 // pred_check
      _
    $region30: #{_lambda_.11} parent=5 // pred_check_branch
      %200 = sbr.rel (%p197) target = $region32
    $region31: #{_lambda_.11} parent=5 // pred_region
      %s201 = ssub.s32 %s11, 1
      %p202 = scmp.lt.s32.totalorder %s20, 3
      %s203 = scalar_select %p202, %s20, 3
      %p204 = scmp.lt.s32.totalorder %s21, 0
      %s205 = scalar_select %p204, %s21, 0
      %s206 = smul.addr %s203, 16
      %s207 = sadd.s32 %s205, %s206
      %s208 = smul.addr %s207, 4
      %s209 = scalar_lea.vmem %s0, %s208
      %p210 = pneg %p51
      %p211 = pneg %p48
      %p212 = scmp.lt.s32.totalorder %s20, 3
      %s213 = scalar_select %p212, %s20, 3
      %s214 = smul.addr %s213, 2
      %s215 = smul.addr %s214, 4
      %s216 = scalar_lea.vmem %s1, %s215
      %p217 = pneg %p77
      %p218 = pneg %p74
      %p219 = pneg %p98
      %p220 = pneg %p95
      %p221 = pneg %p126
      %p222 = pneg %p123
      %p223 = scmp.lt.s32.totalorder %s20, 3
      %s224 = scalar_select %p223, %s20, 3
      %p225 = scmp.lt.s32.totalorder %s21, 0
      %s226 = scalar_select %p225, %s21, 0
      %s227 = smul.addr %s224, 2
      %s228 = sadd.s32 %s226, %s227
      %s229 = smul.addr %s228, 8
      %s230 = scalar_lea.vmem %s3, %s229
      %p231 = pneg %p154
      %p232 = pneg %p151
      %p233 = scmp.lt.s32.totalorder %s20, 3
      %s234 = scalar_select %p233, %s20, 3
      %p235 = scmp.lt.s32.totalorder %s21, 0
      %s236 = scalar_select %p235, %s21, 0
      %s237 = smul.addr %s236, 2
      %s238 = smul.addr %s234, 2
      %s239 = sadd.s32 %s237, %s238
      %s240 = smul.addr %s239, 8
      %s241 = scalar_lea.vmem %s4, %s240
      %p242 = scmp.lt.s32.totalorder %s20, 3
      %s243 = scalar_select %p242, %s20, 3
      %p244 = scmp.lt.s32.totalorder %s21, 0
      %s245 = scalar_select %p244, %s21, 0
      %s246 = smul.addr %s243, 16
      %s247 = sadd.s32 %s245, %s246
      %s248 = smul.addr %s247, 4
      %s249 = scalar_lea.vmem %s0, %s248
      %p250 = scmp.lt.s32.totalorder %s20, 3
      %s251 = scalar_select %p250, %s20, 3
      %s252 = smul.addr %s251, 2
      %s253 = smul.addr %s252, 4
      %s254 = scalar_lea.vmem %s1, %s253
      %p255 = scmp.lt.s32.totalorder %s20, 3
      %s256 = scalar_select %p255, %s20, 3
      %p257 = scmp.lt.s32.totalorder %s21, 0
      %s258 = scalar_select %p257, %s21, 0
      %s259 = smul.addr %s256, 2
      %s260 = sadd.s32 %s258, %s259
      %s261 = smul.addr %s260, 8
      %s262 = scalar_lea.vmem %s3, %s261
      %p263 = scmp.lt.s32.totalorder %s20, 3
      %s264 = scalar_select %p263, %s20, 3
      %p265 = scmp.lt.s32.totalorder %s21, 0
      %s266 = scalar_select %p265, %s21, 0
      %s267 = smul.addr %s266, 2
      %s268 = smul.addr %s264, 2
      %s269 = sadd.s32 %s267, %s268
      %s270 = smul.addr %s269, 8
      %s271 = scalar_lea.vmem %s4, %s270
      %v273 = vld [vmem:[%s254] sm:$0xf]
      %v274 = vld [vmem:[%s254 + $0x4] sm:$0xf]
      %v275 = vld [vmem:[%s249] sm:$0xf]
      %v276 = vld [vmem:[%s249 + $0x4] sm:$0xf]
      %v277 = vld [vmem:[%s249 + $0x8] sm:$0xf]
      %v278 = vld [vmem:[%s249 + $0xc] sm:$0xf]
      %v279 = vld [vmem:[%s249 + $0x10] sm:$0xf]
      %v280 = vld [vmem:[%s249 + $0x14] sm:$0xf]
      %v281 = vld [vmem:[%s249 + $0x18] sm:$0xf]
      %v282 = vld [vmem:[%s249 + $0x1c] sm:$0xf]
      %v283 = vld [vmem:[%s249 + $0x20] sm:$0xf]
      %v284 = vld [vmem:[%s249 + $0x24] sm:$0xf]
      %v285 = vld [vmem:[%s249 + $0x28] sm:$0xf]
      %v286 = vld [vmem:[%s249 + $0x2c] sm:$0xf]
      %v287 = vld [vmem:[%s249 + $0x30] sm:$0xf]
      %v288 = vld [vmem:[%s249 + $0x34] sm:$0xf]
      %v289 = vld [vmem:[%s249 + $0x38] sm:$0xf]
      %v290 = vld [vmem:[%s249 + $0x3c] sm:$0xf]
      %v291 = vld [vmem:[%s2] sm:$0xff]
      %v292 = vld [vmem:[%s2 + $0x8] sm:$0xff]
      %294 = vset.pattern.permute.xlu0 0
      %295 = vperm.xlu0 %294, %v291
      %v296 = vpop.permute.xlu0 %295
      %299 = vset.pattern.permute.xlu0 0
      %300 = vperm.xlu0 %299, %v292
      %v301 = vpop.permute.xlu0 %300
      %v305 = vunpack.c.l.b16 %v273
      %v306 = vunpack.c.l.b16 %v274
      %v307 = vpack.c.b16 %v306, %v305
      %v325 = vunpack.c.l.b16 %v275
      %v326 = vunpack.c.l.b16 %v276
      %v327 = vunpack.c.l.b16 %v277
      %v328 = vunpack.c.l.b16 %v278
      %v329 = vunpack.c.l.b16 %v279
      %v330 = vunpack.c.l.b16 %v280
      %v331 = vunpack.c.l.b16 %v281
      %v332 = vunpack.c.l.b16 %v282
      %v333 = vunpack.c.l.b16 %v283
      %v334 = vunpack.c.l.b16 %v284
      %v335 = vunpack.c.l.b16 %v285
      %v336 = vunpack.c.l.b16 %v286
      %v337 = vunpack.c.l.b16 %v287
      %v338 = vunpack.c.l.b16 %v288
      %v339 = vunpack.c.l.b16 %v289
      %v340 = vunpack.c.l.b16 %v290
      %v341 = vpack.c.b16 %v326, %v325
      %v342 = vpack.c.b16 %v328, %v327
      %v343 = vpack.c.b16 %v330, %v329
      %v344 = vpack.c.b16 %v332, %v331
      %v345 = vpack.c.b16 %v334, %v333
      %v346 = vpack.c.b16 %v336, %v335
      %v347 = vpack.c.b16 %v338, %v337
      %v348 = vpack.c.b16 %v340, %v339
      %357 = vmatprep.subr.bf16.mxu0 0
      %358 = vmatpush1.bf16.msra.mxu0 %v341
      %359 = vmatprep.subr.bf16.mxu0 0
      %360 = vmatpush1.bf16.msra.mxu0 %v342
      %361 = vmatprep.subr.bf16.mxu0 0
      %362 = vmatpush1.bf16.msra.mxu0 %v343
      %363 = vmatprep.subr.bf16.mxu0 0
      %364 = vmatpush1.bf16.msra.mxu0 %v344
      %365 = vmatprep.subr.bf16.mxu0 0
      %366 = vmatpush1.bf16.msra.mxu0 %v345
      %367 = vmatprep.subr.bf16.mxu0 0
      %368 = vmatpush1.bf16.msra.mxu0 %v346
      %369 = vmatprep.subr.bf16.mxu0 0
      %370 = vmatpush1.bf16.msra.mxu0 %v347
      %371 = vmatprep.subr.bf16.mxu0 0
      %372 = vmatpush1.bf16.msra.mxu0 %v348
      %373 = vmatprep.subr.bf16.mxu0 0
      %374 = vmatpush1.bf16.msra.mxu0 0
      %375 = vmatprep.subr.bf16.mxu0 0
      %376 = vmatpush1.bf16.msra.mxu0 0
      %377 = vmatprep.subr.bf16.mxu0 0
      %378 = vmatpush1.bf16.msra.mxu0 0
      %379 = vmatprep.subr.bf16.mxu0 0
      %380 = vmatpush1.bf16.msra.mxu0 0
      %381 = vmatprep.subr.bf16.mxu0 0
      %382 = vmatpush1.bf16.msra.mxu0 0
      %383 = vmatprep.subr.bf16.mxu0 0
      %384 = vmatpush1.bf16.msra.mxu0 0
      %385 = vmatprep.subr.bf16.mxu0 0
      %386 = vmatpush1.bf16.msra.mxu0 0
      %387 = vmatprep.subr.bf16.mxu0 0
      %388 = vmatpush1.bf16.msra.mxu0 0
      %389 = vmatprep.mubr.bf16.mxu0 0
      %390 = vmatmul.mubr.bf16.gmra.mrb[0].mxu0 %v307
      %v391 = vpop.f32.mrb[0].mxu0
      %v392 = vadd.f32 %v296, %v391
      %v393 = vpop.f32.mrb[0].mxu0
      %v394 = vpop.f32.mrb[0].mxu0
      %v395 = vadd.f32 %v301, %v394
      %v396 = vpop.f32.mrb[0].mxu0
      %397 = vdwg.mxu0
      %398 = vst [vmem:[%s262] sm:$0xff] %v392
      %399 = vst [vmem:[%s262 + $0x8] sm:$0xff] %v395
      %400 = vadd.xlane.f32.xlu0 %v392
      %v401 = vpop.xlane.xlu0 %400
      %402 = vadd.xlane.f32.xlu0 %v395
      %v403 = vpop.xlane.xlu0 %402
      %vm404 = vcmask 7168
      %405 = vst.msk [vmem:[%s271] sm:$0xff] %vm404, %v401
      %406 = vst.msk [vmem:[%s271 + $0x8] sm:$0xff] %vm404, %v403
      %v407 = vmul.f32 %v392, %v392
      %v408 = vmul.f32 %v395, %v395
      %409 = vadd.xlane.f32.xlu0 %v407
      %v410 = vpop.xlane.xlu0 %409
      %411 = vadd.xlane.f32.xlu0 %v408
      %v412 = vpop.xlane.xlu0 %411
      %vm413 = vcmask 15368
      %414 = vst.msk [vmem:[%s271] sm:$0xff] %vm413, %v410
      %415 = vst.msk [vmem:[%s271 + $0x8] sm:$0xff] %vm413, %v412
      %p416 = scmp.lt.s32.totalorder %s20, 3
      %s417 = scalar_select %p416, %s20, 3
      %p418 = scmp.lt.s32.totalorder %s21, 0
      %s419 = scalar_select %p418, %s21, 0
      %s420 = smul.addr %s417, 2
      %s421 = sadd.s32 %s419, %s420
      %s422 = smul.addr %s421, 8
      %s423 = scalar_lea.vmem %s3, %s422
      %p424 = scmp.lt.s32.totalorder %s20, 3
      %s425 = scalar_select %p424, %s20, 3
      %p426 = scmp.lt.s32.totalorder %s21, 0
      %s427 = scalar_select %p426, %s21, 0
      %s428 = smul.addr %s427, 2
      %s429 = smul.addr %s425, 2
      %s430 = sadd.s32 %s428, %s429
      %s431 = smul.addr %s430, 8
      %s432 = scalar_lea.vmem %s4, %s431
      // Predicated region
      $region33: #{_lambda_.11} parent=31 // pred_check
        %p433 = pneg %p123
      $region34: #{_lambda_.11} parent=31 // pred_check_branch
        %435 = sbr.rel (%p433) target = $region36
      $region35: #{_lambda_.11} parent=31 // pred_region
        _
      $region36: #{_lambda_.11} parent=31 // pred_fallthru
        _
      // Predicated region
      $region37: #{_lambda_.11} parent=31 // pred_check
        %p436 = pneg %p151
      $region38: #{_lambda_.11} parent=31 // pred_check_branch
        %438 = sbr.rel (%p436) target = $region40
      $region39: #{_lambda_.11} parent=31 // pred_region
        _
      $region40: #{_lambda_.11} parent=31 // pred_fallthru
        _
    $region32: #{_lambda_.11} parent=5 // pred_fallthru
      _
    %p439 = scmp.le.s32.totalorder 2, %s11
    // Predicated region
    $region41: #{_lambda_.11} parent=5 // pred_check
      %p440 = pneg %p439
    $region42: #{_lambda_.11} parent=5 // pred_check_branch
      %442 = sbr.rel (%p440) target = $region44
    $region43: #{_lambda_.11} parent=5 // pred_region
      %s443 = ssub.s32 %s11, 2
      // Predicated region
      $region45: #{_lambda_.11} parent=43 // pred_check
        %p444 = pneg %p129
      $region46: #{_lambda_.11} parent=43 // pred_check_branch
        %446 = sbr.rel (%p444) target = $region48
      $region47: #{_lambda_.11} parent=43 // pred_region
        %p447 = scmp.lt.s32.totalorder %s22, 3
        %s448 = scalar_select %p447, %s22, 3
        %p449 = scmp.lt.s32.totalorder %s23, 0
        %s450 = scalar_select %p449, %s23, 0
        %s451 = smul.addr %s448, 2
        %s452 = sadd.s32 %s450, %s451
        %s453 = smul.addr %s452, 8
        %s454 = scalar_lea.vmem %s3, %s453
      $region48: #{_lambda_.11} parent=43 // pred_fallthru
        _
      // Predicated region
      $region49: #{_lambda_.11} parent=43 // pred_check
        %p455 = pneg %p157
      $region50: #{_lambda_.11} parent=43 // pred_check_branch
        %457 = sbr.rel (%p455) target = $region52
      $region51: #{_lambda_.11} parent=43 // pred_region
        %p458 = scmp.lt.s32.totalorder %s22, 3
        %s459 = scalar_select %p458, %s22, 3
        %p460 = scmp.lt.s32.totalorder %s23, 0
        %s461 = scalar_select %p460, %s23, 0
        %s462 = smul.addr %s461, 2
        %s463 = smul.addr %s459, 2
        %s464 = sadd.s32 %s462, %s463
        %s465 = smul.addr %s464, 8
        %s466 = scalar_lea.vmem %s4, %s465
      $region52: #{_lambda_.11} parent=43 // pred_fallthru
        _
    $region44: #{_lambda_.11} parent=5 // pred_fallthru
      _
  $region6: #{_lambda_.11} parent=0 // loop_footer
    %s15 = sadd.s32 1, %s11
  $region7: #{_lambda_.11} parent=0 // loop_footer_branch
    %10 = sbr.rel target = $region3
  $region8: #{_lambda_.11} parent=0 // loop_exit
    _

// kernel: _lambda_.14
$region0: #{_lambda_.14}
  #allocation0 [shape = 'u32[]', space=smem, size = 0x4, offset = 0x4, fixed_abs, tag = 'smem constant byte address 0x4 - core index']
  #allocation1 [shape = 'u32[144,128]{1,0:T(1,128)}', space=vmem, size = 0x12000, scoped, tag = 'internal scratch']
  %s0 = inlined_call_operand.vmem [shape: f32[4,8,128], index: 0, kind: input, shape index: {}]
  %s1 = inlined_call_operand.vmem [shape: f32[8,1], index: 1, kind: input, shape index: {}]
  %s2 = inlined_call_operand.vmem [shape: f32[8,1], index: 2, kind: input, shape index: {}]
  %s3 = inlined_call_operand.vmem [shape: f32[4,8,128], index: 3, kind: output, shape index: {}]
  %s4 = sld [smem:[#allocation0]]
  $region45: #{_lambda_.14} parent=0
    _
  %s6 = ssub.s32 1, %s4
  %s7 = scalar_select 0, %s6, %s4
  loop: start=0, step=1, limit=6
  $region2: #{_lambda_.14} parent=0 // loop_pre_header
    _
  $region3: #{_lambda_.14} parent=0 // loop_header
    %s9 = sphi 0, %s13
    %p10 = scmp.ge.s32.totalorder %s9, 6
    %s16 = sphi 0, %s28
    %s17 = sphi 0, %s24
    %s18 = sphi 0, %s16
    %s19 = sphi 0, %s17
    %s20 = sphi 0, %s18
    %s21 = sphi 0, %s19
    %s33 = sphi 0, %s35
    %s36 = sphi 0, %s33
    %s37 = sphi 0, %s36
    %s53 = sphi 0, %s37
    %s57 = sphi 0, %s57
    %s59 = sphi 0, %s57
    %s60 = sphi 0, %s59
    %s74 = sphi 0, %s60
    %s78 = sphi 0, %s78
    %s80 = sphi 0, %s78
    %s81 = sphi 0, %s80
    %s95 = sphi 0, %s81
    %s103 = sphi 0, %s105
    %s106 = sphi 0, %s103
    %s107 = sphi 0, %s106
    %s123 = sphi 0, %s107
  $region4: #{_lambda_.14} parent=0 // loop_header_branch
    %12 = sbr.rel (%p10) target = $region8
  $region5: #{_lambda_.14} parent=0 // loop_body
    %s14 = ssub.s32 %s9, 1
    %s15 = ssub.s32 %s9, 2
    %s22 = sadd.s32 1, %s17
    %p23 = scmp.ge.s32.totalorder %s22, 1
    %s24 = scalar_select %p23, 0, %s22
    %s25 = sadd.s32 1, %s16
    %s26 = scalar_select %p23, %s25, %s16
    %p27 = scmp.ge.s32.totalorder %s26, 4
    %s28 = scalar_select %p27, 0, %s26
    %s29 = ssub.s32 %s16, %s28
    %s30 = ssub.s32 %s17, %s24
    %s31 = sor.u32 %s29, %s30
    %p32 = scmp.eq.s32.totalorder %s31, 0
    %s34 = sadd.s32 %s33, 1
    %s35 = scalar_select %p32, %s33, %s34
    %p38 = pneg %p32
    %p39 = scmp.eq.s32.totalorder %s9, 3
    %p40 = por %p38, %p39
    %p41 = scmp.ne.s32.totalorder %s33, %s36
    %p42 = scmp.eq.s32.totalorder %s9, 0
    %p43 = por %p41, %p42
    %p44 = scmp.ne.s32.totalorder %s33, %s36
    %p45 = scmp.eq.s32.totalorder %s14, 3
    %p46 = por %p44, %p45
    %p47 = scmp.ne.s32.totalorder %s36, %s37
    %p48 = scmp.eq.s32.totalorder %s14, 0
    %p49 = por %p47, %p48
    %p50 = scmp.ne.s32.totalorder %s36, %s37
    %p51 = scmp.eq.s32.totalorder %s15, 3
    %p52 = por %p50, %p51
    %p54 = scmp.ne.s32.totalorder %s37, %s53
    %p55 = scmp.eq.s32.totalorder %s15, 0
    %p56 = por %p54, %p55
    %s58 = sadd.s32 %s57, 1
    %p61 = scmp.eq.s32.totalorder %s9, 3
    %p62 = scmp.ne.s32.totalorder %s57, %s59
    %p63 = scmp.eq.s32.totalorder %s9, 0
    %p64 = por %p62, %p63
    %p65 = scmp.ne.s32.totalorder %s57, %s59
    %p66 = scmp.eq.s32.totalorder %s14, 3
    %p67 = por %p65, %p66
    %p68 = scmp.ne.s32.totalorder %s59, %s60
    %p69 = scmp.eq.s32.totalorder %s14, 0
    %p70 = por %p68, %p69
    %p71 = scmp.ne.s32.totalorder %s59, %s60
    %p72 = scmp.eq.s32.totalorder %s15, 3
    %p73 = por %p71, %p72
    %p75 = scmp.ne.s32.totalorder %s60, %s74
    %p76 = scmp.eq.s32.totalorder %s15, 0
    %p77 = por %p75, %p76
    %s79 = sadd.s32 %s78, 1
    %p82 = scmp.eq.s32.totalorder %s9, 3
    %p83 = scmp.ne.s32.totalorder %s78, %s80
    %p84 = scmp.eq.s32.totalorder %s9, 0
    %p85 = por %p83, %p84
    %p86 = scmp.ne.s32.totalorder %s78, %s80
    %p87 = scmp.eq.s32.totalorder %s14, 3
    %p88 = por %p86, %p87
    %p89 = scmp.ne.s32.totalorder %s80, %s81
    %p90 = scmp.eq.s32.totalorder %s14, 0
    %p91 = por %p89, %p90
    %p92 = scmp.ne.s32.totalorder %s80, %s81
    %p93 = scmp.eq.s32.totalorder %s15, 3
    %p94 = por %p92, %p93
    %p96 = scmp.ne.s32.totalorder %s81, %s95
    %p97 = scmp.eq.s32.totalorder %s15, 0
    %p98 = por %p96, %p97
    %s99 = ssub.s32 %s16, %s28
    %s100 = ssub.s32 %s17, %s24
    %s101 = sor.u32 %s99, %s100
    %p102 = scmp.eq.s32.totalorder %s101, 0
    %s104 = sadd.s32 %s103, 1
    %s105 = scalar_select %p102, %s103, %s104
    %p108 = pneg %p102
    %p109 = scmp.eq.s32.totalorder %s9, 3
    %p110 = por %p108, %p109
    %p111 = scmp.ne.s32.totalorder %s103, %s106
    %p112 = scmp.eq.s32.totalorder %s9, 0
    %p113 = por %p111, %p112
    %p114 = scmp.ne.s32.totalorder %s103, %s106
    %p115 = scmp.eq.s32.totalorder %s14, 3
    %p116 = por %p114, %p115
    %p117 = scmp.ne.s32.totalorder %s106, %s107
    %p118 = scmp.eq.s32.totalorder %s14, 0
    %p119 = por %p117, %p118
    %p120 = scmp.ne.s32.totalorder %s106, %s107
    %p121 = scmp.eq.s32.totalorder %s15, 3
    %p122 = por %p120, %p121
    %p124 = scmp.ne.s32.totalorder %s107, %s123
    %p125 = scmp.eq.s32.totalorder %s15, 0
    %p126 = por %p124, %p125
    %p127 = scmp.le.s32.totalorder 1, %s9
    %p128 = scmp.lt.s32.totalorder %s9, 5
    %p129 = pnand %p127, %p128
    %p130 = pneg %p129
    // Predicated region
    $region9: #{_lambda_.14} parent=5 // pred_check
      _
    $region10: #{_lambda_.14} parent=5 // pred_check_branch
      %132 = sbr.rel (%p129) target = $region12
    $region11: #{_lambda_.14} parent=5 // pred_region
      %s133 = ssub.s32 %s9, 1
      // Predicated region
      $region13: #{_lambda_.14} parent=11 // pred_check
        %p134 = pneg %p70
      $region14: #{_lambda_.14} parent=11 // pred_check_branch
        %136 = sbr.rel (%p134) target = $region16
      $region15: #{_lambda_.14} parent=11 // pred_region
        _
      $region16: #{_lambda_.14} parent=11 // pred_fallthru
        _
      // Predicated region
      $region17: #{_lambda_.14} parent=11 // pred_check
        %p137 = pneg %p91
      $region18: #{_lambda_.14} parent=11 // pred_check_branch
        %139 = sbr.rel (%p137) target = $region20
      $region19: #{_lambda_.14} parent=11 // pred_region
        _
      $region20: #{_lambda_.14} parent=11 // pred_fallthru
        _
    $region12: #{_lambda_.14} parent=5 // pred_fallthru
      _
    %p140 = scmp.lt.s32.totalorder %s9, 4
    // Predicated region
    $region21: #{_lambda_.14} parent=5 // pred_check
      %p141 = pneg %p140
    $region22: #{_lambda_.14} parent=5 // pred_check_branch
      %143 = sbr.rel (%p141) target = $region24
    $region23: #{_lambda_.14} parent=5 // pred_region
      // Predicated region
      $region25: #{_lambda_.14} parent=23 // pred_check
        %p144 = pneg %p43
      $region26: #{_lambda_.14} parent=23 // pred_check_branch
        %146 = sbr.rel (%p144) target = $region28
      $region27: #{_lambda_.14} parent=23 // pred_region
        %p147 = scmp.lt.s32.totalorder %s16, 3
        %s148 = scalar_select %p147, %s16, 3
        %p149 = scmp.lt.s32.totalorder %s17, 0
        %s150 = scalar_select %p149, %s17, 0
        %s151 = sadd.s32 %s150, %s148
        %s152 = smul.addr %s151, 8
        %s153 = scalar_lea.vmem %s0, %s152
      $region28: #{_lambda_.14} parent=23 // pred_fallthru
        _
    $region24: #{_lambda_.14} parent=5 // pred_fallthru
      _
    %p154 = scmp.le.s32.totalorder 1, %s9
    %p155 = scmp.lt.s32.totalorder %s9, 5
    %p156 = pnand %p154, %p155
    %p157 = pneg %p156
    // Predicated region
    $region29: #{_lambda_.14} parent=5 // pred_check
      _
    $region30: #{_lambda_.14} parent=5 // pred_check_branch
      %159 = sbr.rel (%p156) target = $region32
    $region31: #{_lambda_.14} parent=5 // pred_region
      %s160 = ssub.s32 %s9, 1
      %p161 = scmp.lt.s32.totalorder %s18, 3
      %s162 = scalar_select %p161, %s18, 3
      %p163 = scmp.lt.s32.totalorder %s19, 0
      %s164 = scalar_select %p163, %s19, 0
      %s165 = sadd.s32 %s164, %s162
      %s166 = smul.addr %s165, 8
      %s167 = scalar_lea.vmem %s0, %s166
      %p168 = pneg %p49
      %p169 = pneg %p46
      %p170 = pneg %p70
      %p171 = pneg %p67
      %p172 = pneg %p91
      %p173 = pneg %p88
      %p174 = pneg %p119
      %p175 = pneg %p116
      %p176 = scmp.lt.s32.totalorder %s18, 3
      %s177 = scalar_select %p176, %s18, 3
      %p178 = scmp.lt.s32.totalorder %s19, 0
      %s179 = scalar_select %p178, %s19, 0
      %s180 = sadd.s32 %s179, %s177
      %s181 = smul.addr %s180, 8
      %s182 = scalar_lea.vmem %s3, %s181
      %p183 = scmp.lt.s32.totalorder %s18, 3
      %s184 = scalar_select %p183, %s18, 3
      %p185 = scmp.lt.s32.totalorder %s19, 0
      %s186 = scalar_select %p185, %s19, 0
      %s187 = sadd.s32 %s186, %s184
      %s188 = smul.addr %s187, 8
      %s189 = scalar_lea.vmem %s0, %s188
      %p190 = scmp.lt.s32.totalorder %s18, 3
      %s191 = scalar_select %p190, %s18, 3
      %p192 = scmp.lt.s32.totalorder %s19, 0
      %s193 = scalar_select %p192, %s19, 0
      %s194 = sadd.s32 %s193, %s191
      %s195 = smul.addr %s194, 8
      %s196 = scalar_lea.vmem %s3, %s195
      %v197 = vld [vmem:[%s189] sm:$0xff]
      %v198 = vld [vmem:[%s1] sm:$0xff]
      %200 = vset.pattern.permute.xlu0 0
      %201 = vperm.xlu0 %200, %v198
      %v202 = vpop.permute.xlu0 %201
      %v204 = vmul.f32 %v197, %v202
      %v205 = vld [vmem:[%s2] sm:$0xff]
      %207 = vset.pattern.permute.xlu0 0
      %208 = vperm.xlu0 %207, %v205
      %v209 = vpop.permute.xlu0 %208
      %v211 = vadd.f32 %v204, %v209
      %212 = vst [vmem:[%s196] sm:$0xff] %v211
      %p213 = scmp.lt.s32.totalorder %s18, 3
      %s214 = scalar_select %p213, %s18, 3
      %p215 = scmp.lt.s32.totalorder %s19, 0
      %s216 = scalar_select %p215, %s19, 0
      %s217 = sadd.s32 %s216, %s214
      %s218 = smul.addr %s217, 8
      %s219 = scalar_lea.vmem %s3, %s218
      // Predicated region
      $region33: #{_lambda_.14} parent=31 // pred_check
        %p220 = pneg %p116
      $region34: #{_lambda_.14} parent=31 // pred_check_branch
        %222 = sbr.rel (%p220) target = $region36
      $region35: #{_lambda_.14} parent=31 // pred_region
        _
      $region36: #{_lambda_.14} parent=31 // pred_fallthru
        _
    $region32: #{_lambda_.14} parent=5 // pred_fallthru
      _
    %p223 = scmp.le.s32.totalorder 2, %s9
    // Predicated region
    $region37: #{_lambda_.14} parent=5 // pred_check
      %p224 = pneg %p223
    $region38: #{_lambda_.14} parent=5 // pred_check_branch
      %226 = sbr.rel (%p224) target = $region40
    $region39: #{_lambda_.14} parent=5 // pred_region
      %s227 = ssub.s32 %s9, 2
      // Predicated region
      $region41: #{_lambda_.14} parent=39 // pred_check
        %p228 = pneg %p122
      $region42: #{_lambda_.14} parent=39 // pred_check_branch
        %230 = sbr.rel (%p228) target = $region44
      $region43: #{_lambda_.14} parent=39 // pred_region
        %p231 = scmp.lt.s32.totalorder %s20, 3
        %s232 = scalar_select %p231, %s20, 3
        %p233 = scmp.lt.s32.totalorder %s21, 0
        %s234 = scalar_select %p233, %s21, 0
        %s235 = sadd.s32 %s234, %s232
        %s236 = smul.addr %s235, 8
        %s237 = scalar_lea.vmem %s3, %s236
      $region44: #{_lambda_.14} parent=39 // pred_fallthru
        _
    $region40: #{_lambda_.14} parent=5 // pred_fallthru
      _
  $region6: #{_lambda_.14} parent=0 // loop_footer
    %s13 = sadd.s32 1, %s9
  $region7: #{_lambda_.14} parent=0 // loop_footer_branch
    %8 = sbr.rel target = $region3
  $region8: #{_lambda_.14} parent=0 // loop_exit
    _

// kernel: _lambda_.13
$region0: #{_lambda_.13}
  #allocation0 [shape = 'u32[]', space=smem, size = 0x4, offset = 0x4, fixed_abs, tag = 'smem constant byte address 0x4 - core index']
  #allocation1 [shape = 'u32[144,128]{1,0:T(1,128)}', space=vmem, size = 0x12000, scoped, tag = 'internal scratch']
  %s0 = inlined_call_operand.vmem [shape: bf16[4,64,128], index: 0, kind: input, shape index: {}]
  %s1 = inlined_call_operand.vmem [shape: bf16[4,8,64], index: 1, kind: input, shape index: {}]
  %s2 = inlined_call_operand.vmem [shape: f32[8,1], index: 2, kind: input, shape index: {}]
  %s3 = inlined_call_operand.vmem [shape: f32[4,8,128], index: 3, kind: output, shape index: {0}]
  %s4 = inlined_call_operand.vmem [shape: f32[4,1,8,2], index: 4, kind: output, shape index: {1}]
  %5 = xla_tuple %s3, %s4
  %s6 = sld [smem:[#allocation0]]
  $region53: #{_lambda_.13} parent=0
    _
  %s8 = ssub.s32 1, %s6
  %s9 = scalar_select 0, %s8, %s6
  loop: start=0, step=1, limit=6
  $region2: #{_lambda_.13} parent=0 // loop_pre_header
    _
  $region3: #{_lambda_.13} parent=0 // loop_header
    %s11 = sphi 0, %s15
    %p12 = scmp.ge.s32.totalorder %s11, 6
    %s18 = sphi 0, %s30
    %s19 = sphi 0, %s26
    %s20 = sphi 0, %s18
    %s21 = sphi 0, %s19
    %s22 = sphi 0, %s20
    %s23 = sphi 0, %s21
    %s35 = sphi 0, %s37
    %s38 = sphi 0, %s35
    %s39 = sphi 0, %s38
    %s55 = sphi 0, %s39
    %s61 = sphi 0, %s63
    %s64 = sphi 0, %s61
    %s65 = sphi 0, %s64
    %s81 = sphi 0, %s65
    %s85 = sphi 0, %s85
    %s87 = sphi 0, %s85
    %s88 = sphi 0, %s87
    %s102 = sphi 0, %s88
    %s110 = sphi 0, %s112
    %s113 = sphi 0, %s110
    %s114 = sphi 0, %s113
    %s130 = sphi 0, %s114
    %s138 = sphi 0, %s140
    %s141 = sphi 0, %s138
    %s142 = sphi 0, %s141
    %s158 = sphi 0, %s142
  $region4: #{_lambda_.13} parent=0 // loop_header_branch
    %14 = sbr.rel (%p12) target = $region8
  $region5: #{_lambda_.13} parent=0 // loop_body
    %s16 = ssub.s32 %s11, 1
    %s17 = ssub.s32 %s11, 2
    %s24 = sadd.s32 1, %s19
    %p25 = scmp.ge.s32.totalorder %s24, 1
    %s26 = scalar_select %p25, 0, %s24
    %s27 = sadd.s32 1, %s18
    %s28 = scalar_select %p25, %s27, %s18
    %p29 = scmp.ge.s32.totalorder %s28, 4
    %s30 = scalar_select %p29, 0, %s28
    %s31 = ssub.s32 %s18, %s30
    %s32 = ssub.s32 %s19, %s26
    %s33 = sor.u32 %s31, %s32
    %p34 = scmp.eq.s32.totalorder %s33, 0
    %s36 = sadd.s32 %s35, 1
    %s37 = scalar_select %p34, %s35, %s36
    %p40 = pneg %p34
    %p41 = scmp.eq.s32.totalorder %s11, 3
    %p42 = por %p40, %p41
    %p43 = scmp.ne.s32.totalorder %s35, %s38
    %p44 = scmp.eq.s32.totalorder %s11, 0
    %p45 = por %p43, %p44
    %p46 = scmp.ne.s32.totalorder %s35, %s38
    %p47 = scmp.eq.s32.totalorder %s16, 3
    %p48 = por %p46, %p47
    %p49 = scmp.ne.s32.totalorder %s38, %s39
    %p50 = scmp.eq.s32.totalorder %s16, 0
    %p51 = por %p49, %p50
    %p52 = scmp.ne.s32.totalorder %s38, %s39
    %p53 = scmp.eq.s32.totalorder %s17, 3
    %p54 = por %p52, %p53
    %p56 = scmp.ne.s32.totalorder %s39, %s55
    %p57 = scmp.eq.s32.totalorder %s17, 0
    %p58 = por %p56, %p57
    %s59 = ssub.s32 %s18, %s30
    %p60 = scmp.eq.s32.totalorder %s59, 0
    %s62 = sadd.s32 %s61, 1
    %s63 = scalar_select %p60, %s61, %s62
    %p66 = pneg %p60
    %p67 = scmp.eq.s32.totalorder %s11, 3
    %p68 = por %p66, %p67
    %p69 = scmp.ne.s32.totalorder %s61, %s64
    %p70 = scmp.eq.s32.totalorder %s11, 0
    %p71 = por %p69, %p70
    %p72 = scmp.ne.s32.totalorder %s61, %s64
    %p73 = scmp.eq.s32.totalorder %s16, 3
    %p74 = por %p72, %p73
    %p75 = scmp.ne.s32.totalorder %s64, %s65
    %p76 = scmp.eq.s32.totalorder %s16, 0
    %p77 = por %p75, %p76
    %p78 = scmp.ne.s32.totalorder %s64, %s65
    %p79 = scmp.eq.s32.totalorder %s17, 3
    %p80 = por %p78, %p79
    %p82 = scmp.ne.s32.totalorder %s65, %s81
    %p83 = scmp.eq.s32.totalorder %s17, 0
    %p84 = por %p82, %p83
    %s86 = sadd.s32 %s85, 1
    %p89 = scmp.eq.s32.totalorder %s11, 3
    %p90 = scmp.ne.s32.totalorder %s85, %s87
    %p91 = scmp.eq.s32.totalorder %s11, 0
    %p92 = por %p90, %p91
    %p93 = scmp.ne.s32.totalorder %s85, %s87
    %p94 = scmp.eq.s32.totalorder %s16, 3
    %p95 = por %p93, %p94
    %p96 = scmp.ne.s32.totalorder %s87, %s88
    %p97 = scmp.eq.s32.totalorder %s16, 0
    %p98 = por %p96, %p97
    %p99 = scmp.ne.s32.totalorder %s87, %s88
    %p100 = scmp.eq.s32.totalorder %s17, 3
    %p101 = por %p99, %p100
    %p103 = scmp.ne.s32.totalorder %s88, %s102
    %p104 = scmp.eq.s32.totalorder %s17, 0
    %p105 = por %p103, %p104
    %s106 = ssub.s32 %s18, %s30
    %s107 = ssub.s32 %s19, %s26
    %s108 = sor.u32 %s106, %s107
    %p109 = scmp.eq.s32.totalorder %s108, 0
    %s111 = sadd.s32 %s110, 1
    %s112 = scalar_select %p109, %s110, %s111
    %p115 = pneg %p109
    %p116 = scmp.eq.s32.totalorder %s11, 3
    %p117 = por %p115, %p116
    %p118 = scmp.ne.s32.totalorder %s110, %s113
    %p119 = scmp.eq.s32.totalorder %s11, 0
    %p120 = por %p118, %p119
    %p121 = scmp.ne.s32.totalorder %s110, %s113
    %p122 = scmp.eq.s32.totalorder %s16, 3
    %p123 = por %p121, %p122
    %p124 = scmp.ne.s32.totalorder %s113, %s114
    %p125 = scmp.eq.s32.totalorder %s16, 0
    %p126 = por %p124, %p125
    %p127 = scmp.ne.s32.totalorder %s113, %s114
    %p128 = scmp.eq.s32.totalorder %s17, 3
    %p129 = por %p127, %p128
    %p131 = scmp.ne.s32.totalorder %s114, %s130
    %p132 = scmp.eq.s32.totalorder %s17, 0
    %p133 = por %p131, %p132
    %s134 = ssub.s32 %s18, %s30
    %s135 = ssub.s32 %s19, %s26
    %s136 = sor.u32 %s134, %s135
    %p137 = scmp.eq.s32.totalorder %s136, 0
    %s139 = sadd.s32 %s138, 1
    %s140 = scalar_select %p137, %s138, %s139
    %p143 = pneg %p137
    %p144 = scmp.eq.s32.totalorder %s11, 3
    %p145 = por %p143, %p144
    %p146 = scmp.ne.s32.totalorder %s138, %s141
    %p147 = scmp.eq.s32.totalorder %s11, 0
    %p148 = por %p146, %p147
    %p149 = scmp.ne.s32.totalorder %s138, %s141
    %p150 = scmp.eq.s32.totalorder %s16, 3
    %p151 = por %p149, %p150
    %p152 = scmp.ne.s32.totalorder %s141, %s142
    %p153 = scmp.eq.s32.totalorder %s16, 0
    %p154 = por %p152, %p153
    %p155 = scmp.ne.s32.totalorder %s141, %s142
    %p156 = scmp.eq.s32.totalorder %s17, 3
    %p157 = por %p155, %p156
    %p159 = scmp.ne.s32.totalorder %s142, %s158
    %p160 = scmp.eq.s32.totalorder %s17, 0
    %p161 = por %p159, %p160
    %p162 = scmp.le.s32.totalorder 1, %s11
    %p163 = scmp.lt.s32.totalorder %s11, 5
    %p164 = pnand %p162, %p163
    %p165 = pneg %p164
    // Predicated region
    $region9: #{_lambda_.13} parent=5 // pred_check
      _
    $region10: #{_lambda_.13} parent=5 // pred_check_branch
      %167 = sbr.rel (%p164) target = $region12
    $region11: #{_lambda_.13} parent=5 // pred_region
      %s168 = ssub.s32 %s11, 1
      // Predicated region
      $region13: #{_lambda_.13} parent=11 // pred_check
        %p169 = pneg %p98
      $region14: #{_lambda_.13} parent=11 // pred_check_branch
        %171 = sbr.rel (%p169) target = $region16
      $region15: #{_lambda_.13} parent=11 // pred_region
        _
      $region16: #{_lambda_.13} parent=11 // pred_fallthru
        _
    $region12: #{_lambda_.13} parent=5 // pred_fallthru
      _
    %p172 = scmp.lt.s32.totalorder %s11, 4
    // Predicated region
    $region17: #{_lambda_.13} parent=5 // pred_check
      %p173 = pneg %p172
    $region18: #{_lambda_.13} parent=5 // pred_check_branch
      %175 = sbr.rel (%p173) target = $region20
    $region19: #{_lambda_.13} parent=5 // pred_region
      // Predicated region
      $region21: #{_lambda_.13} parent=19 // pred_check
        %p176 = pneg %p45
      $region22: #{_lambda_.13} parent=19 // pred_check_branch
        %178 = sbr.rel (%p176) target = $region24
      $region23: #{_lambda_.13} parent=19 // pred_region
        %p179 = scmp.lt.s32.totalorder %s18, 3
        %s180 = scalar_select %p179, %s18, 3
        %p181 = scmp.lt.s32.totalorder %s19, 0
        %s182 = scalar_select %p181, %s19, 0
        %s183 = smul.addr %s180, 8
        %s184 = sadd.s32 %s182, %s183
        %s185 = smul.addr %s184, 4
        %s186 = scalar_lea.vmem %s0, %s185
      $region24: #{_lambda_.13} parent=19 // pred_fallthru
        _
      // Predicated region
      $region25: #{_lambda_.13} parent=19 // pred_check
        %p187 = pneg %p71
      $region26: #{_lambda_.13} parent=19 // pred_check_branch
        %189 = sbr.rel (%p187) target = $region28
      $region27: #{_lambda_.13} parent=19 // pred_region
        %p190 = scmp.lt.s32.totalorder %s18, 3
        %s191 = scalar_select %p190, %s18, 3
        %s192 = smul.addr %s191, 4
        %s193 = scalar_lea.vmem %s1, %s192
      $region28: #{_lambda_.13} parent=19 // pred_fallthru
        _
    $region20: #{_lambda_.13} parent=5 // pred_fallthru
      _
    %p194 = scmp.le.s32.totalorder 1, %s11
    %p195 = scmp.lt.s32.totalorder %s11, 5
    %p196 = pnand %p194, %p195
    %p197 = pneg %p196
    // Predicated region
    $region29: #{_lambda_.13} parent=5 // pred_check
      _
    $region30: #{_lambda_.13} parent=5 // pred_check_branch
      %199 = sbr.rel (%p196) target = $region32
    $region31: #{_lambda_.13} parent=5 // pred_region
      %s200 = ssub.s32 %s11, 1
      %p201 = scmp.lt.s32.totalorder %s20, 3
      %s202 = scalar_select %p201, %s20, 3
      %p203 = scmp.lt.s32.totalorder %s21, 0
      %s204 = scalar_select %p203, %s21, 0
      %s205 = smul.addr %s202, 8
      %s206 = sadd.s32 %s204, %s205
      %s207 = smul.addr %s206, 4
      %s208 = scalar_lea.vmem %s0, %s207
      %p209 = pneg %p51
      %p210 = pneg %p48
      %p211 = scmp.lt.s32.totalorder %s20, 3
      %s212 = scalar_select %p211, %s20, 3
      %s213 = smul.addr %s212, 4
      %s214 = scalar_lea.vmem %s1, %s213
      %p215 = pneg %p77
      %p216 = pneg %p74
      %p217 = pneg %p98
      %p218 = pneg %p95
      %p219 = pneg %p126
      %p220 = pneg %p123
      %p221 = scmp.lt.s32.totalorder %s20, 3
      %s222 = scalar_select %p221, %s20, 3
      %p223 = scmp.lt.s32.totalorder %s21, 0
      %s224 = scalar_select %p223, %s21, 0
      %s225 = sadd.s32 %s224, %s222
      %s226 = smul.addr %s225, 8
      %s227 = scalar_lea.vmem %s3, %s226
      %p228 = pneg %p154
      %p229 = pneg %p151
      %p230 = scmp.lt.s32.totalorder %s20, 3
      %s231 = scalar_select %p230, %s20, 3
      %p232 = scmp.lt.s32.totalorder %s21, 0
      %s233 = scalar_select %p232, %s21, 0
      %s234 = sadd.s32 %s233, %s231
      %s235 = smul.addr %s234, 8
      %s236 = scalar_lea.vmem %s4, %s235
      %p237 = scmp.lt.s32.totalorder %s20, 3
      %s238 = scalar_select %p237, %s20, 3
      %p239 = scmp.lt.s32.totalorder %s21, 0
      %s240 = scalar_select %p239, %s21, 0
      %s241 = smul.addr %s238, 8
      %s242 = sadd.s32 %s240, %s241
      %s243 = smul.addr %s242, 4
      %s244 = scalar_lea.vmem %s0, %s243
      %p245 = scmp.lt.s32.totalorder %s20, 3
      %s246 = scalar_select %p245, %s20, 3
      %s247 = smul.addr %s246, 4
      %s248 = scalar_lea.vmem %s1, %s247
      %p249 = scmp.lt.s32.totalorder %s20, 3
      %s250 = scalar_select %p249, %s20, 3
      %p251 = scmp.lt.s32.totalorder %s21, 0
      %s252 = scalar_select %p251, %s21, 0
      %s253 = sadd.s32 %s252, %s250
      %s254 = smul.addr %s253, 8
      %s255 = scalar_lea.vmem %s3, %s254
      %p256 = scmp.lt.s32.totalorder %s20, 3
      %s257 = scalar_select %p256, %s20, 3
      %p258 = scmp.lt.s32.totalorder %s21, 0
      %s259 = scalar_select %p258, %s21, 0
      %s260 = sadd.s32 %s259, %s257
      %s261 = smul.addr %s260, 8
      %s262 = scalar_lea.vmem %s4, %s261
      %v264 = vld [vmem:[%s248] sm:$0xf]
      %v265 = vld [vmem:[%s244] sm:$0xf]
      %v266 = vld [vmem:[%s244 + $0x4] sm:$0xf]
      %v267 = vld [vmem:[%s244 + $0x8] sm:$0xf]
      %v268 = vld [vmem:[%s244 + $0xc] sm:$0xf]
      %v269 = vld [vmem:[%s244 + $0x10] sm:$0xf]
      %v270 = vld [vmem:[%s244 + $0x14] sm:$0xf]
      %v271 = vld [vmem:[%s244 + $0x18] sm:$0xf]
      %v272 = vld [vmem:[%s244 + $0x1c] sm:$0xf]
      %v273 = vld [vmem:[%s2] sm:$0xff]
      %275 = vset.pattern.permute.xlu0 0
      %276 = vperm.xlu0 %275, %v273
      %v277 = vpop.permute.xlu0 %276
      %v287 = vunpack.c.l.b16 %v265
      %v288 = vunpack.c.l.b16 %v266
      %v289 = vunpack.c.l.b16 %v267
      %v290 = vunpack.c.l.b16 %v268
      %v291 = vunpack.c.l.b16 %v269
      %v292 = vunpack.c.l.b16 %v270
      %v293 = vunpack.c.l.b16 %v271
      %v294 = vunpack.c.l.b16 %v272
      %v295 = vpack.c.b16 %v288, %v287
      %v296 = vpack.c.b16 %v290, %v289
      %v297 = vpack.c.b16 %v292, %v291
      %v298 = vpack.c.b16 %v294, %v293
      %vm303 = vcmask 523264
      %v305 = vsel %vm303, %v264, 0
      %307 = vmatprep.subr.bf16.mxu0 0
      %308 = vmatpush1.bf16.msra.mxu0 %v295
      %309 = vmatprep.subr.bf16.mxu0 0
      %310 = vmatpush1.bf16.msra.mxu0 %v296
      %311 = vmatprep.subr.bf16.mxu0 0
      %312 = vmatpush1.bf16.msra.mxu0 %v297
      %313 = vmatprep.subr.bf16.mxu0 0
      %314 = vmatpush1.bf16.msra.mxu0 %v298
      %315 = vmatprep.subr.bf16.mxu0 0
      %316 = vmatpush1.bf16.msra.mxu0 0
      %317 = vmatprep.subr.bf16.mxu0 0
      %318 = vmatpush1.bf16.msra.mxu0 0
      %319 = vmatprep.subr.bf16.mxu0 0
      %320 = vmatpush1.bf16.msra.mxu0 0
      %321 = vmatprep.subr.bf16.mxu0 0
      %322 = vmatpush1.bf16.msra.mxu0 0
      %323 = vmatprep.subr.bf16.mxu0 0
      %324 = vmatpush1.bf16.msra.mxu0 0
      %325 = vmatprep.subr.bf16.mxu0 0
      %326 = vmatpush1.bf16.msra.mxu0 0
      %327 = vmatprep.subr.bf16.mxu0 0
      %328 = vmatpush1.bf16.msra.mxu0 0
      %329 = vmatprep.subr.bf16.mxu0 0
      %330 = vmatpush1.bf16.msra.mxu0 0
      %331 = vmatprep.subr.bf16.mxu0 0
      %332 = vmatpush1.bf16.msra.mxu0 0
      %333 = vmatprep.subr.bf16.mxu0 0
      %334 = vmatpush1.bf16.msra.mxu0 0
      %335 = vmatprep.subr.bf16.mxu0 0
      %336 = vmatpush1.bf16.msra.mxu0 0
      %337 = vmatprep.subr.bf16.mxu0 0
      %338 = vmatpush1.bf16.msra.mxu0 0
      %339 = vmatprep.mubr.bf16.mxu0 0
      %340 = vmatmul.mubr.bf16.gmra.mrb[0].mxu0 %v305
      %v341 = vpop.f32.mrb[0].mxu0
      %v342 = vadd.f32 %v277, %v341
      %v343 = vpop.f32.mrb[0].mxu0
      %v344 = vpop.f32.mrb[0].mxu0
      %v345 = vpop.f32.mrb[0].mxu0
      %346 = vdwg.mxu0
      %347 = vst [vmem:[%s255] sm:$0xff] %v342
      %348 = vadd.xlane.f32.xlu0 %v342
      %v349 = vpop.xlane.xlu0 %348
      %vm350 = vcmask 7168
      %351 = vst.msk [vmem:[%s262] sm:$0xff] %vm350, %v349
      %v352 = vmul.f32 %v342, %v342
      %353 = vadd.xlane.f32.xlu0 %v352
      %v354 = vpop.xlane.xlu0 %353
      %vm355 = vcmask 15368
      %356 = vst.msk [vmem:[%s262] sm:$0xff] %vm355, %v354
      %p357 = scmp.lt.s32.totalorder %s20, 3
      %s358 = scalar_select %p357, %s20, 3
      %p359 = scmp.lt.s32.totalorder %s21, 0
      %s360 = scalar_select %p359, %s21, 0
      %s361 = sadd.s32 %s360, %s358
      %s362 = smul.addr %s361, 8
      %s363 = scalar_lea.vmem %s3, %s362
      %p364 = scmp.lt.s32.totalorder %s20, 3
      %s365 = scalar_select %p364, %s20, 3
      %p366 = scmp.lt.s32.totalorder %s21, 0
      %s367 = scalar_select %p366, %s21, 0
      %s368 = sadd.s32 %s367, %s365
      %s369 = smul.addr %s368, 8
      %s370 = scalar_lea.vmem %s4, %s369
      // Predicated region
      $region33: #{_lambda_.13} parent=31 // pred_check
        %p371 = pneg %p123
      $region34: #{_lambda_.13} parent=31 // pred_check_branch
        %373 = sbr.rel (%p371) target = $region36
      $region35: #{_lambda_.13} parent=31 // pred_region
        _
      $region36: #{_lambda_.13} parent=31 // pred_fallthru
        _
      // Predicated region
      $region37: #{_lambda_.13} parent=31 // pred_check
        %p374 = pneg %p151
      $region38: #{_lambda_.13} parent=31 // pred_check_branch
        %376 = sbr.rel (%p374) target = $region40
      $region39: #{_lambda_.13} parent=31 // pred_region
        _
      $region40: #{_lambda_.13} parent=31 // pred_fallthru
        _
    $region32: #{_lambda_.13} parent=5 // pred_fallthru
      _
    %p377 = scmp.le.s32.totalorder 2, %s11
    // Predicated region
    $region41: #{_lambda_.13} parent=5 // pred_check
      %p378 = pneg %p377
    $region42: #{_lambda_.13} parent=5 // pred_check_branch
      %380 = sbr.rel (%p378) target = $region44
    $region43: #{_lambda_.13} parent=5 // pred_region
      %s381 = ssub.s32 %s11, 2
      // Predicated region
      $region45: #{_lambda_.13} parent=43 // pred_check
        %p382 = pneg %p129
      $region46: #{_lambda_.13} parent=43 // pred_check_branch
        %384 = sbr.rel (%p382) target = $region48
      $region47: #{_lambda_.13} parent=43 // pred_region
        %p385 = scmp.lt.s32.totalorder %s22, 3
        %s386 = scalar_select %p385, %s22, 3
        %p387 = scmp.lt.s32.totalorder %s23, 0
        %s388 = scalar_select %p387, %s23, 0
        %s389 = sadd.s32 %s388, %s386
        %s390 = smul.addr %s389, 8
        %s391 = scalar_lea.vmem %s3, %s390
      $region48: #{_lambda_.13} parent=43 // pred_fallthru
        _
      // Predicated region
      $region49: #{_lambda_.13} parent=43 // pred_check
        %p392 = pneg %p157
      $region50: #{_lambda_.13} parent=43 // pred_check_branch
        %394 = sbr.rel (%p392) target = $region52
      $region51: #{_lambda_.13} parent=43 // pred_region
        %p395 = scmp.lt.s32.totalorder %s22, 3
        %s396 = scalar_select %p395, %s22, 3
        %p397 = scmp.lt.s32.totalorder %s23, 0
        %s398 = scalar_select %p397, %s23, 0
        %s399 = sadd.s32 %s398, %s396
        %s400 = smul.addr %s399, 8
        %s401 = scalar_lea.vmem %s4, %s400
      $region52: #{_lambda_.13} parent=43 // pred_fallthru
        _
    $region44: #{_lambda_.13} parent=5 // pred_fallthru
      _
  $region6: #{_lambda_.13} parent=0 // loop_footer
    %s15 = sadd.s32 1, %s11
  $region7: #{_lambda_.13} parent=0 // loop_footer_branch
    %10 = sbr.rel target = $region3
  $region8: #{_lambda_.13} parent=0 // loop_exit
    _

// kernel: _lambda_.16
$region0: #{_lambda_.16}
  #allocation0 [shape = 'u32[]', space=smem, size = 0x4, offset = 0x4, fixed_abs, tag = 'smem constant byte address 0x4 - core index']
  #allocation1 [shape = 'u32[144,128]{1,0:T(1,128)}', space=vmem, size = 0x12000, scoped, tag = 'internal scratch']
  %s0 = inlined_call_operand.vmem [shape: f32[4,4,128], index: 0, kind: input, shape index: {}]
  %s1 = inlined_call_operand.vmem [shape: f32[4,1], index: 1, kind: input, shape index: {}]
  %s2 = inlined_call_operand.vmem [shape: f32[4,1], index: 2, kind: input, shape index: {}]
  %s3 = inlined_call_operand.vmem [shape: f32[4,4,128], index: 3, kind: output, shape index: {}]
  %s4 = sld [smem:[#allocation0]]
  $region45: #{_lambda_.16} parent=0
    _
  %s6 = ssub.s32 1, %s4
  %s7 = scalar_select 0, %s6, %s4
  loop: start=0, step=1, limit=6
  $region2: #{_lambda_.16} parent=0 // loop_pre_header
    _
  $region3: #{_lambda_.16} parent=0 // loop_header
    %s9 = sphi 0, %s13
    %p10 = scmp.ge.s32.totalorder %s9, 6
    %s16 = sphi 0, %s28
    %s17 = sphi 0, %s24
    %s18 = sphi 0, %s16
    %s19 = sphi 0, %s17
    %s20 = sphi 0, %s18
    %s21 = sphi 0, %s19
    %s33 = sphi 0, %s35
    %s36 = sphi 0, %s33
    %s37 = sphi 0, %s36
    %s53 = sphi 0, %s37
    %s57 = sphi 0, %s57
    %s59 = sphi 0, %s57
    %s60 = sphi 0, %s59
    %s74 = sphi 0, %s60
    %s78 = sphi 0, %s78
    %s80 = sphi 0, %s78
    %s81 = sphi 0, %s80
    %s95 = sphi 0, %s81
    %s103 = sphi 0, %s105
    %s106 = sphi 0, %s103
    %s107 = sphi 0, %s106
    %s123 = sphi 0, %s107
  $region4: #{_lambda_.16} parent=0 // loop_header_branch
    %12 = sbr.rel (%p10) target = $region8
  $region5: #{_lambda_.16} parent=0 // loop_body
    %s14 = ssub.s32 %s9, 1
    %s15 = ssub.s32 %s9, 2
    %s22 = sadd.s32 1, %s17
    %p23 = scmp.ge.s32.totalorder %s22, 1
    %s24 = scalar_select %p23, 0, %s22
    %s25 = sadd.s32 1, %s16
    %s26 = scalar_select %p23, %s25, %s16
    %p27 = scmp.ge.s32.totalorder %s26, 4
    %s28 = scalar_select %p27, 0, %s26
    %s29 = ssub.s32 %s16, %s28
    %s30 = ssub.s32 %s17, %s24
    %s31 = sor.u32 %s29, %s30
    %p32 = scmp.eq.s32.totalorder %s31, 0
    %s34 = sadd.s32 %s33, 1
    %s35 = scalar_select %p32, %s33, %s34
    %p38 = pneg %p32
    %p39 = scmp.eq.s32.totalorder %s9, 3
    %p40 = por %p38, %p39
    %p41 = scmp.ne.s32.totalorder %s33, %s36
    %p42 = scmp.eq.s32.totalorder %s9, 0
    %p43 = por %p41, %p42
    %p44 = scmp.ne.s32.totalorder %s33, %s36
    %p45 = scmp.eq.s32.totalorder %s14, 3
    %p46 = por %p44, %p45
    %p47 = scmp.ne.s32.totalorder %s36, %s37
    %p48 = scmp.eq.s32.totalorder %s14, 0
    %p49 = por %p47, %p48
    %p50 = scmp.ne.s32.totalorder %s36, %s37
    %p51 = scmp.eq.s32.totalorder %s15, 3
    %p52 = por %p50, %p51
    %p54 = scmp.ne.s32.totalorder %s37, %s53
    %p55 = scmp.eq.s32.totalorder %s15, 0
    %p56 = por %p54, %p55
    %s58 = sadd.s32 %s57, 1
    %p61 = scmp.eq.s32.totalorder %s9, 3
    %p62 = scmp.ne.s32.totalorder %s57, %s59
    %p63 = scmp.eq.s32.totalorder %s9, 0
    %p64 = por %p62, %p63
    %p65 = scmp.ne.s32.totalorder %s57, %s59
    %p66 = scmp.eq.s32.totalorder %s14, 3
    %p67 = por %p65, %p66
    %p68 = scmp.ne.s32.totalorder %s59, %s60
    %p69 = scmp.eq.s32.totalorder %s14, 0
    %p70 = por %p68, %p69
    %p71 = scmp.ne.s32.totalorder %s59, %s60
    %p72 = scmp.eq.s32.totalorder %s15, 3
    %p73 = por %p71, %p72
    %p75 = scmp.ne.s32.totalorder %s60, %s74
    %p76 = scmp.eq.s32.totalorder %s15, 0
    %p77 = por %p75, %p76
    %s79 = sadd.s32 %s78, 1
    %p82 = scmp.eq.s32.totalorder %s9, 3
    %p83 = scmp.ne.s32.totalorder %s78, %s80
    %p84 = scmp.eq.s32.totalorder %s9, 0
    %p85 = por %p83, %p84
    %p86 = scmp.ne.s32.totalorder %s78, %s80
    %p87 = scmp.eq.s32.totalorder %s14, 3
    %p88 = por %p86, %p87
    %p89 = scmp.ne.s32.totalorder %s80, %s81
    %p90 = scmp.eq.s32.totalorder %s14, 0
    %p91 = por %p89, %p90
    %p92 = scmp.ne.s32.totalorder %s80, %s81
    %p93 = scmp.eq.s32.totalorder %s15, 3
    %p94 = por %p92, %p93
    %p96 = scmp.ne.s32.totalorder %s81, %s95
    %p97 = scmp.eq.s32.totalorder %s15, 0
    %p98 = por %p96, %p97
    %s99 = ssub.s32 %s16, %s28
    %s100 = ssub.s32 %s17, %s24
    %s101 = sor.u32 %s99, %s100
    %p102 = scmp.eq.s32.totalorder %s101, 0
    %s104 = sadd.s32 %s103, 1
    %s105 = scalar_select %p102, %s103, %s104
    %p108 = pneg %p102
    %p109 = scmp.eq.s32.totalorder %s9, 3
    %p110 = por %p108, %p109
    %p111 = scmp.ne.s32.totalorder %s103, %s106
    %p112 = scmp.eq.s32.totalorder %s9, 0
    %p113 = por %p111, %p112
    %p114 = scmp.ne.s32.totalorder %s103, %s106
    %p115 = scmp.eq.s32.totalorder %s14, 3
    %p116 = por %p114, %p115
    %p117 = scmp.ne.s32.totalorder %s106, %s107
    %p118 = scmp.eq.s32.totalorder %s14, 0
    %p119 = por %p117, %p118
    %p120 = scmp.ne.s32.totalorder %s106, %s107
    %p121 = scmp.eq.s32.totalorder %s15, 3
    %p122 = por %p120, %p121
    %p124 = scmp.ne.s32.totalorder %s107, %s123
    %p125 = scmp.eq.s32.totalorder %s15, 0
    %p126 = por %p124, %p125
    %p127 = scmp.le.s32.totalorder 1, %s9
    %p128 = scmp.lt.s32.totalorder %s9, 5
    %p129 = pnand %p127, %p128
    %p130 = pneg %p129
    // Predicated region
    $region9: #{_lambda_.16} parent=5 // pred_check
      _
    $region10: #{_lambda_.16} parent=5 // pred_check_branch
      %132 = sbr.rel (%p129) target = $region12
    $region11: #{_lambda_.16} parent=5 // pred_region
      %s133 = ssub.s32 %s9, 1
      // Predicated region
      $region13: #{_lambda_.16} parent=11 // pred_check
        %p134 = pneg %p70
      $region14: #{_lambda_.16} parent=11 // pred_check_branch
        %136 = sbr.rel (%p134) target = $region16
      $region15: #{_lambda_.16} parent=11 // pred_region
        _
      $region16: #{_lambda_.16} parent=11 // pred_fallthru
        _
      // Predicated region
      $region17: #{_lambda_.16} parent=11 // pred_check
        %p137 = pneg %p91
      $region18: #{_lambda_.16} parent=11 // pred_check_branch
        %139 = sbr.rel (%p137) target = $region20
      $region19: #{_lambda_.16} parent=11 // pred_region
        _
      $region20: #{_lambda_.16} parent=11 // pred_fallthru
        _
    $region12: #{_lambda_.16} parent=5 // pred_fallthru
      _
    %p140 = scmp.lt.s32.totalorder %s9, 4
    // Predicated region
    $region21: #{_lambda_.16} parent=5 // pred_check
      %p141 = pneg %p140
    $region22: #{_lambda_.16} parent=5 // pred_check_branch
      %143 = sbr.rel (%p141) target = $region24
    $region23: #{_lambda_.16} parent=5 // pred_region
      // Predicated region
      $region25: #{_lambda_.16} parent=23 // pred_check
        %p144 = pneg %p43
      $region26: #{_lambda_.16} parent=23 // pred_check_branch
        %146 = sbr.rel (%p144) target = $region28
      $region27: #{_lambda_.16} parent=23 // pred_region
        %p147 = scmp.lt.s32.totalorder %s16, 3
        %s148 = scalar_select %p147, %s16, 3
        %p149 = scmp.lt.s32.totalorder %s17, 0
        %s150 = scalar_select %p149, %s17, 0
        %s151 = sadd.s32 %s150, %s148
        %s152 = smul.addr %s151, 4
        %s153 = scalar_lea.vmem %s0, %s152
      $region28: #{_lambda_.16} parent=23 // pred_fallthru
        _
    $region24: #{_lambda_.16} parent=5 // pred_fallthru
      _
    %p154 = scmp.le.s32.totalorder 1, %s9
    %p155 = scmp.lt.s32.totalorder %s9, 5
    %p156 = pnand %p154, %p155
    %p157 = pneg %p156
    // Predicated region
    $region29: #{_lambda_.16} parent=5 // pred_check
      _
    $region30: #{_lambda_.16} parent=5 // pred_check_branch
      %159 = sbr.rel (%p156) target = $region32
    $region31: #{_lambda_.16} parent=5 // pred_region
      %s160 = ssub.s32 %s9, 1
      %p161 = scmp.lt.s32.totalorder %s18, 3
      %s162 = scalar_select %p161, %s18, 3
      %p163 = scmp.lt.s32.totalorder %s19, 0
      %s164 = scalar_select %p163, %s19, 0
      %s165 = sadd.s32 %s164, %s162
      %s166 = smul.addr %s165, 4
      %s167 = scalar_lea.vmem %s0, %s166
      %p168 = pneg %p49
      %p169 = pneg %p46
      %p170 = pneg %p70
      %p171 = pneg %p67
      %p172 = pneg %p91
      %p173 = pneg %p88
      %p174 = pneg %p119
      %p175 = pneg %p116
      %p176 = scmp.lt.s32.totalorder %s18, 3
      %s177 = scalar_select %p176, %s18, 3
      %p178 = scmp.lt.s32.totalorder %s19, 0
      %s179 = scalar_select %p178, %s19, 0
      %s180 = sadd.s32 %s179, %s177
      %s181 = smul.addr %s180, 4
      %s182 = scalar_lea.vmem %s3, %s181
      %p183 = scmp.lt.s32.totalorder %s18, 3
      %s184 = scalar_select %p183, %s18, 3
      %p185 = scmp.lt.s32.totalorder %s19, 0
      %s186 = scalar_select %p185, %s19, 0
      %s187 = sadd.s32 %s186, %s184
      %s188 = smul.addr %s187, 4
      %s189 = scalar_lea.vmem %s0, %s188
      %p190 = scmp.lt.s32.totalorder %s18, 3
      %s191 = scalar_select %p190, %s18, 3
      %p192 = scmp.lt.s32.totalorder %s19, 0
      %s193 = scalar_select %p192, %s19, 0
      %s194 = sadd.s32 %s193, %s191
      %s195 = smul.addr %s194, 4
      %s196 = scalar_lea.vmem %s3, %s195
      %v197 = vld [vmem:[%s189] sm:$0xf]
      %v198 = vld [vmem:[%s1] sm:$0xf]
      %200 = vset.pattern.permute.xlu0 0
      %201 = vperm.xlu0 %200, %v198
      %v202 = vpop.permute.xlu0 %201
      %v204 = vmul.f32 %v197, %v202
      %v205 = vld [vmem:[%s2] sm:$0xf]
      %207 = vset.pattern.permute.xlu0 0
      %208 = vperm.xlu0 %207, %v205
      %v209 = vpop.permute.xlu0 %208
      %v211 = vadd.f32 %v204, %v209
      %212 = vst [vmem:[%s196] sm:$0xf] %v211
      %p213 = scmp.lt.s32.totalorder %s18, 3
      %s214 = scalar_select %p213, %s18, 3
      %p215 = scmp.lt.s32.totalorder %s19, 0
      %s216 = scalar_select %p215, %s19, 0
      %s217 = sadd.s32 %s216, %s214
      %s218 = smul.addr %s217, 4
      %s219 = scalar_lea.vmem %s3, %s218
      // Predicated region
      $region33: #{_lambda_.16} parent=31 // pred_check
        %p220 = pneg %p116
      $region34: #{_lambda_.16} parent=31 // pred_check_branch
        %222 = sbr.rel (%p220) target = $region36
      $region35: #{_lambda_.16} parent=31 // pred_region
        _
      $region36: #{_lambda_.16} parent=31 // pred_fallthru
        _
    $region32: #{_lambda_.16} parent=5 // pred_fallthru
      _
    %p223 = scmp.le.s32.totalorder 2, %s9
    // Predicated region
    $region37: #{_lambda_.16} parent=5 // pred_check
      %p224 = pneg %p223
    $region38: #{_lambda_.16} parent=5 // pred_check_branch
      %226 = sbr.rel (%p224) target = $region40
    $region39: #{_lambda_.16} parent=5 // pred_region
      %s227 = ssub.s32 %s9, 2
      // Predicated region
      $region41: #{_lambda_.16} parent=39 // pred_check
        %p228 = pneg %p122
      $region42: #{_lambda_.16} parent=39 // pred_check_branch
        %230 = sbr.rel (%p228) target = $region44
      $region43: #{_lambda_.16} parent=39 // pred_region
        %p231 = scmp.lt.s32.totalorder %s20, 3
        %s232 = scalar_select %p231, %s20, 3
        %p233 = scmp.lt.s32.totalorder %s21, 0
        %s234 = scalar_select %p233, %s21, 0
        %s235 = sadd.s32 %s234, %s232
        %s236 = smul.addr %s235, 4
        %s237 = scalar_lea.vmem %s3, %s236
      $region44: #{_lambda_.16} parent=39 // pred_fallthru
        _
    $region40: #{_lambda_.16} parent=5 // pred_fallthru
      _
  $region6: #{_lambda_.16} parent=0 // loop_footer
    %s13 = sadd.s32 1, %s9
  $region7: #{_lambda_.16} parent=0 // loop_footer_branch
    %8 = sbr.rel target = $region3
  $region8: #{_lambda_.16} parent=0 // loop_exit
    _

// kernel: _lambda_.15
$region0: #{_lambda_.15}
  #allocation0 [shape = 'u32[]', space=smem, size = 0x4, offset = 0x4, fixed_abs, tag = 'smem constant byte address 0x4 - core index']
  #allocation1 [shape = 'u32[144,128]{1,0:T(1,128)}', space=vmem, size = 0x12000, scoped, tag = 'internal scratch']
  %s0 = inlined_call_operand.vmem [shape: bf16[4,32,128], index: 0, kind: input, shape index: {}]
  %s1 = inlined_call_operand.vmem [shape: bf16[4,4,32], index: 1, kind: input, shape index: {}]
  %s2 = inlined_call_operand.vmem [shape: f32[4,1], index: 2, kind: input, shape index: {}]
  %s3 = inlined_call_operand.vmem [shape: f32[4,4,128], index: 3, kind: output, shape index: {0}]
  %s4 = inlined_call_operand.vmem [shape: f32[4,1,4,2], index: 4, kind: output, shape index: {1}]
  %5 = xla_tuple %s3, %s4
  %s6 = sld [smem:[#allocation0]]
  $region53: #{_lambda_.15} parent=0
    _
  %s8 = ssub.s32 1, %s6
  %s9 = scalar_select 0, %s8, %s6
  loop: start=0, step=1, limit=6
  $region2: #{_lambda_.15} parent=0 // loop_pre_header
    _
  $region3: #{_lambda_.15} parent=0 // loop_header
    %s11 = sphi 0, %s15
    %p12 = scmp.ge.s32.totalorder %s11, 6
    %s18 = sphi 0, %s30
    %s19 = sphi 0, %s26
    %s20 = sphi 0, %s18
    %s21 = sphi 0, %s19
    %s22 = sphi 0, %s20
    %s23 = sphi 0, %s21
    %s35 = sphi 0, %s37
    %s38 = sphi 0, %s35
    %s39 = sphi 0, %s38
    %s55 = sphi 0, %s39
    %s61 = sphi 0, %s63
    %s64 = sphi 0, %s61
    %s65 = sphi 0, %s64
    %s81 = sphi 0, %s65
    %s85 = sphi 0, %s85
    %s87 = sphi 0, %s85
    %s88 = sphi 0, %s87
    %s102 = sphi 0, %s88
    %s110 = sphi 0, %s112
    %s113 = sphi 0, %s110
    %s114 = sphi 0, %s113
    %s130 = sphi 0, %s114
    %s138 = sphi 0, %s140
    %s141 = sphi 0, %s138
    %s142 = sphi 0, %s141
    %s158 = sphi 0, %s142
  $region4: #{_lambda_.15} parent=0 // loop_header_branch
    %14 = sbr.rel (%p12) target = $region8
  $region5: #{_lambda_.15} parent=0 // loop_body
    %s16 = ssub.s32 %s11, 1
    %s17 = ssub.s32 %s11, 2
    %s24 = sadd.s32 1, %s19
    %p25 = scmp.ge.s32.totalorder %s24, 1
    %s26 = scalar_select %p25, 0, %s24
    %s27 = sadd.s32 1, %s18
    %s28 = scalar_select %p25, %s27, %s18
    %p29 = scmp.ge.s32.totalorder %s28, 4
    %s30 = scalar_select %p29, 0, %s28
    %s31 = ssub.s32 %s18, %s30
    %s32 = ssub.s32 %s19, %s26
    %s33 = sor.u32 %s31, %s32
    %p34 = scmp.eq.s32.totalorder %s33, 0
    %s36 = sadd.s32 %s35, 1
    %s37 = scalar_select %p34, %s35, %s36
    %p40 = pneg %p34
    %p41 = scmp.eq.s32.totalorder %s11, 3
    %p42 = por %p40, %p41
    %p43 = scmp.ne.s32.totalorder %s35, %s38
    %p44 = scmp.eq.s32.totalorder %s11, 0
    %p45 = por %p43, %p44
    %p46 = scmp.ne.s32.totalorder %s35, %s38
    %p47 = scmp.eq.s32.totalorder %s16, 3
    %p48 = por %p46, %p47
    %p49 = scmp.ne.s32.totalorder %s38, %s39
    %p50 = scmp.eq.s32.totalorder %s16, 0
    %p51 = por %p49, %p50
    %p52 = scmp.ne.s32.totalorder %s38, %s39
    %p53 = scmp.eq.s32.totalorder %s17, 3
    %p54 = por %p52, %p53
    %p56 = scmp.ne.s32.totalorder %s39, %s55
    %p57 = scmp.eq.s32.totalorder %s17, 0
    %p58 = por %p56, %p57
    %s59 = ssub.s32 %s18, %s30
    %p60 = scmp.eq.s32.totalorder %s59, 0
    %s62 = sadd.s32 %s61, 1
    %s63 = scalar_select %p60, %s61, %s62
    %p66 = pneg %p60
    %p67 = scmp.eq.s32.totalorder %s11, 3
    %p68 = por %p66, %p67
    %p69 = scmp.ne.s32.totalorder %s61, %s64
    %p70 = scmp.eq.s32.totalorder %s11, 0
    %p71 = por %p69, %p70
    %p72 = scmp.ne.s32.totalorder %s61, %s64
    %p73 = scmp.eq.s32.totalorder %s16, 3
    %p74 = por %p72, %p73
    %p75 = scmp.ne.s32.totalorder %s64, %s65
    %p76 = scmp.eq.s32.totalorder %s16, 0
    %p77 = por %p75, %p76
    %p78 = scmp.ne.s32.totalorder %s64, %s65
    %p79 = scmp.eq.s32.totalorder %s17, 3
    %p80 = por %p78, %p79
    %p82 = scmp.ne.s32.totalorder %s65, %s81
    %p83 = scmp.eq.s32.totalorder %s17, 0
    %p84 = por %p82, %p83
    %s86 = sadd.s32 %s85, 1
    %p89 = scmp.eq.s32.totalorder %s11, 3
    %p90 = scmp.ne.s32.totalorder %s85, %s87
    %p91 = scmp.eq.s32.totalorder %s11, 0
    %p92 = por %p90, %p91
    %p93 = scmp.ne.s32.totalorder %s85, %s87
    %p94 = scmp.eq.s32.totalorder %s16, 3
    %p95 = por %p93, %p94
    %p96 = scmp.ne.s32.totalorder %s87, %s88
    %p97 = scmp.eq.s32.totalorder %s16, 0
    %p98 = por %p96, %p97
    %p99 = scmp.ne.s32.totalorder %s87, %s88
    %p100 = scmp.eq.s32.totalorder %s17, 3
    %p101 = por %p99, %p100
    %p103 = scmp.ne.s32.totalorder %s88, %s102
    %p104 = scmp.eq.s32.totalorder %s17, 0
    %p105 = por %p103, %p104
    %s106 = ssub.s32 %s18, %s30
    %s107 = ssub.s32 %s19, %s26
    %s108 = sor.u32 %s106, %s107
    %p109 = scmp.eq.s32.totalorder %s108, 0
    %s111 = sadd.s32 %s110, 1
    %s112 = scalar_select %p109, %s110, %s111
    %p115 = pneg %p109
    %p116 = scmp.eq.s32.totalorder %s11, 3
    %p117 = por %p115, %p116
    %p118 = scmp.ne.s32.totalorder %s110, %s113
    %p119 = scmp.eq.s32.totalorder %s11, 0
    %p120 = por %p118, %p119
    %p121 = scmp.ne.s32.totalorder %s110, %s113
    %p122 = scmp.eq.s32.totalorder %s16, 3
    %p123 = por %p121, %p122
    %p124 = scmp.ne.s32.totalorder %s113, %s114
    %p125 = scmp.eq.s32.totalorder %s16, 0
    %p126 = por %p124, %p125
    %p127 = scmp.ne.s32.totalorder %s113, %s114
    %p128 = scmp.eq.s32.totalorder %s17, 3
    %p129 = por %p127, %p128
    %p131 = scmp.ne.s32.totalorder %s114, %s130
    %p132 = scmp.eq.s32.totalorder %s17, 0
    %p133 = por %p131, %p132
    %s134 = ssub.s32 %s18, %s30
    %s135 = ssub.s32 %s19, %s26
    %s136 = sor.u32 %s134, %s135
    %p137 = scmp.eq.s32.totalorder %s136, 0
    %s139 = sadd.s32 %s138, 1
    %s140 = scalar_select %p137, %s138, %s139
    %p143 = pneg %p137
    %p144 = scmp.eq.s32.totalorder %s11, 3
    %p145 = por %p143, %p144
    %p146 = scmp.ne.s32.totalorder %s138, %s141
    %p147 = scmp.eq.s32.totalorder %s11, 0
    %p148 = por %p146, %p147
    %p149 = scmp.ne.s32.totalorder %s138, %s141
    %p150 = scmp.eq.s32.totalorder %s16, 3
    %p151 = por %p149, %p150
    %p152 = scmp.ne.s32.totalorder %s141, %s142
    %p153 = scmp.eq.s32.totalorder %s16, 0
    %p154 = por %p152, %p153
    %p155 = scmp.ne.s32.totalorder %s141, %s142
    %p156 = scmp.eq.s32.totalorder %s17, 3
    %p157 = por %p155, %p156
    %p159 = scmp.ne.s32.totalorder %s142, %s158
    %p160 = scmp.eq.s32.totalorder %s17, 0
    %p161 = por %p159, %p160
    %p162 = scmp.le.s32.totalorder 1, %s11
    %p163 = scmp.lt.s32.totalorder %s11, 5
    %p164 = pnand %p162, %p163
    %p165 = pneg %p164
    // Predicated region
    $region9: #{_lambda_.15} parent=5 // pred_check
      _
    $region10: #{_lambda_.15} parent=5 // pred_check_branch
      %167 = sbr.rel (%p164) target = $region12
    $region11: #{_lambda_.15} parent=5 // pred_region
      %s168 = ssub.s32 %s11, 1
      // Predicated region
      $region13: #{_lambda_.15} parent=11 // pred_check
        %p169 = pneg %p98
      $region14: #{_lambda_.15} parent=11 // pred_check_branch
        %171 = sbr.rel (%p169) target = $region16
      $region15: #{_lambda_.15} parent=11 // pred_region
        _
      $region16: #{_lambda_.15} parent=11 // pred_fallthru
        _
    $region12: #{_lambda_.15} parent=5 // pred_fallthru
      _
    %p172 = scmp.lt.s32.totalorder %s11, 4
    // Predicated region
    $region17: #{_lambda_.15} parent=5 // pred_check
      %p173 = pneg %p172
    $region18: #{_lambda_.15} parent=5 // pred_check_branch
      %175 = sbr.rel (%p173) target = $region20
    $region19: #{_lambda_.15} parent=5 // pred_region
      // Predicated region
      $region21: #{_lambda_.15} parent=19 // pred_check
        %p176 = pneg %p45
      $region22: #{_lambda_.15} parent=19 // pred_check_branch
        %178 = sbr.rel (%p176) target = $region24
      $region23: #{_lambda_.15} parent=19 // pred_region
        %p179 = scmp.lt.s32.totalorder %s18, 3
        %s180 = scalar_select %p179, %s18, 3
        %p181 = scmp.lt.s32.totalorder %s19, 0
        %s182 = scalar_select %p181, %s19, 0
        %s183 = smul.addr %s180, 4
        %s184 = sadd.s32 %s182, %s183
        %s185 = smul.addr %s184, 4
        %s186 = scalar_lea.vmem %s0, %s185
      $region24: #{_lambda_.15} parent=19 // pred_fallthru
        _
      // Predicated region
      $region25: #{_lambda_.15} parent=19 // pred_check
        %p187 = pneg %p71
      $region26: #{_lambda_.15} parent=19 // pred_check_branch
        %189 = sbr.rel (%p187) target = $region28
      $region27: #{_lambda_.15} parent=19 // pred_region
        %p190 = scmp.lt.s32.totalorder %s18, 3
        %s191 = scalar_select %p190, %s18, 3
        %s192 = smul.addr %s191, 2
        %s193 = scalar_lea.vmem %s1, %s192
      $region28: #{_lambda_.15} parent=19 // pred_fallthru
        _
    $region20: #{_lambda_.15} parent=5 // pred_fallthru
      _
    %p194 = scmp.le.s32.totalorder 1, %s11
    %p195 = scmp.lt.s32.totalorder %s11, 5
    %p196 = pnand %p194, %p195
    %p197 = pneg %p196
    // Predicated region
    $region29: #{_lambda_.15} parent=5 // pred_check
      _
    $region30: #{_lambda_.15} parent=5 // pred_check_branch
      %199 = sbr.rel (%p196) target = $region32
    $region31: #{_lambda_.15} parent=5 // pred_region
      %s200 = ssub.s32 %s11, 1
      %p201 = scmp.lt.s32.totalorder %s20, 3
      %s202 = scalar_select %p201, %s20, 3
      %p203 = scmp.lt.s32.totalorder %s21, 0
      %s204 = scalar_select %p203, %s21, 0
      %s205 = smul.addr %s202, 4
      %s206 = sadd.s32 %s204, %s205
      %s207 = smul.addr %s206, 4
      %s208 = scalar_lea.vmem %s0, %s207
      %p209 = pneg %p51
      %p210 = pneg %p48
      %p211 = scmp.lt.s32.totalorder %s20, 3
      %s212 = scalar_select %p211, %s20, 3
      %s213 = smul.addr %s212, 2
      %s214 = scalar_lea.vmem %s1, %s213
      %p215 = pneg %p77
      %p216 = pneg %p74
      %p217 = pneg %p98
      %p218 = pneg %p95
      %p219 = pneg %p126
      %p220 = pneg %p123
      %p221 = scmp.lt.s32.totalorder %s20, 3
      %s222 = scalar_select %p221, %s20, 3
      %p223 = scmp.lt.s32.totalorder %s21, 0
      %s224 = scalar_select %p223, %s21, 0
      %s225 = sadd.s32 %s224, %s222
      %s226 = smul.addr %s225, 4
      %s227 = scalar_lea.vmem %s3, %s226
      %p228 = pneg %p154
      %p229 = pneg %p151
      %p230 = scmp.lt.s32.totalorder %s20, 3
      %s231 = scalar_select %p230, %s20, 3
      %p232 = scmp.lt.s32.totalorder %s21, 0
      %s233 = scalar_select %p232, %s21, 0
      %s234 = sadd.s32 %s233, %s231
      %s235 = smul.addr %s234, 4
      %s236 = scalar_lea.vmem %s4, %s235
      %p237 = scmp.lt.s32.totalorder %s20, 3
      %s238 = scalar_select %p237, %s20, 3
      %p239 = scmp.lt.s32.totalorder %s21, 0
      %s240 = scalar_select %p239, %s21, 0
      %s241 = smul.addr %s238, 4
      %s242 = sadd.s32 %s240, %s241
      %s243 = smul.addr %s242, 4
      %s244 = scalar_lea.vmem %s0, %s243
      %p245 = scmp.lt.s32.totalorder %s20, 3
      %s246 = scalar_select %p245, %s20, 3
      %s247 = smul.addr %s246, 2
      %s248 = scalar_lea.vmem %s1, %s247
      %p249 = scmp.lt.s32.totalorder %s20, 3
      %s250 = scalar_select %p249, %s20, 3
      %p251 = scmp.lt.s32.totalorder %s21, 0
      %s252 = scalar_select %p251, %s21, 0
      %s253 = sadd.s32 %s252, %s250
      %s254 = smul.addr %s253, 4
      %s255 = scalar_lea.vmem %s3, %s254
      %p256 = scmp.lt.s32.totalorder %s20, 3
      %s257 = scalar_select %p256, %s20, 3
      %p258 = scmp.lt.s32.totalorder %s21, 0
      %s259 = scalar_select %p258, %s21, 0
      %s260 = sadd.s32 %s259, %s257
      %s261 = smul.addr %s260, 4
      %s262 = scalar_lea.vmem %s4, %s261
      %v264 = vld [vmem:[%s248] sm:$0x3]
      %v265 = vld [vmem:[%s244] sm:$0xf]
      %v266 = vld [vmem:[%s244 + $0x4] sm:$0xf]
      %v267 = vld [vmem:[%s244 + $0x8] sm:$0xf]
      %v268 = vld [vmem:[%s244 + $0xc] sm:$0xf]
      %v269 = vld [vmem:[%s2] sm:$0xf]
      %271 = vset.pattern.permute.xlu0 0
      %272 = vperm.xlu0 %271, %v269
      %v273 = vpop.permute.xlu0 %272
      %v279 = vunpack.c.l.b16 %v265
      %v280 = vunpack.c.l.b16 %v266
      %v281 = vunpack.c.l.b16 %v267
      %v282 = vunpack.c.l.b16 %v268
      %v283 = vpack.c.b16 %v280, %v279
      %v284 = vpack.c.b16 %v282, %v281
      %vm287 = vcmask 261120
      %v289 = vsel %vm287, %v264, 0
      %291 = vmatprep.subr.bf16.mxu0 0
      %292 = vmatpush1.bf16.msra.mxu0 %v283
      %293 = vmatprep.subr.bf16.mxu0 0
      %294 = vmatpush1.bf16.msra.mxu0 %v284
      %295 = vmatprep.subr.bf16.mxu0 0
      %296 = vmatpush1.bf16.msra.mxu0 0
      %297 = vmatprep.subr.bf16.mxu0 0
      %298 = vmatpush1.bf16.msra.mxu0 0
      %299 = vmatprep.subr.bf16.mxu0 0
      %300 = vmatpush1.bf16.msra.mxu0 0
      %301 = vmatprep.subr.bf16.mxu0 0
      %302 = vmatpush1.bf16.msra.mxu0 0
      %303 = vmatprep.subr.bf16.mxu0 0
      %304 = vmatpush1.bf16.msra.mxu0 0
      %305 = vmatprep.subr.bf16.mxu0 0
      %306 = vmatpush1.bf16.msra.mxu0 0
      %307 = vmatprep.subr.bf16.mxu0 0
      %308 = vmatpush1.bf16.msra.mxu0 0
      %309 = vmatprep.subr.bf16.mxu0 0
      %310 = vmatpush1.bf16.msra.mxu0 0
      %311 = vmatprep.subr.bf16.mxu0 0
      %312 = vmatpush1.bf16.msra.mxu0 0
      %313 = vmatprep.subr.bf16.mxu0 0
      %314 = vmatpush1.bf16.msra.mxu0 0
      %315 = vmatprep.subr.bf16.mxu0 0
      %316 = vmatpush1.bf16.msra.mxu0 0
      %317 = vmatprep.subr.bf16.mxu0 0
      %318 = vmatpush1.bf16.msra.mxu0 0
      %319 = vmatprep.subr.bf16.mxu0 0
      %320 = vmatpush1.bf16.msra.mxu0 0
      %321 = vmatprep.subr.bf16.mxu0 0
      %322 = vmatpush1.bf16.msra.mxu0 0
      %323 = vmatprep.mubr.bf16.mxu0 0
      %324 = vmatmul.mubr.bf16.gmra.mrb[0].mxu0 %v289
      %v325 = vpop.f32.mrb[0].mxu0
      %v326 = vadd.f32 %v273, %v325
      %v327 = vpop.f32.mrb[0].mxu0
      %v328 = vpop.f32.mrb[0].mxu0
      %v329 = vpop.f32.mrb[0].mxu0
      %330 = vdwg.mxu0
      %331 = vst [vmem:[%s255] sm:$0xf] %v326
      %vm332 = vcmask 1043456
      %v333 = vsel %vm332, %v326, 0.0
      %334 = vadd.xlane.f32.xlu0 %v333
      %v335 = vpop.xlane.xlu0 %334
      %vm336 = vcmask 3072
      %337 = vst.msk [vmem:[%s262] sm:$0xf] %vm336, %v335
      %v338 = vmul.f32 %v326, %v326
      %v339 = vsel %vm332, %v338, 0.0
      %340 = vadd.xlane.f32.xlu0 %v339
      %v341 = vpop.xlane.xlu0 %340
      %vm342 = vcmask 11272
      %343 = vst.msk [vmem:[%s262] sm:$0xf] %vm342, %v341
      %p344 = scmp.lt.s32.totalorder %s20, 3
      %s345 = scalar_select %p344, %s20, 3
      %p346 = scmp.lt.s32.totalorder %s21, 0
      %s347 = scalar_select %p346, %s21, 0
      %s348 = sadd.s32 %s347, %s345
      %s349 = smul.addr %s348, 4
      %s350 = scalar_lea.vmem %s3, %s349
      %p351 = scmp.lt.s32.totalorder %s20, 3
      %s352 = scalar_select %p351, %s20, 3
      %p353 = scmp.lt.s32.totalorder %s21, 0
      %s354 = scalar_select %p353, %s21, 0
      %s355 = sadd.s32 %s354, %s352
      %s356 = smul.addr %s355, 4
      %s357 = scalar_lea.vmem %s4, %s356
      // Predicated region
      $region33: #{_lambda_.15} parent=31 // pred_check
        %p358 = pneg %p123
      $region34: #{_lambda_.15} parent=31 // pred_check_branch
        %360 = sbr.rel (%p358) target = $region36
      $region35: #{_lambda_.15} parent=31 // pred_region
        _
      $region36: #{_lambda_.15} parent=31 // pred_fallthru
        _
      // Predicated region
      $region37: #{_lambda_.15} parent=31 // pred_check
        %p361 = pneg %p151
      $region38: #{_lambda_.15} parent=31 // pred_check_branch
        %363 = sbr.rel (%p361) target = $region40
      $region39: #{_lambda_.15} parent=31 // pred_region
        _
      $region40: #{_lambda_.15} parent=31 // pred_fallthru
        _
    $region32: #{_lambda_.15} parent=5 // pred_fallthru
      _
    %p364 = scmp.le.s32.totalorder 2, %s11
    // Predicated region
    $region41: #{_lambda_.15} parent=5 // pred_check
      %p365 = pneg %p364
    $region42: #{_lambda_.15} parent=5 // pred_check_branch
      %367 = sbr.rel (%p365) target = $region44
    $region43: #{_lambda_.15} parent=5 // pred_region
      %s368 = ssub.s32 %s11, 2
      // Predicated region
      $region45: #{_lambda_.15} parent=43 // pred_check
        %p369 = pneg %p129
      $region46: #{_lambda_.15} parent=43 // pred_check_branch
        %371 = sbr.rel (%p369) target = $region48
      $region47: #{_lambda_.15} parent=43 // pred_region
        %p372 = scmp.lt.s32.totalorder %s22, 3
        %s373 = scalar_select %p372, %s22, 3
        %p374 = scmp.lt.s32.totalorder %s23, 0
        %s375 = scalar_select %p374, %s23, 0
        %s376 = sadd.s32 %s375, %s373
        %s377 = smul.addr %s376, 4
        %s378 = scalar_lea.vmem %s3, %s377
      $region48: #{_lambda_.15} parent=43 // pred_fallthru
        _
      // Predicated region
      $region49: #{_lambda_.15} parent=43 // pred_check
        %p379 = pneg %p157
      $region50: #{_lambda_.15} parent=43 // pred_check_branch
        %381 = sbr.rel (%p379) target = $region52
      $region51: #{_lambda_.15} parent=43 // pred_region
        %p382 = scmp.lt.s32.totalorder %s22, 3
        %s383 = scalar_select %p382, %s22, 3
        %p384 = scmp.lt.s32.totalorder %s23, 0
        %s385 = scalar_select %p384, %s23, 0
        %s386 = sadd.s32 %s385, %s383
        %s387 = smul.addr %s386, 4
        %s388 = scalar_lea.vmem %s4, %s387
      $region52: #{_lambda_.15} parent=43 // pred_fallthru
        _
    $region44: #{_lambda_.15} parent=5 // pred_fallthru
      _
  $region6: #{_lambda_.15} parent=0 // loop_footer
    %s15 = sadd.s32 1, %s11
  $region7: #{_lambda_.15} parent=0 // loop_footer_branch
    %10 = sbr.rel target = $region3
  $region8: #{_lambda_.15} parent=0 // loop_exit
    _

// kernel: _lambda_.18
$region0: #{_lambda_.18}
  #allocation0 [shape = 'u32[]', space=smem, size = 0x4, offset = 0x4, fixed_abs, tag = 'smem constant byte address 0x4 - core index']
  #allocation1 [shape = 'u32[144,128]{1,0:T(1,128)}', space=vmem, size = 0x12000, scoped, tag = 'internal scratch']
  %s0 = inlined_call_operand.vmem [shape: f32[4,4,512], index: 0, kind: input, shape index: {}]
  %s1 = inlined_call_operand.vmem [shape: f32[4,1], index: 1, kind: input, shape index: {}]
  %s2 = inlined_call_operand.vmem [shape: f32[4,1], index: 2, kind: input, shape index: {}]
  %s3 = inlined_call_operand.vmem [shape: f32[4,4,512], index: 3, kind: output, shape index: {}]
  %s4 = sld [smem:[#allocation0]]
  $region45: #{_lambda_.18} parent=0
    _
  %s6 = ssub.s32 1, %s4
  %s7 = scalar_select 0, %s6, %s4
  loop: start=0, step=1, limit=6
  $region2: #{_lambda_.18} parent=0 // loop_pre_header
    _
  $region3: #{_lambda_.18} parent=0 // loop_header
    %s9 = sphi 0, %s13
    %p10 = scmp.ge.s32.totalorder %s9, 6
    %s16 = sphi 0, %s28
    %s17 = sphi 0, %s24
    %s18 = sphi 0, %s16
    %s19 = sphi 0, %s17
    %s20 = sphi 0, %s18
    %s21 = sphi 0, %s19
    %s33 = sphi 0, %s35
    %s36 = sphi 0, %s33
    %s37 = sphi 0, %s36
    %s53 = sphi 0, %s37
    %s57 = sphi 0, %s57
    %s59 = sphi 0, %s57
    %s60 = sphi 0, %s59
    %s74 = sphi 0, %s60
    %s78 = sphi 0, %s78
    %s80 = sphi 0, %s78
    %s81 = sphi 0, %s80
    %s95 = sphi 0, %s81
    %s103 = sphi 0, %s105
    %s106 = sphi 0, %s103
    %s107 = sphi 0, %s106
    %s123 = sphi 0, %s107
  $region4: #{_lambda_.18} parent=0 // loop_header_branch
    %12 = sbr.rel (%p10) target = $region8
  $region5: #{_lambda_.18} parent=0 // loop_body
    %s14 = ssub.s32 %s9, 1
    %s15 = ssub.s32 %s9, 2
    %s22 = sadd.s32 1, %s17
    %p23 = scmp.ge.s32.totalorder %s22, 1
    %s24 = scalar_select %p23, 0, %s22
    %s25 = sadd.s32 1, %s16
    %s26 = scalar_select %p23, %s25, %s16
    %p27 = scmp.ge.s32.totalorder %s26, 4
    %s28 = scalar_select %p27, 0, %s26
    %s29 = ssub.s32 %s16, %s28
    %s30 = ssub.s32 %s17, %s24
    %s31 = sor.u32 %s29, %s30
    %p32 = scmp.eq.s32.totalorder %s31, 0
    %s34 = sadd.s32 %s33, 1
    %s35 = scalar_select %p32, %s33, %s34
    %p38 = pneg %p32
    %p39 = scmp.eq.s32.totalorder %s9, 3
    %p40 = por %p38, %p39
    %p41 = scmp.ne.s32.totalorder %s33, %s36
    %p42 = scmp.eq.s32.totalorder %s9, 0
    %p43 = por %p41, %p42
    %p44 = scmp.ne.s32.totalorder %s33, %s36
    %p45 = scmp.eq.s32.totalorder %s14, 3
    %p46 = por %p44, %p45
    %p47 = scmp.ne.s32.totalorder %s36, %s37
    %p48 = scmp.eq.s32.totalorder %s14, 0
    %p49 = por %p47, %p48
    %p50 = scmp.ne.s32.totalorder %s36, %s37
    %p51 = scmp.eq.s32.totalorder %s15, 3
    %p52 = por %p50, %p51
    %p54 = scmp.ne.s32.totalorder %s37, %s53
    %p55 = scmp.eq.s32.totalorder %s15, 0
    %p56 = por %p54, %p55
    %s58 = sadd.s32 %s57, 1
    %p61 = scmp.eq.s32.totalorder %s9, 3
    %p62 = scmp.ne.s32.totalorder %s57, %s59
    %p63 = scmp.eq.s32.totalorder %s9, 0
    %p64 = por %p62, %p63
    %p65 = scmp.ne.s32.totalorder %s57, %s59
    %p66 = scmp.eq.s32.totalorder %s14, 3
    %p67 = por %p65, %p66
    %p68 = scmp.ne.s32.totalorder %s59, %s60
    %p69 = scmp.eq.s32.totalorder %s14, 0
    %p70 = por %p68, %p69
    %p71 = scmp.ne.s32.totalorder %s59, %s60
    %p72 = scmp.eq.s32.totalorder %s15, 3
    %p73 = por %p71, %p72
    %p75 = scmp.ne.s32.totalorder %s60, %s74
    %p76 = scmp.eq.s32.totalorder %s15, 0
    %p77 = por %p75, %p76
    %s79 = sadd.s32 %s78, 1
    %p82 = scmp.eq.s32.totalorder %s9, 3
    %p83 = scmp.ne.s32.totalorder %s78, %s80
    %p84 = scmp.eq.s32.totalorder %s9, 0
    %p85 = por %p83, %p84
    %p86 = scmp.ne.s32.totalorder %s78, %s80
    %p87 = scmp.eq.s32.totalorder %s14, 3
    %p88 = por %p86, %p87
    %p89 = scmp.ne.s32.totalorder %s80, %s81
    %p90 = scmp.eq.s32.totalorder %s14, 0
    %p91 = por %p89, %p90
    %p92 = scmp.ne.s32.totalorder %s80, %s81
    %p93 = scmp.eq.s32.totalorder %s15, 3
    %p94 = por %p92, %p93
    %p96 = scmp.ne.s32.totalorder %s81, %s95
    %p97 = scmp.eq.s32.totalorder %s15, 0
    %p98 = por %p96, %p97
    %s99 = ssub.s32 %s16, %s28
    %s100 = ssub.s32 %s17, %s24
    %s101 = sor.u32 %s99, %s100
    %p102 = scmp.eq.s32.totalorder %s101, 0
    %s104 = sadd.s32 %s103, 1
    %s105 = scalar_select %p102, %s103, %s104
    %p108 = pneg %p102
    %p109 = scmp.eq.s32.totalorder %s9, 3
    %p110 = por %p108, %p109
    %p111 = scmp.ne.s32.totalorder %s103, %s106
    %p112 = scmp.eq.s32.totalorder %s9, 0
    %p113 = por %p111, %p112
    %p114 = scmp.ne.s32.totalorder %s103, %s106
    %p115 = scmp.eq.s32.totalorder %s14, 3
    %p116 = por %p114, %p115
    %p117 = scmp.ne.s32.totalorder %s106, %s107
    %p118 = scmp.eq.s32.totalorder %s14, 0
    %p119 = por %p117, %p118
    %p120 = scmp.ne.s32.totalorder %s106, %s107
    %p121 = scmp.eq.s32.totalorder %s15, 3
    %p122 = por %p120, %p121
    %p124 = scmp.ne.s32.totalorder %s107, %s123
    %p125 = scmp.eq.s32.totalorder %s15, 0
    %p126 = por %p124, %p125
    %p127 = scmp.le.s32.totalorder 1, %s9
    %p128 = scmp.lt.s32.totalorder %s9, 5
    %p129 = pnand %p127, %p128
    %p130 = pneg %p129
    // Predicated region
    $region9: #{_lambda_.18} parent=5 // pred_check
      _
    $region10: #{_lambda_.18} parent=5 // pred_check_branch
      %132 = sbr.rel (%p129) target = $region12
    $region11: #{_lambda_.18} parent=5 // pred_region
      %s133 = ssub.s32 %s9, 1
      // Predicated region
      $region13: #{_lambda_.18} parent=11 // pred_check
        %p134 = pneg %p70
      $region14: #{_lambda_.18} parent=11 // pred_check_branch
        %136 = sbr.rel (%p134) target = $region16
      $region15: #{_lambda_.18} parent=11 // pred_region
        _
      $region16: #{_lambda_.18} parent=11 // pred_fallthru
        _
      // Predicated region
      $region17: #{_lambda_.18} parent=11 // pred_check
        %p137 = pneg %p91
      $region18: #{_lambda_.18} parent=11 // pred_check_branch
        %139 = sbr.rel (%p137) target = $region20
      $region19: #{_lambda_.18} parent=11 // pred_region
        _
      $region20: #{_lambda_.18} parent=11 // pred_fallthru
        _
    $region12: #{_lambda_.18} parent=5 // pred_fallthru
      _
    %p140 = scmp.lt.s32.totalorder %s9, 4
    // Predicated region
    $region21: #{_lambda_.18} parent=5 // pred_check
      %p141 = pneg %p140
    $region22: #{_lambda_.18} parent=5 // pred_check_branch
      %143 = sbr.rel (%p141) target = $region24
    $region23: #{_lambda_.18} parent=5 // pred_region
      // Predicated region
      $region25: #{_lambda_.18} parent=23 // pred_check
        %p144 = pneg %p43
      $region26: #{_lambda_.18} parent=23 // pred_check_branch
        %146 = sbr.rel (%p144) target = $region28
      $region27: #{_lambda_.18} parent=23 // pred_region
        %s147 = smul.u32 4, %s17
        %p148 = scmp.lt.s32.totalorder %s16, 3
        %s149 = scalar_select %p148, %s16, 3
        %p150 = scmp.lt.s32.totalorder %s147, 3
        %s151 = scalar_select %p150, %s147, 3
        %s152 = smul.addr %s149, 4
        %s153 = sadd.s32 %s151, %s152
        %s154 = smul.addr %s153, 4
        %s155 = scalar_lea.vmem %s0, %s154
        %s156 = smul.u32 4, %s17
      $region28: #{_lambda_.18} parent=23 // pred_fallthru
        _
    $region24: #{_lambda_.18} parent=5 // pred_fallthru
      _
    %p157 = scmp.le.s32.totalorder 1, %s9
    %p158 = scmp.lt.s32.totalorder %s9, 5
    %p159 = pnand %p157, %p158
    %p160 = pneg %p159
    // Predicated region
    $region29: #{_lambda_.18} parent=5 // pred_check
      _
    $region30: #{_lambda_.18} parent=5 // pred_check_branch
      %162 = sbr.rel (%p159) target = $region32
    $region31: #{_lambda_.18} parent=5 // pred_region
      %s163 = ssub.s32 %s9, 1
      %s164 = smul.u32 4, %s19
      %p165 = scmp.lt.s32.totalorder %s18, 3
      %s166 = scalar_select %p165, %s18, 3
      %p167 = scmp.lt.s32.totalorder %s164, 3
      %s168 = scalar_select %p167, %s164, 3
      %s169 = smul.addr %s166, 4
      %s170 = sadd.s32 %s168, %s169
      %s171 = smul.addr %s170, 4
      %s172 = scalar_lea.vmem %s0, %s171
      %p173 = pneg %p49
      %p174 = pneg %p46
      %p175 = pneg %p70
      %p176 = pneg %p67
      %p177 = pneg %p91
      %p178 = pneg %p88
      %p179 = pneg %p119
      %p180 = pneg %p116
      %s181 = smul.u32 4, %s19
      %p182 = scmp.lt.s32.totalorder %s18, 3
      %s183 = scalar_select %p182, %s18, 3
      %p184 = scmp.lt.s32.totalorder %s181, 3
      %s185 = scalar_select %p184, %s181, 3
      %s186 = smul.addr %s183, 4
      %s187 = sadd.s32 %s185, %s186
      %s188 = smul.addr %s187, 4
      %s189 = scalar_lea.vmem %s3, %s188
      %s190 = smul.u32 4, %s19
      %p191 = scmp.lt.s32.totalorder %s18, 3
      %s192 = scalar_select %p191, %s18, 3
      %p193 = scmp.lt.s32.totalorder %s190, 3
      %s194 = scalar_select %p193, %s190, 3
      %s195 = smul.addr %s192, 4
      %s196 = sadd.s32 %s194, %s195
      %s197 = smul.addr %s196, 4
      %s198 = scalar_lea.vmem %s0, %s197
      %s199 = smul.u32 4, %s19
      %s200 = smul.u32 4, %s19
      %p201 = scmp.lt.s32.totalorder %s18, 3
      %s202 = scalar_select %p201, %s18, 3
      %p203 = scmp.lt.s32.totalorder %s200, 3
      %s204 = scalar_select %p203, %s200, 3
      %s205 = smul.addr %s202, 4
      %s206 = sadd.s32 %s204, %s205
      %s207 = smul.addr %s206, 4
      %s208 = scalar_lea.vmem %s3, %s207
      %s209 = smul.u32 4, %s19
      %v210 = vld [vmem:[%s198] sm:$0xff]
      %v211 = vld [vmem:[%s198 + $0x8] sm:$0xff]
      %v212 = vld [vmem:[%s1] sm:$0xf]
      %214 = vset.pattern.permute.xlu0 0
      %215 = vperm.xlu0 %214, %v212
      %v216 = vpop.permute.xlu0 %215
      %v218 = vunpack.c.l.s4 839922192
      %v219 = vunpack.c.0.s8 %v218
      %v220 = vlaneseq
      %v221 = vshrl.u32 %v220, 7
      %v222 = vsub.s32 %v219, %v221
      %v223 = vrot.slane %v216, %v222
      %v225 = vmul.f32 %v210, %v223
      %v226 = vmul.f32 %v211, %v223
      %v227 = vld [vmem:[%s2] sm:$0xf]
      %229 = vset.pattern.permute.xlu0 0
      %230 = vperm.xlu0 %229, %v227
      %v231 = vpop.permute.xlu0 %230
      %v233 = vunpack.c.l.s4 839922192
      %v234 = vunpack.c.0.s8 %v233
      %v235 = vlaneseq
      %v236 = vshrl.u32 %v235, 7
      %v237 = vsub.s32 %v234, %v236
      %v238 = vrot.slane %v231, %v237
      %v240 = vadd.f32 %v225, %v238
      %v241 = vadd.f32 %v226, %v238
      %242 = vst [vmem:[%s208] sm:$0xff] %v240
      %243 = vst [vmem:[%s208 + $0x8] sm:$0xff] %v241
      %s244 = smul.u32 4, %s19
      %p245 = scmp.lt.s32.totalorder %s18, 3
      %s246 = scalar_select %p245, %s18, 3
      %p247 = scmp.lt.s32.totalorder %s244, 3
      %s248 = scalar_select %p247, %s244, 3
      %s249 = smul.addr %s246, 4
      %s250 = sadd.s32 %s248, %s249
      %s251 = smul.addr %s250, 4
      %s252 = scalar_lea.vmem %s3, %s251
      // Predicated region
      $region33: #{_lambda_.18} parent=31 // pred_check
        %p253 = pneg %p116
      $region34: #{_lambda_.18} parent=31 // pred_check_branch
        %255 = sbr.rel (%p253) target = $region36
      $region35: #{_lambda_.18} parent=31 // pred_region
        %s256 = smul.u32 4, %s19
      $region36: #{_lambda_.18} parent=31 // pred_fallthru
        _
    $region32: #{_lambda_.18} parent=5 // pred_fallthru
      _
    %p257 = scmp.le.s32.totalorder 2, %s9
    // Predicated region
    $region37: #{_lambda_.18} parent=5 // pred_check
      %p258 = pneg %p257
    $region38: #{_lambda_.18} parent=5 // pred_check_branch
      %260 = sbr.rel (%p258) target = $region40
    $region39: #{_lambda_.18} parent=5 // pred_region
      %s261 = ssub.s32 %s9, 2
      // Predicated region
      $region41: #{_lambda_.18} parent=39 // pred_check
        %p262 = pneg %p122
      $region42: #{_lambda_.18} parent=39 // pred_check_branch
        %264 = sbr.rel (%p262) target = $region44
      $region43: #{_lambda_.18} parent=39 // pred_region
        %s265 = smul.u32 4, %s21
        %p266 = scmp.lt.s32.totalorder %s20, 3
        %s267 = scalar_select %p266, %s20, 3
        %p268 = scmp.lt.s32.totalorder %s265, 3
        %s269 = scalar_select %p268, %s265, 3
        %s270 = smul.addr %s267, 4
        %s271 = sadd.s32 %s269, %s270
        %s272 = smul.addr %s271, 4
        %s273 = scalar_lea.vmem %s3, %s272
      $region44: #{_lambda_.18} parent=39 // pred_fallthru
        _
    $region40: #{_lambda_.18} parent=5 // pred_fallthru
      _
  $region6: #{_lambda_.18} parent=0 // loop_footer
    %s13 = sadd.s32 1, %s9
  $region7: #{_lambda_.18} parent=0 // loop_footer_branch
    %8 = sbr.rel target = $region3
  $region8: #{_lambda_.18} parent=0 // loop_exit
    _

// kernel: _lambda_.17
$region0: #{_lambda_.17}
  #allocation0 [shape = 'u32[]', space=smem, size = 0x4, offset = 0x4, fixed_abs, tag = 'smem constant byte address 0x4 - core index']
  #allocation1 [shape = 'u32[144,128]{1,0:T(1,128)}', space=vmem, size = 0x12000, scoped, tag = 'internal scratch']
  %s0 = inlined_call_operand.vmem [shape: bf16[4,16,512], index: 0, kind: input, shape index: {}]
  %s1 = inlined_call_operand.vmem [shape: bf16[4,4,16], index: 1, kind: input, shape index: {}]
  %s2 = inlined_call_operand.vmem [shape: f32[4,1], index: 2, kind: input, shape index: {}]
  %s3 = inlined_call_operand.vmem [shape: f32[4,4,512], index: 3, kind: output, shape index: {0}]
  %s4 = inlined_call_operand.vmem [shape: f32[4,1,4,2], index: 4, kind: output, shape index: {1}]
  %5 = xla_tuple %s3, %s4
  %s6 = sld [smem:[#allocation0]]
  $region53: #{_lambda_.17} parent=0
    _
  %s8 = ssub.s32 1, %s6
  %s9 = scalar_select 0, %s8, %s6
  loop: start=0, step=1, limit=6
  $region2: #{_lambda_.17} parent=0 // loop_pre_header
    _
  $region3: #{_lambda_.17} parent=0 // loop_header
    %s11 = sphi 0, %s15
    %p12 = scmp.ge.s32.totalorder %s11, 6
    %s18 = sphi 0, %s30
    %s19 = sphi 0, %s26
    %s20 = sphi 0, %s18
    %s21 = sphi 0, %s19
    %s22 = sphi 0, %s20
    %s23 = sphi 0, %s21
    %s35 = sphi 0, %s37
    %s38 = sphi 0, %s35
    %s39 = sphi 0, %s38
    %s55 = sphi 0, %s39
    %s61 = sphi 0, %s63
    %s64 = sphi 0, %s61
    %s65 = sphi 0, %s64
    %s81 = sphi 0, %s65
    %s85 = sphi 0, %s85
    %s87 = sphi 0, %s85
    %s88 = sphi 0, %s87
    %s102 = sphi 0, %s88
    %s110 = sphi 0, %s112
    %s113 = sphi 0, %s110
    %s114 = sphi 0, %s113
    %s130 = sphi 0, %s114
    %s138 = sphi 0, %s140
    %s141 = sphi 0, %s138
    %s142 = sphi 0, %s141
    %s158 = sphi 0, %s142
  $region4: #{_lambda_.17} parent=0 // loop_header_branch
    %14 = sbr.rel (%p12) target = $region8
  $region5: #{_lambda_.17} parent=0 // loop_body
    %s16 = ssub.s32 %s11, 1
    %s17 = ssub.s32 %s11, 2
    %s24 = sadd.s32 1, %s19
    %p25 = scmp.ge.s32.totalorder %s24, 1
    %s26 = scalar_select %p25, 0, %s24
    %s27 = sadd.s32 1, %s18
    %s28 = scalar_select %p25, %s27, %s18
    %p29 = scmp.ge.s32.totalorder %s28, 4
    %s30 = scalar_select %p29, 0, %s28
    %s31 = ssub.s32 %s18, %s30
    %s32 = ssub.s32 %s19, %s26
    %s33 = sor.u32 %s31, %s32
    %p34 = scmp.eq.s32.totalorder %s33, 0
    %s36 = sadd.s32 %s35, 1
    %s37 = scalar_select %p34, %s35, %s36
    %p40 = pneg %p34
    %p41 = scmp.eq.s32.totalorder %s11, 3
    %p42 = por %p40, %p41
    %p43 = scmp.ne.s32.totalorder %s35, %s38
    %p44 = scmp.eq.s32.totalorder %s11, 0
    %p45 = por %p43, %p44
    %p46 = scmp.ne.s32.totalorder %s35, %s38
    %p47 = scmp.eq.s32.totalorder %s16, 3
    %p48 = por %p46, %p47
    %p49 = scmp.ne.s32.totalorder %s38, %s39
    %p50 = scmp.eq.s32.totalorder %s16, 0
    %p51 = por %p49, %p50
    %p52 = scmp.ne.s32.totalorder %s38, %s39
    %p53 = scmp.eq.s32.totalorder %s17, 3
    %p54 = por %p52, %p53
    %p56 = scmp.ne.s32.totalorder %s39, %s55
    %p57 = scmp.eq.s32.totalorder %s17, 0
    %p58 = por %p56, %p57
    %s59 = ssub.s32 %s18, %s30
    %p60 = scmp.eq.s32.totalorder %s59, 0
    %s62 = sadd.s32 %s61, 1
    %s63 = scalar_select %p60, %s61, %s62
    %p66 = pneg %p60
    %p67 = scmp.eq.s32.totalorder %s11, 3
    %p68 = por %p66, %p67
    %p69 = scmp.ne.s32.totalorder %s61, %s64
    %p70 = scmp.eq.s32.totalorder %s11, 0
    %p71 = por %p69, %p70
    %p72 = scmp.ne.s32.totalorder %s61, %s64
    %p73 = scmp.eq.s32.totalorder %s16, 3
    %p74 = por %p72, %p73
    %p75 = scmp.ne.s32.totalorder %s64, %s65
    %p76 = scmp.eq.s32.totalorder %s16, 0
    %p77 = por %p75, %p76
    %p78 = scmp.ne.s32.totalorder %s64, %s65
    %p79 = scmp.eq.s32.totalorder %s17, 3
    %p80 = por %p78, %p79
    %p82 = scmp.ne.s32.totalorder %s65, %s81
    %p83 = scmp.eq.s32.totalorder %s17, 0
    %p84 = por %p82, %p83
    %s86 = sadd.s32 %s85, 1
    %p89 = scmp.eq.s32.totalorder %s11, 3
    %p90 = scmp.ne.s32.totalorder %s85, %s87
    %p91 = scmp.eq.s32.totalorder %s11, 0
    %p92 = por %p90, %p91
    %p93 = scmp.ne.s32.totalorder %s85, %s87
    %p94 = scmp.eq.s32.totalorder %s16, 3
    %p95 = por %p93, %p94
    %p96 = scmp.ne.s32.totalorder %s87, %s88
    %p97 = scmp.eq.s32.totalorder %s16, 0
    %p98 = por %p96, %p97
    %p99 = scmp.ne.s32.totalorder %s87, %s88
    %p100 = scmp.eq.s32.totalorder %s17, 3
    %p101 = por %p99, %p100
    %p103 = scmp.ne.s32.totalorder %s88, %s102
    %p104 = scmp.eq.s32.totalorder %s17, 0
    %p105 = por %p103, %p104
    %s106 = ssub.s32 %s18, %s30
    %s107 = ssub.s32 %s19, %s26
    %s108 = sor.u32 %s106, %s107
    %p109 = scmp.eq.s32.totalorder %s108, 0
    %s111 = sadd.s32 %s110, 1
    %s112 = scalar_select %p109, %s110, %s111
    %p115 = pneg %p109
    %p116 = scmp.eq.s32.totalorder %s11, 3
    %p117 = por %p115, %p116
    %p118 = scmp.ne.s32.totalorder %s110, %s113
    %p119 = scmp.eq.s32.totalorder %s11, 0
    %p120 = por %p118, %p119
    %p121 = scmp.ne.s32.totalorder %s110, %s113
    %p122 = scmp.eq.s32.totalorder %s16, 3
    %p123 = por %p121, %p122
    %p124 = scmp.ne.s32.totalorder %s113, %s114
    %p125 = scmp.eq.s32.totalorder %s16, 0
    %p126 = por %p124, %p125
    %p127 = scmp.ne.s32.totalorder %s113, %s114
    %p128 = scmp.eq.s32.totalorder %s17, 3
    %p129 = por %p127, %p128
    %p131 = scmp.ne.s32.totalorder %s114, %s130
    %p132 = scmp.eq.s32.totalorder %s17, 0
    %p133 = por %p131, %p132
    %s134 = ssub.s32 %s18, %s30
    %s135 = ssub.s32 %s19, %s26
    %s136 = sor.u32 %s134, %s135
    %p137 = scmp.eq.s32.totalorder %s136, 0
    %s139 = sadd.s32 %s138, 1
    %s140 = scalar_select %p137, %s138, %s139
    %p143 = pneg %p137
    %p144 = scmp.eq.s32.totalorder %s11, 3
    %p145 = por %p143, %p144
    %p146 = scmp.ne.s32.totalorder %s138, %s141
    %p147 = scmp.eq.s32.totalorder %s11, 0
    %p148 = por %p146, %p147
    %p149 = scmp.ne.s32.totalorder %s138, %s141
    %p150 = scmp.eq.s32.totalorder %s16, 3
    %p151 = por %p149, %p150
    %p152 = scmp.ne.s32.totalorder %s141, %s142
    %p153 = scmp.eq.s32.totalorder %s16, 0
    %p154 = por %p152, %p153
    %p155 = scmp.ne.s32.totalorder %s141, %s142
    %p156 = scmp.eq.s32.totalorder %s17, 3
    %p157 = por %p155, %p156
    %p159 = scmp.ne.s32.totalorder %s142, %s158
    %p160 = scmp.eq.s32.totalorder %s17, 0
    %p161 = por %p159, %p160
    %p162 = scmp.le.s32.totalorder 1, %s11
    %p163 = scmp.lt.s32.totalorder %s11, 5
    %p164 = pnand %p162, %p163
    %p165 = pneg %p164
    // Predicated region
    $region9: #{_lambda_.17} parent=5 // pred_check
      _
    $region10: #{_lambda_.17} parent=5 // pred_check_branch
      %167 = sbr.rel (%p164) target = $region12
    $region11: #{_lambda_.17} parent=5 // pred_region
      %s168 = ssub.s32 %s11, 1
      // Predicated region
      $region13: #{_lambda_.17} parent=11 // pred_check
        %p169 = pneg %p98
      $region14: #{_lambda_.17} parent=11 // pred_check_branch
        %171 = sbr.rel (%p169) target = $region16
      $region15: #{_lambda_.17} parent=11 // pred_region
        _
      $region16: #{_lambda_.17} parent=11 // pred_fallthru
        _
    $region12: #{_lambda_.17} parent=5 // pred_fallthru
      _
    %p172 = scmp.lt.s32.totalorder %s11, 4
    // Predicated region
    $region17: #{_lambda_.17} parent=5 // pred_check
      %p173 = pneg %p172
    $region18: #{_lambda_.17} parent=5 // pred_check_branch
      %175 = sbr.rel (%p173) target = $region20
    $region19: #{_lambda_.17} parent=5 // pred_region
      // Predicated region
      $region21: #{_lambda_.17} parent=19 // pred_check
        %p176 = pneg %p45
      $region22: #{_lambda_.17} parent=19 // pred_check_branch
        %178 = sbr.rel (%p176) target = $region24
      $region23: #{_lambda_.17} parent=19 // pred_region
        %s179 = smul.u32 4, %s19
        %p180 = scmp.lt.s32.totalorder %s18, 3
        %s181 = scalar_select %p180, %s18, 3
        %p182 = scmp.lt.s32.totalorder %s179, 3
        %s183 = scalar_select %p182, %s179, 3
        %s184 = smul.addr %s181, 8
        %s185 = sadd.s32 %s183, %s184
        %s186 = smul.addr %s185, 4
        %s187 = scalar_lea.vmem %s0, %s186
        %s188 = smul.u32 4, %s19
      $region24: #{_lambda_.17} parent=19 // pred_fallthru
        _
      // Predicated region
      $region25: #{_lambda_.17} parent=19 // pred_check
        %p189 = pneg %p71
      $region26: #{_lambda_.17} parent=19 // pred_check_branch
        %191 = sbr.rel (%p189) target = $region28
      $region27: #{_lambda_.17} parent=19 // pred_region
        %p192 = scmp.lt.s32.totalorder %s18, 3
        %s193 = scalar_select %p192, %s18, 3
        %s194 = smul.addr %s193, 2
        %s195 = scalar_lea.vmem %s1, %s194
      $region28: #{_lambda_.17} parent=19 // pred_fallthru
        _
    $region20: #{_lambda_.17} parent=5 // pred_fallthru
      _
    %p196 = scmp.le.s32.totalorder 1, %s11
    %p197 = scmp.lt.s32.totalorder %s11, 5
    %p198 = pnand %p196, %p197
    %p199 = pneg %p198
    // Predicated region
    $region29: #{_lambda_.17} parent=5 // pred_check
      _
    $region30: #{_lambda_.17} parent=5 // pred_check_branch
      %201 = sbr.rel (%p198) target = $region32
    $region31: #{_lambda_.17} parent=5 // pred_region
      %s202 = ssub.s32 %s11, 1
      %s203 = smul.u32 4, %s21
      %p204 = scmp.lt.s32.totalorder %s20, 3
      %s205 = scalar_select %p204, %s20, 3
      %p206 = scmp.lt.s32.totalorder %s203, 3
      %s207 = scalar_select %p206, %s203, 3
      %s208 = smul.addr %s205, 8
      %s209 = sadd.s32 %s207, %s208
      %s210 = smul.addr %s209, 4
      %s211 = scalar_lea.vmem %s0, %s210
      %p212 = pneg %p51
      %p213 = pneg %p48
      %p214 = scmp.lt.s32.totalorder %s20, 3
      %s215 = scalar_select %p214, %s20, 3
      %s216 = smul.addr %s215, 2
      %s217 = scalar_lea.vmem %s1, %s216
      %p218 = pneg %p77
      %p219 = pneg %p74
      %p220 = pneg %p98
      %p221 = pneg %p95
      %p222 = pneg %p126
      %p223 = pneg %p123
      %s224 = smul.u32 4, %s21
      %p225 = scmp.lt.s32.totalorder %s20, 3
      %s226 = scalar_select %p225, %s20, 3
      %p227 = scmp.lt.s32.totalorder %s224, 3
      %s228 = scalar_select %p227, %s224, 3
      %s229 = smul.addr %s226, 4
      %s230 = sadd.s32 %s228, %s229
      %s231 = smul.addr %s230, 4
      %s232 = scalar_lea.vmem %s3, %s231
      %p233 = pneg %p154
      %p234 = pneg %p151
      %p235 = scmp.lt.s32.totalorder %s20, 3
      %s236 = scalar_select %p235, %s20, 3
      %p237 = scmp.lt.s32.totalorder %s21, 0
      %s238 = scalar_select %p237, %s21, 0
      %s239 = sadd.s32 %s238, %s236
      %s240 = smul.addr %s239, 4
      %s241 = scalar_lea.vmem %s4, %s240
      %s242 = smul.u32 4, %s21
      %p243 = scmp.lt.s32.totalorder %s20, 3
      %s244 = scalar_select %p243, %s20, 3
      %p245 = scmp.lt.s32.totalorder %s242, 3
      %s246 = scalar_select %p245, %s242, 3
      %s247 = smul.addr %s244, 8
      %s248 = sadd.s32 %s246, %s247
      %s249 = smul.addr %s248, 4
      %s250 = scalar_lea.vmem %s0, %s249
      %s251 = smul.u32 4, %s21
      %p252 = scmp.lt.s32.totalorder %s20, 3
      %s253 = scalar_select %p252, %s20, 3
      %s254 = smul.addr %s253, 2
      %s255 = scalar_lea.vmem %s1, %s254
      %s256 = smul.u32 4, %s21
      %p257 = scmp.lt.s32.totalorder %s20, 3
      %s258 = scalar_select %p257, %s20, 3
      %p259 = scmp.lt.s32.totalorder %s256, 3
      %s260 = scalar_select %p259, %s256, 3
      %s261 = smul.addr %s258, 4
      %s262 = sadd.s32 %s260, %s261
      %s263 = smul.addr %s262, 4
      %s264 = scalar_lea.vmem %s3, %s263
      %s265 = smul.u32 4, %s21
      %p266 = scmp.lt.s32.totalorder %s20, 3
      %s267 = scalar_select %p266, %s20, 3
      %p268 = scmp.lt.s32.totalorder %s21, 0
      %s269 = scalar_select %p268, %s21, 0
      %s270 = sadd.s32 %s269, %s267
      %s271 = smul.addr %s270, 4
      %s272 = scalar_lea.vmem %s4, %s271
      %v274 = vld [vmem:[%s255] sm:$0x3]
      %v275 = vld [vmem:[%s250] sm:$0xff]
      %v276 = vld [vmem:[%s250 + $0x8] sm:$0xff]
      %v277 = vld [vmem:[%s250 + $0x10] sm:$0xff]
      %v278 = vld [vmem:[%s250 + $0x18] sm:$0xff]
      %v279 = vld [vmem:[%s2] sm:$0xf]
      %281 = vset.pattern.permute.xlu0 0
      %282 = vperm.xlu0 %281, %v279
      %v283 = vpop.permute.xlu0 %282
      %v289 = vunpack.c.l.b16 %v275
      %v290 = vunpack.c.h.b16 %v275
      %v291 = vunpack.c.l.b16 %v276
      %v292 = vunpack.c.h.b16 %v276
      %v293 = vunpack.c.l.b16 %v277
      %v294 = vunpack.c.h.b16 %v277
      %v295 = vunpack.c.l.b16 %v278
      %v296 = vunpack.c.h.b16 %v278
      %v297 = vpack.c.b16 %v293, %v289
      %v298 = vpack.c.b16 %v294, %v290
      %v299 = vpack.c.b16 %v295, %v291
      %v300 = vpack.c.b16 %v296, %v292
      %vm305 = vcmask 130048
      %v307 = vsel %vm305, %v274, 0
      %309 = vmatprep.subr.bf16.mxu0 %v298
      %310 = vmatpush1.bf16.msra.mxu0 %v297
      %311 = vmatprep.subr.bf16.mxu0 0
      %312 = vmatpush1.bf16.msra.mxu0 0
      %313 = vmatprep.subr.bf16.mxu0 0
      %314 = vmatpush1.bf16.msra.mxu0 0
      %315 = vmatprep.subr.bf16.mxu0 0
      %316 = vmatpush1.bf16.msra.mxu0 0
      %317 = vmatprep.subr.bf16.mxu0 0
      %318 = vmatpush1.bf16.msra.mxu0 0
      %319 = vmatprep.subr.bf16.mxu0 0
      %320 = vmatpush1.bf16.msra.mxu0 0
      %321 = vmatprep.subr.bf16.mxu0 0
      %322 = vmatpush1.bf16.msra.mxu0 0
      %323 = vmatprep.subr.bf16.mxu0 0
      %324 = vmatpush1.bf16.msra.mxu0 0
      %325 = vmatprep.subr.bf16.mxu0 0
      %326 = vmatpush1.bf16.msra.mxu0 0
      %327 = vmatprep.subr.bf16.mxu0 0
      %328 = vmatpush1.bf16.msra.mxu0 0
      %329 = vmatprep.subr.bf16.mxu0 0
      %330 = vmatpush1.bf16.msra.mxu0 0
      %331 = vmatprep.subr.bf16.mxu0 0
      %332 = vmatpush1.bf16.msra.mxu0 0
      %333 = vmatprep.subr.bf16.mxu0 0
      %334 = vmatpush1.bf16.msra.mxu0 0
      %335 = vmatprep.subr.bf16.mxu0 0
      %336 = vmatpush1.bf16.msra.mxu0 0
      %337 = vmatprep.subr.bf16.mxu0 0
      %338 = vmatpush1.bf16.msra.mxu0 0
      %339 = vmatprep.subr.bf16.mxu0 0
      %340 = vmatpush1.bf16.msra.mxu0 0
      %341 = vmatprep.mubr.bf16.mxu0 0
      %342 = vmatmul.mubr.bf16.gmra.mrb[0].mxu0 %v307
      %v343 = vpop.f32.mrb[0].mxu0
      %v344 = vadd.f32 %v283, %v343
      %v345 = vpop.f32.mrb[0].mxu0
      %v346 = vadd.f32 %v283, %v345
      %v347 = vpop.f32.mrb[0].mxu0
      %v348 = vpop.f32.mrb[0].mxu0
      %349 = vdwg.mxu0
      %350 = vmatprep.subr.bf16.mxu0 %v300
      %351 = vmatpush1.bf16.msra.mxu0 %v299
      %352 = vmatprep.subr.bf16.mxu0 0
      %353 = vmatpush1.bf16.msra.mxu0 0
      %354 = vmatprep.subr.bf16.mxu0 0
      %355 = vmatpush1.bf16.msra.mxu0 0
      %356 = vmatprep.subr.bf16.mxu0 0
      %357 = vmatpush1.bf16.msra.mxu0 0
      %358 = vmatprep.subr.bf16.mxu0 0
      %359 = vmatpush1.bf16.msra.mxu0 0
      %360 = vmatprep.subr.bf16.mxu0 0
      %361 = vmatpush1.bf16.msra.mxu0 0
      %362 = vmatprep.subr.bf16.mxu0 0
      %363 = vmatpush1.bf16.msra.mxu0 0
      %364 = vmatprep.subr.bf16.mxu0 0
      %365 = vmatpush1.bf16.msra.mxu0 0
      %366 = vmatprep.subr.bf16.mxu0 0
      %367 = vmatpush1.bf16.msra.mxu0 0
      %368 = vmatprep.subr.bf16.mxu0 0
      %369 = vmatpush1.bf16.msra.mxu0 0
      %370 = vmatprep.subr.bf16.mxu0 0
      %371 = vmatpush1.bf16.msra.mxu0 0
      %372 = vmatprep.subr.bf16.mxu0 0
      %373 = vmatpush1.bf16.msra.mxu0 0
      %374 = vmatprep.subr.bf16.mxu0 0
      %375 = vmatpush1.bf16.msra.mxu0 0
      %376 = vmatprep.subr.bf16.mxu0 0
      %377 = vmatpush1.bf16.msra.mxu0 0
      %378 = vmatprep.subr.bf16.mxu0 0
      %379 = vmatpush1.bf16.msra.mxu0 0
      %380 = vmatprep.subr.bf16.mxu0 0
      %381 = vmatpush1.bf16.msra.mxu0 0
      %382 = vmatprep.mubr.bf16.mxu0 0
      %383 = vmatmul.mubr.bf16.gmra.mrb[0].mxu0 %v307
      %v384 = vpop.f32.mrb[0].mxu0
      %v385 = vadd.f32 %v283, %v384
      %v386 = vpop.f32.mrb[0].mxu0
      %v387 = vadd.f32 %v283, %v386
      %v388 = vpop.f32.mrb[0].mxu0
      %v389 = vpop.f32.mrb[0].mxu0
      %390 = vdwg.mxu0
      %v395 = vcombine.low %v344, %v346
      %v396 = vcombine.low %v385, %v387
      %399 = vst [vmem:[%s264] sm:$0xff] %v395
      %400 = vst [vmem:[%s264 + $0x8] sm:$0xff] %v396
      %vm401 = vcmask 1043456
      %v402 = vsel %vm401, %v344, 0.0
      %v403 = vsel %vm401, %v346, 0.0
      %v404 = vadd.f32 %v402, %v403
      %v405 = vsel %vm401, %v385, 0.0
      %v406 = vadd.f32 %v404, %v405
      %v407 = vsel %vm401, %v387, 0.0
      %v408 = vadd.f32 %v406, %v407
      %409 = vadd.xlane.f32.xlu0 %v408
      %v410 = vpop.xlane.xlu0 %409
      %vm411 = vcmask 3072
      %412 = vst.msk [vmem:[%s272] sm:$0xf] %vm411, %v410
      %v413 = vmul.f32 %v344, %v344
      %v414 = vmul.f32 %v346, %v346
      %v415 = vmul.f32 %v385, %v385
      %v416 = vmul.f32 %v387, %v387
      %v417 = vsel %vm401, %v413, 0.0
      %v418 = vsel %vm401, %v414, 0.0
      %v419 = vadd.f32 %v417, %v418
      %v420 = vsel %vm401, %v415, 0.0
      %v421 = vadd.f32 %v419, %v420
      %v422 = vsel %vm401, %v416, 0.0
      %v423 = vadd.f32 %v421, %v422
      %424 = vadd.xlane.f32.xlu0 %v423
      %v425 = vpop.xlane.xlu0 %424
      %vm426 = vcmask 11272
      %427 = vst.msk [vmem:[%s272] sm:$0xf] %vm426, %v425
      %s428 = smul.u32 4, %s21
      %p429 = scmp.lt.s32.totalorder %s20, 3
      %s430 = scalar_select %p429, %s20, 3
      %p431 = scmp.lt.s32.totalorder %s428, 3
      %s432 = scalar_select %p431, %s428, 3
      %s433 = smul.addr %s430, 4
      %s434 = sadd.s32 %s432, %s433
      %s435 = smul.addr %s434, 4
      %s436 = scalar_lea.vmem %s3, %s435
      %p437 = scmp.lt.s32.totalorder %s20, 3
      %s438 = scalar_select %p437, %s20, 3
      %p439 = scmp.lt.s32.totalorder %s21, 0
      %s440 = scalar_select %p439, %s21, 0
      %s441 = sadd.s32 %s440, %s438
      %s442 = smul.addr %s441, 4
      %s443 = scalar_lea.vmem %s4, %s442
      // Predicated region
      $region33: #{_lambda_.17} parent=31 // pred_check
        %p444 = pneg %p123
      $region34: #{_lambda_.17} parent=31 // pred_check_branch
        %446 = sbr.rel (%p444) target = $region36
      $region35: #{_lambda_.17} parent=31 // pred_region
        %s447 = smul.u32 4, %s21
      $region36: #{_lambda_.17} parent=31 // pred_fallthru
        _
      // Predicated region
      $region37: #{_lambda_.17} parent=31 // pred_check
        %p448 = pneg %p151
      $region38: #{_lambda_.17} parent=31 // pred_check_branch
        %450 = sbr.rel (%p448) target = $region40
      $region39: #{_lambda_.17} parent=31 // pred_region
        _
      $region40: #{_lambda_.17} parent=31 // pred_fallthru
        _
    $region32: #{_lambda_.17} parent=5 // pred_fallthru
      _
    %p451 = scmp.le.s32.totalorder 2, %s11
    // Predicated region
    $region41: #{_lambda_.17} parent=5 // pred_check
      %p452 = pneg %p451
    $region42: #{_lambda_.17} parent=5 // pred_check_branch
      %454 = sbr.rel (%p452) target = $region44
    $region43: #{_lambda_.17} parent=5 // pred_region
      %s455 = ssub.s32 %s11, 2
      // Predicated region
      $region45: #{_lambda_.17} parent=43 // pred_check
        %p456 = pneg %p129
      $region46: #{_lambda_.17} parent=43 // pred_check_branch
        %458 = sbr.rel (%p456) target = $region48
      $region47: #{_lambda_.17} parent=43 // pred_region
        %s459 = smul.u32 4, %s23
        %p460 = scmp.lt.s32.totalorder %s22, 3
        %s461 = scalar_select %p460, %s22, 3
        %p462 = scmp.lt.s32.totalorder %s459, 3
        %s463 = scalar_select %p462, %s459, 3
        %s464 = smul.addr %s461, 4
        %s465 = sadd.s32 %s463, %s464
        %s466 = smul.addr %s465, 4
        %s467 = scalar_lea.vmem %s3, %s466
      $region48: #{_lambda_.17} parent=43 // pred_fallthru
        _
      // Predicated region
      $region49: #{_lambda_.17} parent=43 // pred_check
        %p468 = pneg %p157
      $region50: #{_lambda_.17} parent=43 // pred_check_branch
        %470 = sbr.rel (%p468) target = $region52
      $region51: #{_lambda_.17} parent=43 // pred_region
        %p471 = scmp.lt.s32.totalorder %s22, 3
        %s472 = scalar_select %p471, %s22, 3
        %p473 = scmp.lt.s32.totalorder %s23, 0
        %s474 = scalar_select %p473, %s23, 0
        %s475 = sadd.s32 %s474, %s472
        %s476 = smul.addr %s475, 4
        %s477 = scalar_lea.vmem %s4, %s476
      $region52: #{_lambda_.17} parent=43 // pred_fallthru
        _
    $region44: #{_lambda_.17} parent=5 // pred_fallthru
      _
  $region6: #{_lambda_.17} parent=0 // loop_footer
    %s15 = sadd.s32 1, %s11
  $region7: #{_lambda_.17} parent=0 // loop_footer_branch
    %10 = sbr.rel target = $region3
  $region8: #{_lambda_.17} parent=0 // loop_exit
    _

// kernel: _lambda_.19
$region0: #{_lambda_.19}
  #allocation0 [shape = 'u32[]', space=smem, size = 0x4, offset = 0x4, fixed_abs, tag = 'smem constant byte address 0x4 - core index']
  #allocation1 [shape = 'u32[144,128]{1,0:T(1,128)}', space=vmem, size = 0x12000, scoped, tag = 'internal scratch']
  %s0 = inlined_call_operand.vmem [shape: bf16[1,100,2048], index: 0, kind: input, shape index: {}]
  %s1 = inlined_call_operand.vmem [shape: bf16[1,3,100], index: 1, kind: input, shape index: {}]
  %s2 = inlined_call_operand.vmem [shape: f32[3,1], index: 2, kind: input, shape index: {}]
  %s3 = inlined_call_operand.vmem [shape: f32[1,3,2048], index: 3, kind: output, shape index: {0}]
  %s4 = inlined_call_operand.hbm [shape: f32[1,4,3,2], index: 4, kind: output, shape index: {1}]
  %5 = xla_tuple %s3, %s4
  %s6 = sld [smem:[#allocation0]]
  $region76: #{_lambda_.19} parent=0
    _
  %s8 = ssub.s32 1, %s6
  %s9 = scalar_select 0, %s8, %s6
  $region1: #{_lambda_.19} parent=0
    #allocation2 [shape = 'u8[212992]{0}', space=vmem, size = 0x34000, scoped, tag = 'input window, operand 0']
    #allocation3 [shape = 'u8[4096]{0}', space=vmem, size = 0x1000, scoped, tag = 'output window, operand 1']
    #allocation4 [shape = 's32[2]{0}', space=sflag, size = 0x8, scoped, tag = 'scoped memory for _lambda_.19']
    %10 = vsyncpa [#allocation4], 0
    %s11 = scalar_lea.sflag [#allocation4], 1
    %12 = vsyncpa %s11, 0
    loop: start=0, step=1, limit=6
    $region2: #{_lambda_.19} parent=1 // loop_pre_header
      _
    $region3: #{_lambda_.19} parent=1 // loop_header
      %s14 = sphi 0, %s18
      %p15 = scmp.ge.s32.totalorder %s14, 6
      %s21 = sphi 0, %s33
      %s22 = sphi 0, %s29
      %s23 = sphi 0, %s21
      %s24 = sphi 0, %s22
      %s25 = sphi 0, %s23
      %s26 = sphi 0, %s24
      %s38 = sphi 0, %s40
      %s41 = sphi 0, %s38
      %s42 = sphi 0, %s41
      %s58 = sphi 0, %s42
      %s64 = sphi 0, %s66
      %s67 = sphi 0, %s64
      %s68 = sphi 0, %s67
      %s84 = sphi 0, %s68
      %s88 = sphi 0, %s88
      %s90 = sphi 0, %s88
      %s91 = sphi 0, %s90
      %s105 = sphi 0, %s91
      %s113 = sphi 0, %s115
      %s116 = sphi 0, %s113
      %s117 = sphi 0, %s116
      %s133 = sphi 0, %s117
      %s141 = sphi 0, %s143
      %s144 = sphi 0, %s141
      %s145 = sphi 0, %s144
      %s161 = sphi 0, %s145
    $region4: #{_lambda_.19} parent=1 // loop_header_branch
      %17 = sbr.rel (%p15) target = $region8
    $region5: #{_lambda_.19} parent=1 // loop_body
      %s19 = ssub.s32 %s14, 1
      %s20 = ssub.s32 %s14, 2
      %s27 = sadd.s32 1, %s22
      %p28 = scmp.ge.s32.totalorder %s27, 4
      %s29 = scalar_select %p28, 0, %s27
      %s30 = sadd.s32 1, %s21
      %s31 = scalar_select %p28, %s30, %s21
      %p32 = scmp.ge.s32.totalorder %s31, 1
      %s33 = scalar_select %p32, 0, %s31
      %s34 = ssub.s32 %s21, %s33
      %s35 = ssub.s32 %s22, %s29
      %s36 = sor.u32 %s34, %s35
      %p37 = scmp.eq.s32.totalorder %s36, 0
      %s39 = sadd.s32 %s38, 1
      %s40 = scalar_select %p37, %s38, %s39
      %p43 = pneg %p37
      %p44 = scmp.eq.s32.totalorder %s14, 3
      %p45 = por %p43, %p44
      %p46 = scmp.ne.s32.totalorder %s38, %s41
      %p47 = scmp.eq.s32.totalorder %s14, 0
      %p48 = por %p46, %p47
      %p49 = scmp.ne.s32.totalorder %s38, %s41
      %p50 = scmp.eq.s32.totalorder %s19, 3
      %p51 = por %p49, %p50
      %p52 = scmp.ne.s32.totalorder %s41, %s42
      %p53 = scmp.eq.s32.totalorder %s19, 0
      %p54 = por %p52, %p53
      %p55 = scmp.ne.s32.totalorder %s41, %s42
      %p56 = scmp.eq.s32.totalorder %s20, 3
      %p57 = por %p55, %p56
      %p59 = scmp.ne.s32.totalorder %s42, %s58
      %p60 = scmp.eq.s32.totalorder %s20, 0
      %p61 = por %p59, %p60
      %s62 = ssub.s32 %s21, %s33
      %p63 = scmp.eq.s32.totalorder %s62, 0
      %s65 = sadd.s32 %s64, 1
      %s66 = scalar_select %p63, %s64, %s65
      %p69 = pneg %p63
      %p70 = scmp.eq.s32.totalorder %s14, 3
      %p71 = por %p69, %p70
      %p72 = scmp.ne.s32.totalorder %s64, %s67
      %p73 = scmp.eq.s32.totalorder %s14, 0
      %p74 = por %p72, %p73
      %p75 = scmp.ne.s32.totalorder %s64, %s67
      %p76 = scmp.eq.s32.totalorder %s19, 3
      %p77 = por %p75, %p76
      %p78 = scmp.ne.s32.totalorder %s67, %s68
      %p79 = scmp.eq.s32.totalorder %s19, 0
      %p80 = por %p78, %p79
      %p81 = scmp.ne.s32.totalorder %s67, %s68
      %p82 = scmp.eq.s32.totalorder %s20, 3
      %p83 = por %p81, %p82
      %p85 = scmp.ne.s32.totalorder %s68, %s84
      %p86 = scmp.eq.s32.totalorder %s20, 0
      %p87 = por %p85, %p86
      %s89 = sadd.s32 %s88, 1
      %p92 = scmp.eq.s32.totalorder %s14, 3
      %p93 = scmp.ne.s32.totalorder %s88, %s90
      %p94 = scmp.eq.s32.totalorder %s14, 0
      %p95 = por %p93, %p94
      %p96 = scmp.ne.s32.totalorder %s88, %s90
      %p97 = scmp.eq.s32.totalorder %s19, 3
      %p98 = por %p96, %p97
      %p99 = scmp.ne.s32.totalorder %s90, %s91
      %p100 = scmp.eq.s32.totalorder %s19, 0
      %p101 = por %p99, %p100
      %p102 = scmp.ne.s32.totalorder %s90, %s91
      %p103 = scmp.eq.s32.totalorder %s20, 3
      %p104 = por %p102, %p103
      %p106 = scmp.ne.s32.totalorder %s91, %s105
      %p107 = scmp.eq.s32.totalorder %s20, 0
      %p108 = por %p106, %p107
      %s109 = ssub.s32 %s21, %s33
      %s110 = ssub.s32 %s22, %s29
      %s111 = sor.u32 %s109, %s110
      %p112 = scmp.eq.s32.totalorder %s111, 0
      %s114 = sadd.s32 %s113, 1
      %s115 = scalar_select %p112, %s113, %s114
      %p118 = pneg %p112
      %p119 = scmp.eq.s32.totalorder %s14, 3
      %p120 = por %p118, %p119
      %p121 = scmp.ne.s32.totalorder %s113, %s116
      %p122 = scmp.eq.s32.totalorder %s14, 0
      %p123 = por %p121, %p122
      %p124 = scmp.ne.s32.totalorder %s113, %s116
      %p125 = scmp.eq.s32.totalorder %s19, 3
      %p126 = por %p124, %p125
      %p127 = scmp.ne.s32.totalorder %s116, %s117
      %p128 = scmp.eq.s32.totalorder %s19, 0
      %p129 = por %p127, %p128
      %p130 = scmp.ne.s32.totalorder %s116, %s117
      %p131 = scmp.eq.s32.totalorder %s20, 3
      %p132 = por %p130, %p131
      %p134 = scmp.ne.s32.totalorder %s117, %s133
      %p135 = scmp.eq.s32.totalorder %s20, 0
      %p136 = por %p134, %p135
      %s137 = ssub.s32 %s21, %s33
      %s138 = ssub.s32 %s22, %s29
      %s139 = sor.u32 %s137, %s138
      %p140 = scmp.eq.s32.totalorder %s139, 0
      %s142 = sadd.s32 %s141, 1
      %s143 = scalar_select %p140, %s141, %s142
      %p146 = pneg %p140
      %p147 = scmp.eq.s32.totalorder %s14, 3
      %p148 = por %p146, %p147
      %p149 = scmp.ne.s32.totalorder %s141, %s144
      %p150 = scmp.eq.s32.totalorder %s14, 0
      %p151 = por %p149, %p150
      %p152 = scmp.ne.s32.totalorder %s141, %s144
      %p153 = scmp.eq.s32.totalorder %s19, 3
      %p154 = por %p152, %p153
      %p155 = scmp.ne.s32.totalorder %s144, %s145
      %p156 = scmp.eq.s32.totalorder %s19, 0
      %p157 = por %p155, %p156
      %p158 = scmp.ne.s32.totalorder %s144, %s145
      %p159 = scmp.eq.s32.totalorder %s20, 3
      %p160 = por %p158, %p159
      %p162 = scmp.ne.s32.totalorder %s145, %s161
      %p163 = scmp.eq.s32.totalorder %s20, 0
      %p164 = por %p162, %p163
      %p165 = scmp.le.s32.totalorder 1, %s14
      %p166 = scmp.lt.s32.totalorder %s14, 5
      %p167 = pnand %p165, %p166
      %p168 = pneg %p167
      // Predicated region
      $region9: #{_lambda_.19} parent=5 // pred_check
        _
      $region10: #{_lambda_.19} parent=5 // pred_check_branch
        %170 = sbr.rel (%p167) target = $region12
      $region11: #{_lambda_.19} parent=5 // pred_region
        %s171 = ssub.s32 %s14, 1
        // Predicated region
        $region13: #{_lambda_.19} parent=11 // pred_check
          %p172 = pneg %p80
        $region14: #{_lambda_.19} parent=11 // pred_check_branch
          %174 = sbr.rel (%p172) target = $region16
        $region15: #{_lambda_.19} parent=11 // pred_region
          %p175 = scmp.lt.s32.totalorder %s23, 0
          %s176 = scalar_select %p175, %s23, 0
          %s177 = smul.addr %s176, 2
          %s178 = scalar_lea.vmem %s1, %s177
        $region16: #{_lambda_.19} parent=11 // pred_fallthru
          _
        // Predicated region
        $region17: #{_lambda_.19} parent=11 // pred_check
          %p179 = pneg %p101
        $region18: #{_lambda_.19} parent=11 // pred_check_branch
          %181 = sbr.rel (%p179) target = $region20
        $region19: #{_lambda_.19} parent=11 // pred_region
          _
        $region20: #{_lambda_.19} parent=11 // pred_fallthru
          _
      $region12: #{_lambda_.19} parent=5 // pred_fallthru
        _
      %p182 = scmp.lt.s32.totalorder %s14, 4
      // Predicated region
      $region21: #{_lambda_.19} parent=5 // pred_check
        %p183 = pneg %p182
      $region22: #{_lambda_.19} parent=5 // pred_check_branch
        %185 = sbr.rel (%p183) target = $region24
      $region23: #{_lambda_.19} parent=5 // pred_region
        // Predicated region
        $region25: #{_lambda_.19} parent=23 // pred_check
          %p186 = pneg %p48
        $region26: #{_lambda_.19} parent=23 // pred_check_branch
          %188 = sbr.rel (%p186) target = $region28
        $region27: #{_lambda_.19} parent=23 // pred_region
          %s189 = sand.u32 %s38, 1
          %s190 = sand.u32 %s38, 1
          %s191 = smul.addr %s190, 208
          %s192 = scalar_lea.vmem [#allocation2], %s191
          %s193 = smul.u32 4, %s22
          %s194 = smul.addr %s21, 208
          %s195 = sadd.s32 %s193, %s194
          %s196 = smul.addr %s195, 4
          %s197 = scalar_lea.vmem %s0, %s196
          // Predicated region
          $region29: #{_lambda_.19} parent=27 // pred_check
            _
          $region30: #{_lambda_.19} parent=27 // pred_check_branch
            %199 = sbr.rel (0) target = $region32
          $region31: #{_lambda_.19} parent=27 // pred_region
            // Predicated region
            $region33: #{_lambda_.19} parent=31 // pred_check
              _
            $region34: #{_lambda_.19} parent=31 // pred_check_branch
              %201 = sbr.rel (0) target = $region36
            $region35: #{_lambda_.19} parent=31 // pred_region
              loop: start=0, step=1, limit=1
              $region37: #{_lambda_.19} parent=35 // loop_pre_header
                _
              $region38: #{_lambda_.19} parent=35 // loop_header
                %s203 = sphi 0, %s207
                %p204 = scmp.ge.s32.totalorder %s203, 1
                %s208 = sphi %s197, %s197
                %s209 = sphi %s192, %s192
              $region39: #{_lambda_.19} parent=35 // loop_header_branch
                %206 = sbr.rel (%p204) target = $region43
              $region40: #{_lambda_.19} parent=35 // loop_body
                %v210 = vld [vmem:[%s208] sm:$0xff]
                %211 = vst [vmem:[%s209] sm:$0xff] %v210
                %v212 = vld [vmem:[%s208 + $0x8] sm:$0xff]
                %213 = vst [vmem:[%s209 + $0x8] sm:$0xff] %v212
                %v214 = vld [vmem:[%s208 + $0x40] sm:$0xff]
                %215 = vst [vmem:[%s209 + $0x10] sm:$0xff] %v214
                %v216 = vld [vmem:[%s208 + $0x48] sm:$0xff]
                %217 = vst [vmem:[%s209 + $0x18] sm:$0xff] %v216
                %v218 = vld [vmem:[%s208 + $0x80] sm:$0xff]
                %219 = vst [vmem:[%s209 + $0x20] sm:$0xff] %v218
                %v220 = vld [vmem:[%s208 + $0x88] sm:$0xff]
                %221 = vst [vmem:[%s209 + $0x28] sm:$0xff] %v220
                %v222 = vld [vmem:[%s208 + $0xc0] sm:$0xff]
                %223 = vst [vmem:[%s209 + $0x30] sm:$0xff] %v222
                %v224 = vld [vmem:[%s208 + $0xc8] sm:$0xff]
                %225 = vst [vmem:[%s209 + $0x38] sm:$0xff] %v224
                %v226 = vld [vmem:[%s208 + $0x100] sm:$0xff]
                %227 = vst [vmem:[%s209 + $0x40] sm:$0xff] %v226
                %v228 = vld [vmem:[%s208 + $0x108] sm:$0xff]
                %229 = vst [vmem:[%s209 + $0x48] sm:$0xff] %v228
                %v230 = vld [vmem:[%s208 + $0x140] sm:$0xff]
                %231 = vst [vmem:[%s209 + $0x50] sm:$0xff] %v230
                %v232 = vld [vmem:[%s208 + $0x148] sm:$0xff]
                %233 = vst [vmem:[%s209 + $0x58] sm:$0xff] %v232
                %v234 = vld [vmem:[%s208 + $0x180] sm:$0xff]
                %235 = vst [vmem:[%s209 + $0x60] sm:$0xff] %v234
                %v236 = vld [vmem:[%s208 + $0x188] sm:$0xff]
                %237 = vst [vmem:[%s209 + $0x68] sm:$0xff] %v236
                %v238 = vld [vmem:[%s208 + $0x1c0] sm:$0xff]
                %239 = vst [vmem:[%s209 + $0x70] sm:$0xff] %v238
                %v240 = vld [vmem:[%s208 + $0x1c8] sm:$0xff]
                %241 = vst [vmem:[%s209 + $0x78] sm:$0xff] %v240
                %v242 = vld [vmem:[%s208 + $0x200] sm:$0xff]
                %243 = vst [vmem:[%s209 + $0x80] sm:$0xff] %v242
                %v244 = vld [vmem:[%s208 + $0x208] sm:$0xff]
                %245 = vst [vmem:[%s209 + $0x88] sm:$0xff] %v244
                %v246 = vld [vmem:[%s208 + $0x240] sm:$0xff]
                %247 = vst [vmem:[%s209 + $0x90] sm:$0xff] %v246
                %v248 = vld [vmem:[%s208 + $0x248] sm:$0xff]
                %249 = vst [vmem:[%s209 + $0x98] sm:$0xff] %v248
                %v250 = vld [vmem:[%s208 + $0x280] sm:$0xff]
                %251 = vst [vmem:[%s209 + $0xa0] sm:$0xff] %v250
                %v252 = vld [vmem:[%s208 + $0x288] sm:$0xff]
                %253 = vst [vmem:[%s209 + $0xa8] sm:$0xff] %v252
                %v254 = vld [vmem:[%s208 + $0x2c0] sm:$0xff]
                %255 = vst [vmem:[%s209 + $0xb0] sm:$0xff] %v254
                %v256 = vld [vmem:[%s208 + $0x2c8] sm:$0xff]
                %257 = vst [vmem:[%s209 + $0xb8] sm:$0xff] %v256
                %v258 = vld [vmem:[%s208 + $0x300] sm:$0xff]
                %259 = vst [vmem:[%s209 + $0xc0] sm:$0xff] %v258
                %v260 = vld [vmem:[%s208 + $0x308] sm:$0xff]
                %261 = vst [vmem:[%s209 + $0xc8] sm:$0xff] %v260
              $region41: #{_lambda_.19} parent=35 // loop_footer
                %s207 = sadd.s32 1, %s203
              $region42: #{_lambda_.19} parent=35 // loop_footer_branch
                %202 = sbr.rel target = $region38
              $region43: #{_lambda_.19} parent=35 // loop_exit
                _
            $region36: #{_lambda_.19} parent=31 // pred_fallthru
              _
            // Predicated region
            $region44: #{_lambda_.19} parent=31 // pred_check
              _
            $region45: #{_lambda_.19} parent=31 // pred_check_branch
              %263 = sbr.rel target = $region47
            $region46: #{_lambda_.19} parent=31 // pred_region
              _
            $region47: #{_lambda_.19} parent=31 // pred_fallthru
              _
          $region32: #{_lambda_.19} parent=27 // pred_fallthru
            _
          %264 = vnop
        $region28: #{_lambda_.19} parent=23 // pred_fallthru
          _
      $region24: #{_lambda_.19} parent=5 // pred_fallthru
        _
      %p265 = scmp.le.s32.totalorder 1, %s14
      %p266 = scmp.lt.s32.totalorder %s14, 5
      %p267 = pnand %p265, %p266
      %p268 = pneg %p267
      // Predicated region
      $region48: #{_lambda_.19} parent=5 // pred_check
        _
      $region49: #{_lambda_.19} parent=5 // pred_check_branch
        %270 = sbr.rel (%p267) target = $region51
      $region50: #{_lambda_.19} parent=5 // pred_region
        %s271 = ssub.s32 %s14, 1
        %s272 = sand.u32 %s41, 1
        %s273 = sand.u32 %s41, 1
        %s274 = smul.addr %s273, 208
        %s275 = scalar_lea.vmem [#allocation2], %s274
        // Predicated region
        $region52: #{_lambda_.19} parent=50 // pred_check
          %p276 = pneg %p54
        $region53: #{_lambda_.19} parent=50 // pred_check_branch
          %278 = sbr.rel (%p276) target = $region55
        $region54: #{_lambda_.19} parent=50 // pred_region
          _
        $region55: #{_lambda_.19} parent=50 // pred_fallthru
          _
        %s279 = sand.u32 %s41, 1
        %s280 = sand.u32 %s41, 1
        %s281 = smul.addr %s280, 208
        %s282 = scalar_lea.vmem [#allocation2], %s281
        %p283 = pneg %p54
        %p284 = pneg %p51
        %p285 = scmp.lt.s32.totalorder %s23, 0
        %s286 = scalar_select %p285, %s23, 0
        %s287 = smul.addr %s286, 2
        %s288 = scalar_lea.vmem %s1, %s287
        %p289 = pneg %p80
        %p290 = pneg %p77
        %p291 = pneg %p101
        %p292 = pneg %p98
        %p293 = pneg %p129
        %p294 = pneg %p126
        %s295 = smul.u32 4, %s24
        %p296 = scmp.lt.s32.totalorder %s23, 0
        %s297 = scalar_select %p296, %s23, 0
        %p298 = scmp.lt.s32.totalorder %s295, 15
        %s299 = scalar_select %p298, %s295, 15
        %s300 = smul.addr %s297, 16
        %s301 = sadd.s32 %s299, %s300
        %s302 = smul.addr %s301, 4
        %s303 = scalar_lea.vmem %s3, %s302
        %p304 = pneg %p157
        %p305 = pneg %p154
        %s306 = sand.u32 %s144, 1
        %s307 = scalar_lea.sflag [#allocation4], %s306
        %s308 = sand.u32 %s144, 1
        %s309 = smul.addr %s308, 4
        %s310 = scalar_lea.vmem [#allocation3], %s309
        %s311 = smul.u32 4, %s24
        %p312 = scmp.lt.s32.totalorder %s23, 0
        %s313 = scalar_select %p312, %s23, 0
        %s314 = smul.addr %s313, 2
        %s315 = scalar_lea.vmem %s1, %s314
        %s316 = smul.u32 4, %s24
        %p317 = scmp.lt.s32.totalorder %s23, 0
        %s318 = scalar_select %p317, %s23, 0
        %p319 = scmp.lt.s32.totalorder %s316, 15
        %s320 = scalar_select %p319, %s316, 15
        %s321 = smul.addr %s318, 16
        %s322 = sadd.s32 %s320, %s321
        %s323 = smul.addr %s322, 4
        %s324 = scalar_lea.vmem %s3, %s323
        %s325 = smul.u32 4, %s24
        %v327 = vld [vmem:[%s315] sm:$0x3]
        %v328 = vld [vmem:[%s275] sm:$0xff]
        %v329 = vld [vmem:[%s275 + $0x8] sm:$0xff]
        %v330 = vld [vmem:[%s275 + $0x10] sm:$0xff]
        %v331 = vld [vmem:[%s275 + $0x18] sm:$0xff]
        %v332 = vld [vmem:[%s275 + $0x20] sm:$0xff]
        %v333 = vld [vmem:[%s275 + $0x28] sm:$0xff]
        %v334 = vld [vmem:[%s275 + $0x30] sm:$0xff]
        %v335 = vld [vmem:[%s275 + $0x38] sm:$0xff]
        %v336 = vld [vmem:[%s275 + $0x40] sm:$0xff]
        %v337 = vld [vmem:[%s275 + $0x48] sm:$0xff]
        %v338 = vld [vmem:[%s275 + $0x50] sm:$0xff]
        %v339 = vld [vmem:[%s275 + $0x58] sm:$0xff]
        %v340 = vld [vmem:[%s275 + $0x60] sm:$0xff]
        %v341 = vld [vmem:[%s275 + $0x68] sm:$0xff]
        %v342 = vld [vmem:[%s275 + $0x70] sm:$0xff]
        %v343 = vld [vmem:[%s275 + $0x78] sm:$0xff]
        %v344 = vld [vmem:[%s275 + $0x80] sm:$0xff]
        %v345 = vld [vmem:[%s275 + $0x88] sm:$0xff]
        %v346 = vld [vmem:[%s275 + $0x90] sm:$0xff]
        %v347 = vld [vmem:[%s275 + $0x98] sm:$0xff]
        %v348 = vld [vmem:[%s275 + $0xa0] sm:$0xff]
        %v349 = vld [vmem:[%s275 + $0xa8] sm:$0xff]
        %v350 = vld [vmem:[%s275 + $0xb0] sm:$0xff]
        %v351 = vld [vmem:[%s275 + $0xb8] sm:$0xff]
        %v352 = vld [vmem:[%s275 + $0xc0] sm:$0x33]
        %v353 = vld [vmem:[%s275 + $0xc8] sm:$0x33]
        %v354 = vld [vmem:[%s2] sm:$0x7]
        %356 = vset.pattern.permute.xlu0 0
        %357 = vperm.xlu0 %356, %v354
        %v358 = vpop.permute.xlu0 %357
        %v386 = vunpack.c.l.b16 %v328
        %v387 = vunpack.c.h.b16 %v328
        %v388 = vunpack.c.l.b16 %v329
        %v389 = vunpack.c.h.b16 %v329
        %v390 = vunpack.c.l.b16 %v330
        %v391 = vunpack.c.h.b16 %v330
        %v392 = vunpack.c.l.b16 %v331
        %v393 = vunpack.c.h.b16 %v331
        %v394 = vunpack.c.l.b16 %v332
        %v395 = vunpack.c.h.b16 %v332
        %v396 = vunpack.c.l.b16 %v333
        %v397 = vunpack.c.h.b16 %v333
        %v398 = vunpack.c.l.b16 %v334
        %v399 = vunpack.c.h.b16 %v334
        %v400 = vunpack.c.l.b16 %v335
        %v401 = vunpack.c.h.b16 %v335
        %v402 = vunpack.c.l.b16 %v336
        %v403 = vunpack.c.h.b16 %v336
        %v404 = vunpack.c.l.b16 %v337
        %v405 = vunpack.c.h.b16 %v337
        %v406 = vunpack.c.l.b16 %v338
        %v407 = vunpack.c.h.b16 %v338
        %v408 = vunpack.c.l.b16 %v339
        %v409 = vunpack.c.h.b16 %v339
        %v410 = vunpack.c.l.b16 %v340
        %v411 = vunpack.c.h.b16 %v340
        %v412 = vunpack.c.l.b16 %v341
        %v413 = vunpack.c.h.b16 %v341
        %v414 = vunpack.c.l.b16 %v342
        %v415 = vunpack.c.h.b16 %v342
        %v416 = vunpack.c.l.b16 %v343
        %v417 = vunpack.c.h.b16 %v343
        %v418 = vunpack.c.l.b16 %v344
        %v419 = vunpack.c.h.b16 %v344
        %v420 = vunpack.c.l.b16 %v345
        %v421 = vunpack.c.h.b16 %v345
        %v422 = vunpack.c.l.b16 %v346
        %v423 = vunpack.c.h.b16 %v346
        %v424 = vunpack.c.l.b16 %v347
        %v425 = vunpack.c.h.b16 %v347
        %v426 = vunpack.c.l.b16 %v348
        %v427 = vunpack.c.h.b16 %v348
        %v428 = vunpack.c.l.b16 %v349
        %v429 = vunpack.c.h.b16 %v349
        %v430 = vunpack.c.l.b16 %v350
        %v431 = vunpack.c.h.b16 %v350
        %v432 = vunpack.c.l.b16 %v351
        %v433 = vunpack.c.h.b16 %v351
        %v434 = vunpack.c.l.b16 %v352
        %v435 = vunpack.c.h.b16 %v352
        %v436 = vunpack.c.l.b16 %v353
        %v437 = vunpack.c.h.b16 %v353
        %v438 = vpack.c.b16 %v390, %v386
        %v439 = vpack.c.b16 %v391, %v387
        %v440 = vpack.c.b16 %v392, %v388
        %v441 = vpack.c.b16 %v393, %v389
        %v442 = vpack.c.b16 %v398, %v394
        %v443 = vpack.c.b16 %v399, %v395
        %v444 = vpack.c.b16 %v400, %v396
        %v445 = vpack.c.b16 %v401, %v397
        %v446 = vpack.c.b16 %v406, %v402
        %v447 = vpack.c.b16 %v407, %v403
        %v448 = vpack.c.b16 %v408, %v404
        %v449 = vpack.c.b16 %v409, %v405
        %v450 = vpack.c.b16 %v414, %v410
        %v451 = vpack.c.b16 %v415, %v411
        %v452 = vpack.c.b16 %v416, %v412
        %v453 = vpack.c.b16 %v417, %v413
        %v454 = vpack.c.b16 %v422, %v418
        %v455 = vpack.c.b16 %v423, %v419
        %v456 = vpack.c.b16 %v424, %v420
        %v457 = vpack.c.b16 %v425, %v421
        %v458 = vpack.c.b16 %v430, %v426
        %v459 = vpack.c.b16 %v431, %v427
        %v460 = vpack.c.b16 %v432, %v428
        %v461 = vpack.c.b16 %v433, %v429
        %v462 = vpack.c.b16 %v434, %v434
        %v463 = vpack.c.b16 %v435, %v435
        %v464 = vpack.c.b16 %v436, %v436
        %v465 = vpack.c.b16 %v437, %v437
        %vm490 = vcmask 818176
        %v492 = vsel %vm490, %v327, 0
        %vm494 = vcmask 1041408
        %v496 = vsel %vm494, %v462, 0
        %v499 = vsel %vm494, %v463, 0
        %v502 = vsel %vm494, %v464, 0
        %v505 = vsel %vm494, %v465, 0
        %507 = vmatprep.subr.bf16.mxu0 %v439
        %508 = vmatpush1.bf16.msra.mxu0 %v438
        %509 = vmatprep.subr.bf16.mxu0 %v443
        %510 = vmatpush1.bf16.msra.mxu0 %v442
        %511 = vmatprep.subr.bf16.mxu0 %v447
        %512 = vmatpush1.bf16.msra.mxu0 %v446
        %513 = vmatprep.subr.bf16.mxu0 %v451
        %514 = vmatpush1.bf16.msra.mxu0 %v450
        %515 = vmatprep.subr.bf16.mxu0 %v455
        %516 = vmatpush1.bf16.msra.mxu0 %v454
        %517 = vmatprep.subr.bf16.mxu0 %v459
        %518 = vmatpush1.bf16.msra.mxu0 %v458
        %519 = vmatprep.subr.bf16.mxu0 %v499
        %520 = vmatpush1.bf16.msra.mxu0 %v496
        %521 = vmatprep.subr.bf16.mxu0 0
        %522 = vmatpush1.bf16.msra.mxu0 0
        %523 = vmatprep.subr.bf16.mxu0 0
        %524 = vmatpush1.bf16.msra.mxu0 0
        %525 = vmatprep.subr.bf16.mxu0 0
        %526 = vmatpush1.bf16.msra.mxu0 0
        %527 = vmatprep.subr.bf16.mxu0 0
        %528 = vmatpush1.bf16.msra.mxu0 0
        %529 = vmatprep.subr.bf16.mxu0 0
        %530 = vmatpush1.bf16.msra.mxu0 0
        %531 = vmatprep.subr.bf16.mxu0 0
        %532 = vmatpush1.bf16.msra.mxu0 0
        %533 = vmatprep.subr.bf16.mxu0 0
        %534 = vmatpush1.bf16.msra.mxu0 0
        %535 = vmatprep.subr.bf16.mxu0 0
        %536 = vmatpush1.bf16.msra.mxu0 0
        %537 = vmatprep.subr.bf16.mxu0 0
        %538 = vmatpush1.bf16.msra.mxu0 0
        %539 = vmatprep.mubr.bf16.mxu0 0
        %540 = vmatmul.mubr.bf16.gmra.mrb[0].mxu0 %v492
        %v541 = vpop.f32.mrb[0].mxu0
        %v542 = vadd.f32 %v358, %v541
        %v543 = vpop.f32.mrb[0].mxu0
        %v544 = vadd.f32 %v358, %v543
        %v545 = vpop.f32.mrb[0].mxu0
        %v546 = vpop.f32.mrb[0].mxu0
        %547 = vdwg.mxu0
        %548 = vmatprep.subr.bf16.mxu0 %v441
        %549 = vmatpush1.bf16.msra.mxu0 %v440
        %550 = vmatprep.subr.bf16.mxu0 %v445
        %551 = vmatpush1.bf16.msra.mxu0 %v444
        %552 = vmatprep.subr.bf16.mxu0 %v449
        %553 = vmatpush1.bf16.msra.mxu0 %v448
        %554 = vmatprep.subr.bf16.mxu0 %v453
        %555 = vmatpush1.bf16.msra.mxu0 %v452
        %556 = vmatprep.subr.bf16.mxu0 %v457
        %557 = vmatpush1.bf16.msra.mxu0 %v456
        %558 = vmatprep.subr.bf16.mxu0 %v461
        %559 = vmatpush1.bf16.msra.mxu0 %v460
        %560 = vmatprep.subr.bf16.mxu0 %v505
        %561 = vmatpush1.bf16.msra.mxu0 %v502
        %562 = vmatprep.subr.bf16.mxu0 0
        %563 = vmatpush1.bf16.msra.mxu0 0
        %564 = vmatprep.subr.bf16.mxu0 0
        %565 = vmatpush1.bf16.msra.mxu0 0
        %566 = vmatprep.subr.bf16.mxu0 0
        %567 = vmatpush1.bf16.msra.mxu0 0
        %568 = vmatprep.subr.bf16.mxu0 0
        %569 = vmatpush1.bf16.msra.mxu0 0
        %570 = vmatprep.subr.bf16.mxu0 0
        %571 = vmatpush1.bf16.msra.mxu0 0
        %572 = vmatprep.subr.bf16.mxu0 0
        %573 = vmatpush1.bf16.msra.mxu0 0
        %574 = vmatprep.subr.bf16.mxu0 0
        %575 = vmatpush1.bf16.msra.mxu0 0
        %576 = vmatprep.subr.bf16.mxu0 0
        %577 = vmatpush1.bf16.msra.mxu0 0
        %578 = vmatprep.subr.bf16.mxu0 0
        %579 = vmatpush1.bf16.msra.mxu0 0
        %580 = vmatprep.mubr.bf16.mxu0 0
        %581 = vmatmul.mubr.bf16.gmra.mrb[0].mxu0 %v492
        %v582 = vpop.f32.mrb[0].mxu0
        %v583 = vadd.f32 %v358, %v582
        %v584 = vpop.f32.mrb[0].mxu0
        %v585 = vadd.f32 %v358, %v584
        %v586 = vpop.f32.mrb[0].mxu0
        %v587 = vpop.f32.mrb[0].mxu0
        %588 = vdwg.mxu0
        %v593 = vcombine.low %v542, %v544
        %v594 = vcombine.low %v583, %v585
        %597 = vst [vmem:[%s324] sm:$0x77] %v593
        %598 = vst [vmem:[%s324 + $0x8] sm:$0x77] %v594
        %vm599 = vcmask 1042432
        %v600 = vsel %vm599, %v542, 0.0
        %v601 = vsel %vm599, %v544, 0.0
        %v602 = vadd.f32 %v600, %v601
        %v603 = vsel %vm599, %v583, 0.0
        %v604 = vadd.f32 %v602, %v603
        %v605 = vsel %vm599, %v585, 0.0
        %v606 = vadd.f32 %v604, %v605
        %607 = vadd.xlane.f32.xlu0 %v606
        %v608 = vpop.xlane.xlu0 %607
        %vm609 = vcmask 2048
        %610 = vst.msk [vmem:[%s310] sm:$0x7] %vm609, %v608
        %v611 = vmul.f32 %v542, %v542
        %v612 = vmul.f32 %v544, %v544
        %v613 = vmul.f32 %v583, %v583
        %v614 = vmul.f32 %v585, %v585
        %v615 = vsel %vm599, %v611, 0.0
        %v616 = vsel %vm599, %v612, 0.0
        %v617 = vadd.f32 %v615, %v616
        %v618 = vsel %vm599, %v613, 0.0
        %v619 = vadd.f32 %v617, %v618
        %v620 = vsel %vm599, %v614, 0.0
        %v621 = vadd.f32 %v619, %v620
        %622 = vadd.xlane.f32.xlu0 %v621
        %v623 = vpop.xlane.xlu0 %622
        %vm624 = vcmask 10248
        %625 = vst.msk [vmem:[%s310] sm:$0x7] %vm624, %v623
        %s626 = smul.u32 4, %s24
        %p627 = scmp.lt.s32.totalorder %s23, 0
        %s628 = scalar_select %p627, %s23, 0
        %p629 = scmp.lt.s32.totalorder %s626, 15
        %s630 = scalar_select %p629, %s626, 15
        %s631 = smul.addr %s628, 16
        %s632 = sadd.s32 %s630, %s631
        %s633 = smul.addr %s632, 4
        %s634 = scalar_lea.vmem %s3, %s633
        %s635 = sand.u32 %s144, 1
        %s636 = scalar_lea.sflag [#allocation4], %s635
        %s637 = sand.u32 %s144, 1
        %s638 = smul.addr %s637, 4
        %s639 = scalar_lea.vmem [#allocation3], %s638
        // Predicated region
        $region56: #{_lambda_.19} parent=50 // pred_check
          %p640 = pneg %p126
        $region57: #{_lambda_.19} parent=50 // pred_check_branch
          %642 = sbr.rel (%p640) target = $region59
        $region58: #{_lambda_.19} parent=50 // pred_region
          %s643 = smul.u32 4, %s24
        $region59: #{_lambda_.19} parent=50 // pred_fallthru
          _
        // Predicated region
        $region60: #{_lambda_.19} parent=50 // pred_check
          %p644 = pneg %p154
        $region61: #{_lambda_.19} parent=50 // pred_check_branch
          %646 = sbr.rel (%p644) target = $region63
        $region62: #{_lambda_.19} parent=50 // pred_region
          %s648 = ssub.s32 64, 64
          %649 = vsyncadd %s636, %s648
          %s650 = smul.addr %s23, 4
          %s651 = sadd.s32 %s24, %s650
          %s652 = smul.addr %s651, 64
          %s653 = scalar_lea.hbm %s4, %s652
          %s655 = sshll.u32 %s639, 4
          %s656 = int_to_ptr.vmem [resolvable:$true] %s655
          %658 = dma.vmem_to_hbm [thread:$0]  %s656, 64, %s653, %s636
        $region63: #{_lambda_.19} parent=50 // pred_fallthru
          _
      $region51: #{_lambda_.19} parent=5 // pred_fallthru
        _
      %p659 = scmp.le.s32.totalorder 2, %s14
      // Predicated region
      $region64: #{_lambda_.19} parent=5 // pred_check
        %p660 = pneg %p659
      $region65: #{_lambda_.19} parent=5 // pred_check_branch
        %662 = sbr.rel (%p660) target = $region67
      $region66: #{_lambda_.19} parent=5 // pred_region
        %s663 = ssub.s32 %s14, 2
        // Predicated region
        $region68: #{_lambda_.19} parent=66 // pred_check
          %p664 = pneg %p132
        $region69: #{_lambda_.19} parent=66 // pred_check_branch
          %666 = sbr.rel (%p664) target = $region71
        $region70: #{_lambda_.19} parent=66 // pred_region
          %s667 = smul.u32 4, %s26
          %p668 = scmp.lt.s32.totalorder %s25, 0
          %s669 = scalar_select %p668, %s25, 0
          %p670 = scmp.lt.s32.totalorder %s667, 15
          %s671 = scalar_select %p670, %s667, 15
          %s672 = smul.addr %s669, 16
          %s673 = sadd.s32 %s671, %s672
          %s674 = smul.addr %s673, 4
          %s675 = scalar_lea.vmem %s3, %s674
        $region71: #{_lambda_.19} parent=66 // pred_fallthru
          _
        // Predicated region
        $region72: #{_lambda_.19} parent=66 // pred_check
          %p676 = pneg %p160
        $region73: #{_lambda_.19} parent=66 // pred_check_branch
          %678 = sbr.rel (%p676) target = $region75
        $region74: #{_lambda_.19} parent=66 // pred_region
          %s679 = sand.u32 %s145, 1
          %s680 = scalar_lea.sflag [#allocation4], %s679
          %s681 = sand.u32 %s145, 1
          %s682 = smul.addr %s681, 4
          %s683 = scalar_lea.vmem [#allocation3], %s682
          %684 = dma.done %s680, 64
        $region75: #{_lambda_.19} parent=66 // pred_fallthru
          _
      $region67: #{_lambda_.19} parent=5 // pred_fallthru
        _
    $region6: #{_lambda_.19} parent=1 // loop_footer
      %s18 = sadd.s32 1, %s14
    $region7: #{_lambda_.19} parent=1 // loop_footer_branch
      %13 = sbr.rel target = $region3
    $region8: #{_lambda_.19} parent=1 // loop_exit
      _
    %685 = vsyncpa [#allocation4], 1
    %s686 = scalar_lea.sflag [#allocation4], 1
    %687 = vsyncpa %s686, 1

// kernel: squeeze.17
$region0: #{squeeze.17}
  %s0 = inlined_call_operand.vmem [shape: f32[1,3,2048], index: 0, kind: input, shape index: {}]
  %s1 = inlined_call_operand.vmem [shape: f32[3,2,32,32], index: 1, kind: output, shape index: {}]
  $region1: #{squeeze.17} parent=0
    #allocation0 [shape = 'u8[65536]{0}', space=vmem, size = 0x10000, scoped, tag = 'scoped mem for input reshape']
    %s3 = sshllo.u32 0, 4
    %s4 = smul.addr 4, 15
    %s5 = scalar_lea.vmem %s0, %s4
    %v6 = vld [vmem:[%s5] sm:%s3]
    %s7 = scalar_lea.vmem [#allocation0], 120
    %8 = vst [vmem:[%s7] sm:%s3] %v6
    %s9 = smul.addr 4, 14
    %s10 = scalar_lea.vmem %s0, %s9
    %v11 = vld [vmem:[%s10] sm:%s3]
    %s12 = scalar_lea.vmem [#allocation0], 112
    %13 = vst [vmem:[%s12] sm:%s3] %v11
    %s14 = smul.addr 4, 13
    %s15 = scalar_lea.vmem %s0, %s14
    %v16 = vld [vmem:[%s15] sm:%s3]
    %s17 = scalar_lea.vmem [#allocation0], 104
    %18 = vst [vmem:[%s17] sm:%s3] %v16
    %s19 = smul.addr 4, 12
    %s20 = scalar_lea.vmem %s0, %s19
    %v21 = vld [vmem:[%s20] sm:%s3]
    %s22 = scalar_lea.vmem [#allocation0], 96
    %23 = vst [vmem:[%s22] sm:%s3] %v21
    %s24 = smul.addr 4, 11
    %s25 = scalar_lea.vmem %s0, %s24
    %v26 = vld [vmem:[%s25] sm:%s3]
    %s27 = scalar_lea.vmem [#allocation0], 88
    %28 = vst [vmem:[%s27] sm:%s3] %v26
    %s29 = smul.addr 4, 10
    %s30 = scalar_lea.vmem %s0, %s29
    %v31 = vld [vmem:[%s30] sm:%s3]
    %s32 = scalar_lea.vmem [#allocation0], 80
    %33 = vst [vmem:[%s32] sm:%s3] %v31
    %s34 = smul.addr 4, 9
    %s35 = scalar_lea.vmem %s0, %s34
    %v36 = vld [vmem:[%s35] sm:%s3]
    %s37 = scalar_lea.vmem [#allocation0], 72
    %38 = vst [vmem:[%s37] sm:%s3] %v36
    %s39 = smul.addr 4, 8
    %s40 = scalar_lea.vmem %s0, %s39
    %v41 = vld [vmem:[%s40] sm:%s3]
    %s42 = scalar_lea.vmem [#allocation0], 64
    %43 = vst [vmem:[%s42] sm:%s3] %v41
    %s44 = smul.addr 4, 7
    %s45 = scalar_lea.vmem %s0, %s44
    %v46 = vld [vmem:[%s45] sm:%s3]
    %s47 = scalar_lea.vmem [#allocation0], 56
    %48 = vst [vmem:[%s47] sm:%s3] %v46
    %s49 = smul.addr 4, 6
    %s50 = scalar_lea.vmem %s0, %s49
    %v51 = vld [vmem:[%s50] sm:%s3]
    %s52 = scalar_lea.vmem [#allocation0], 48
    %53 = vst [vmem:[%s52] sm:%s3] %v51
    %s54 = smul.addr 4, 5
    %s55 = scalar_lea.vmem %s0, %s54
    %v56 = vld [vmem:[%s55] sm:%s3]
    %s57 = scalar_lea.vmem [#allocation0], 40
    %58 = vst [vmem:[%s57] sm:%s3] %v56
    %s59 = smul.addr 4, 4
    %s60 = scalar_lea.vmem %s0, %s59
    %v61 = vld [vmem:[%s60] sm:%s3]
    %s62 = scalar_lea.vmem [#allocation0], 32
    %63 = vst [vmem:[%s62] sm:%s3] %v61
    %s64 = smul.addr 4, 3
    %s65 = scalar_lea.vmem %s0, %s64
    %v66 = vld [vmem:[%s65] sm:%s3]
    %s67 = scalar_lea.vmem [#allocation0], 24
    %68 = vst [vmem:[%s67] sm:%s3] %v66
    %s69 = smul.addr 4, 2
    %s70 = scalar_lea.vmem %s0, %s69
    %v71 = vld [vmem:[%s70] sm:%s3]
    %s72 = scalar_lea.vmem [#allocation0], 16
    %73 = vst [vmem:[%s72] sm:%s3] %v71
    %s74 = scalar_lea.vmem %s0, 4
    %v75 = vld [vmem:[%s74] sm:%s3]
    %s76 = scalar_lea.vmem [#allocation0], 8
    %77 = vst [vmem:[%s76] sm:%s3] %v75
    %v78 = vld [vmem:[%s0] sm:%s3]
    %79 = vst [vmem:[#allocation0] sm:%s3] %v78
    %v80 = vld [vmem:[#allocation0] sm:$0x7]
    %vm81 = vcmask 261120
    %82 = vst.msk [vmem:[%s1] sm:$0x1] %vm81, %v80
    %s83 = scalar_lea.vmem %s1, 63
    %84 = vst.msk [vmem:[%s83] sm:$0x2] %vm81, %v80
    %s85 = scalar_lea.vmem %s1, 126
    %86 = vst.msk [vmem:[%s85] sm:$0x4] %vm81, %v80
    %s87 = scalar_lea.vmem [#allocation0], 8
    %v88 = vld [vmem:[%s87] sm:$0x7]
    %vm89 = vcmask 261120
    %s90 = scalar_lea.vmem %s1, 4
    %91 = vst.msk [vmem:[%s90] sm:$0x1] %vm89, %v88
    %s92 = scalar_lea.vmem %s1, 67
    %93 = vst.msk [vmem:[%s92] sm:$0x2] %vm89, %v88
    %s94 = scalar_lea.vmem %s1, 130
    %95 = vst.msk [vmem:[%s94] sm:$0x4] %vm89, %v88
    %s96 = scalar_lea.vmem [#allocation0], 16
    %v97 = vld [vmem:[%s96] sm:$0x7]
    %vm98 = vcmask 261120
    %s99 = scalar_lea.vmem %s1, 8
    %100 = vst.msk [vmem:[%s99] sm:$0x1] %vm98, %v97
    %s101 = scalar_lea.vmem %s1, 71
    %102 = vst.msk [vmem:[%s101] sm:$0x2] %vm98, %v97
    %s103 = scalar_lea.vmem %s1, 134
    %104 = vst.msk [vmem:[%s103] sm:$0x4] %vm98, %v97
    %s105 = scalar_lea.vmem [#allocation0], 24
    %v106 = vld [vmem:[%s105] sm:$0x7]
    %vm107 = vcmask 261120
    %s108 = scalar_lea.vmem %s1, 12
    %109 = vst.msk [vmem:[%s108] sm:$0x1] %vm107, %v106
    %s110 = scalar_lea.vmem %s1, 75
    %111 = vst.msk [vmem:[%s110] sm:$0x2] %vm107, %v106
    %s112 = scalar_lea.vmem %s1, 138
    %113 = vst.msk [vmem:[%s112] sm:$0x4] %vm107, %v106
    %s114 = scalar_lea.vmem [#allocation0], 32
    %v115 = vld [vmem:[%s114] sm:$0x7]
    %vm116 = vcmask 261120
    %s117 = scalar_lea.vmem %s1, 16
    %118 = vst.msk [vmem:[%s117] sm:$0x1] %vm116, %v115
    %s119 = scalar_lea.vmem %s1, 79
    %120 = vst.msk [vmem:[%s119] sm:$0x2] %vm116, %v115
    %s121 = scalar_lea.vmem %s1, 142
    %122 = vst.msk [vmem:[%s121] sm:$0x4] %vm116, %v115
    %s123 = scalar_lea.vmem [#allocation0], 40
    %v124 = vld [vmem:[%s123] sm:$0x7]
    %vm125 = vcmask 261120
    %s126 = scalar_lea.vmem %s1, 20
    %127 = vst.msk [vmem:[%s126] sm:$0x1] %vm125, %v124
    %s128 = scalar_lea.vmem %s1, 83
    %129 = vst.msk [vmem:[%s128] sm:$0x2] %vm125, %v124
    %s130 = scalar_lea.vmem %s1, 146
    %131 = vst.msk [vmem:[%s130] sm:$0x4] %vm125, %v124
    %s132 = scalar_lea.vmem [#allocation0], 48
    %v133 = vld [vmem:[%s132] sm:$0x7]
    %vm134 = vcmask 261120
    %s135 = scalar_lea.vmem %s1, 24
    %136 = vst.msk [vmem:[%s135] sm:$0x1] %vm134, %v133
    %s137 = scalar_lea.vmem %s1, 87
    %138 = vst.msk [vmem:[%s137] sm:$0x2] %vm134, %v133
    %s139 = scalar_lea.vmem %s1, 150
    %140 = vst.msk [vmem:[%s139] sm:$0x4] %vm134, %v133
    %s141 = scalar_lea.vmem [#allocation0], 56
    %v142 = vld [vmem:[%s141] sm:$0x7]
    %vm143 = vcmask 261120
    %s144 = scalar_lea.vmem %s1, 28
    %145 = vst.msk [vmem:[%s144] sm:$0x1] %vm143, %v142
    %s146 = scalar_lea.vmem %s1, 91
    %147 = vst.msk [vmem:[%s146] sm:$0x2] %vm143, %v142
    %s148 = scalar_lea.vmem %s1, 154
    %149 = vst.msk [vmem:[%s148] sm:$0x4] %vm143, %v142
    %s150 = scalar_lea.vmem [#allocation0], 64
    %v151 = vld [vmem:[%s150] sm:$0x7]
    %vm152 = vcmask 261120
    %s153 = scalar_lea.vmem %s1, 32
    %154 = vst.msk [vmem:[%s153] sm:$0x1] %vm152, %v151
    %s155 = scalar_lea.vmem %s1, 95
    %156 = vst.msk [vmem:[%s155] sm:$0x2] %vm152, %v151
    %s157 = scalar_lea.vmem %s1, 158
    %158 = vst.msk [vmem:[%s157] sm:$0x4] %vm152, %v151
    %s159 = scalar_lea.vmem [#allocation0], 72
    %v160 = vld [vmem:[%s159] sm:$0x7]
    %vm161 = vcmask 261120
    %s162 = scalar_lea.vmem %s1, 36
    %163 = vst.msk [vmem:[%s162] sm:$0x1] %vm161, %v160
    %s164 = scalar_lea.vmem %s1, 99
    %165 = vst.msk [vmem:[%s164] sm:$0x2] %vm161, %v160
    %s166 = scalar_lea.vmem %s1, 162
    %167 = vst.msk [vmem:[%s166] sm:$0x4] %vm161, %v160
    %s168 = scalar_lea.vmem [#allocation0], 80
    %v169 = vld [vmem:[%s168] sm:$0x7]
    %vm170 = vcmask 261120
    %s171 = scalar_lea.vmem %s1, 40
    %172 = vst.msk [vmem:[%s171] sm:$0x1] %vm170, %v169
    %s173 = scalar_lea.vmem %s1, 103
    %174 = vst.msk [vmem:[%s173] sm:$0x2] %vm170, %v169
    %s175 = scalar_lea.vmem %s1, 166
    %176 = vst.msk [vmem:[%s175] sm:$0x4] %vm170, %v169
    %s177 = scalar_lea.vmem [#allocation0], 88
    %v178 = vld [vmem:[%s177] sm:$0x7]
    %vm179 = vcmask 261120
    %s180 = scalar_lea.vmem %s1, 44
    %181 = vst.msk [vmem:[%s180] sm:$0x1] %vm179, %v178
    %s182 = scalar_lea.vmem %s1, 107
    %183 = vst.msk [vmem:[%s182] sm:$0x2] %vm179, %v178
    %s184 = scalar_lea.vmem %s1, 170
    %185 = vst.msk [vmem:[%s184] sm:$0x4] %vm179, %v178
    %s186 = scalar_lea.vmem [#allocation0], 96
    %v187 = vld [vmem:[%s186] sm:$0x7]
    %vm188 = vcmask 261120
    %s189 = scalar_lea.vmem %s1, 48
    %190 = vst.msk [vmem:[%s189] sm:$0x1] %vm188, %v187
    %s191 = scalar_lea.vmem %s1, 111
    %192 = vst.msk [vmem:[%s191] sm:$0x2] %vm188, %v187
    %s193 = scalar_lea.vmem %s1, 174
    %194 = vst.msk [vmem:[%s193] sm:$0x4] %vm188, %v187
    %s195 = scalar_lea.vmem [#allocation0], 104
    %v196 = vld [vmem:[%s195] sm:$0x7]
    %vm197 = vcmask 261120
    %s198 = scalar_lea.vmem %s1, 52
    %199 = vst.msk [vmem:[%s198] sm:$0x1] %vm197, %v196
    %s200 = scalar_lea.vmem %s1, 115
    %201 = vst.msk [vmem:[%s200] sm:$0x2] %vm197, %v196
    %s202 = scalar_lea.vmem %s1, 178
    %203 = vst.msk [vmem:[%s202] sm:$0x4] %vm197, %v196
    %s204 = scalar_lea.vmem [#allocation0], 112
    %v205 = vld [vmem:[%s204] sm:$0x7]
    %vm206 = vcmask 261120
    %s207 = scalar_lea.vmem %s1, 56
    %208 = vst.msk [vmem:[%s207] sm:$0x1] %vm206, %v205
    %s209 = scalar_lea.vmem %s1, 119
    %210 = vst.msk [vmem:[%s209] sm:$0x2] %vm206, %v205
    %s211 = scalar_lea.vmem %s1, 182
    %212 = vst.msk [vmem:[%s211] sm:$0x4] %vm206, %v205
    %s213 = scalar_lea.vmem [#allocation0], 120
    %v214 = vld [vmem:[%s213] sm:$0x7]
    %vm215 = vcmask 261120
    %s216 = scalar_lea.vmem %s1, 60
    %217 = vst.msk [vmem:[%s216] sm:$0x1] %vm215, %v214
    %s218 = scalar_lea.vmem %s1, 123
    %219 = vst.msk [vmem:[%s218] sm:$0x2] %vm215, %v214
    %s220 = scalar_lea.vmem %s1, 186
    %221 = vst.msk [vmem:[%s220] sm:$0x4] %vm215, %v214
    %v222 = vld [vmem:[#allocation0] ss:$8 sm:$0xf]
    %v223 = vld [vmem:[#allocation0] ss:$8 sm:$0xf0]
    %vm224 = vcmask 1047556
    %v225 = vsel %vm224, %v223, %v222
    %226 = vrot.lane.b32.xlu0 %v225, 96
    %v227 = vpop.permute.xlu0 %226
    %vm228 = vcmask 261120
    %s229 = scalar_lea.vmem %s1, 1
    %230 = vst.msk [vmem:[%s229] ss:$4 sm:$0xff] %vm228, %v227
    %s231 = scalar_lea.vmem [#allocation0], 1
    %v232 = vld [vmem:[%s231] ss:$8 sm:$0xf]
    %s233 = scalar_lea.vmem [#allocation0], 1
    %v234 = vld [vmem:[%s233] ss:$8 sm:$0xf0]
    %vm235 = vcmask 1047556
    %v236 = vsel %vm235, %v234, %v232
    %237 = vrot.lane.b32.xlu0 %v236, 96
    %v238 = vpop.permute.xlu0 %237
    %vm239 = vcmask 261120
    %s240 = scalar_lea.vmem %s1, 65
    %241 = vst.msk [vmem:[%s240] ss:$4 sm:$0xff] %vm239, %v238
    %s242 = scalar_lea.vmem [#allocation0], 2
    %v243 = vld [vmem:[%s242] ss:$8 sm:$0xf]
    %s244 = scalar_lea.vmem [#allocation0], 2
    %v245 = vld [vmem:[%s244] ss:$8 sm:$0xf0]
    %vm246 = vcmask 1047556
    %v247 = vsel %vm246, %v245, %v243
    %248 = vrot.lane.b32.xlu0 %v247, 96
    %v249 = vpop.permute.xlu0 %248
    %vm250 = vcmask 261120
    %s251 = scalar_lea.vmem %s1, 129
    %252 = vst.msk [vmem:[%s251] ss:$4 sm:$0xff] %vm250, %v249
    %s253 = scalar_lea.vmem [#allocation0], 64
    %v254 = vld [vmem:[%s253] ss:$8 sm:$0xf]
    %s255 = scalar_lea.vmem [#allocation0], 64
    %v256 = vld [vmem:[%s255] ss:$8 sm:$0xf0]
    %vm257 = vcmask 1047556
    %v258 = vsel %vm257, %v256, %v254
    %259 = vrot.lane.b32.xlu0 %v258, 96
    %v260 = vpop.permute.xlu0 %259
    %vm261 = vcmask 261120
    %s262 = scalar_lea.vmem %s1, 33
    %263 = vst.msk [vmem:[%s262] ss:$4 sm:$0xff] %vm261, %v260
    %s264 = scalar_lea.vmem [#allocation0], 65
    %v265 = vld [vmem:[%s264] ss:$8 sm:$0xf]
    %s266 = scalar_lea.vmem [#allocation0], 65
    %v267 = vld [vmem:[%s266] ss:$8 sm:$0xf0]
    %vm268 = vcmask 1047556
    %v269 = vsel %vm268, %v267, %v265
    %270 = vrot.lane.b32.xlu0 %v269, 96
    %v271 = vpop.permute.xlu0 %270
    %vm272 = vcmask 261120
    %s273 = scalar_lea.vmem %s1, 97
    %274 = vst.msk [vmem:[%s273] ss:$4 sm:$0xff] %vm272, %v271
    %s275 = scalar_lea.vmem [#allocation0], 66
    %v276 = vld [vmem:[%s275] ss:$8 sm:$0xf]
    %s277 = scalar_lea.vmem [#allocation0], 66
    %v278 = vld [vmem:[%s277] ss:$8 sm:$0xf0]
    %vm279 = vcmask 1047556
    %v280 = vsel %vm279, %v278, %v276
    %281 = vrot.lane.b32.xlu0 %v280, 96
    %v282 = vpop.permute.xlu0 %281
    %vm283 = vcmask 261120
    %s284 = scalar_lea.vmem %s1, 161
    %285 = vst.msk [vmem:[%s284] ss:$4 sm:$0xff] %vm283, %v282
    %v286 = vld [vmem:[#allocation0] ss:$8 sm:$0xf]
    %v287 = vld [vmem:[#allocation0] ss:$8 sm:$0xf0]
    %vm288 = vcmask 1047556
    %v289 = vsel %vm288, %v287, %v286
    %290 = vrot.lane.b32.xlu0 %v289, 64
    %v291 = vpop.permute.xlu0 %290
    %vm292 = vcmask 261120
    %s293 = scalar_lea.vmem %s1, 2
    %294 = vst.msk [vmem:[%s293] ss:$4 sm:$0xff] %vm292, %v291
    %s295 = scalar_lea.vmem [#allocation0], 1
    %v296 = vld [vmem:[%s295] ss:$8 sm:$0xf]
    %s297 = scalar_lea.vmem [#allocation0], 1
    %v298 = vld [vmem:[%s297] ss:$8 sm:$0xf0]
    %vm299 = vcmask 1047556
    %v300 = vsel %vm299, %v298, %v296
    %301 = vrot.lane.b32.xlu0 %v300, 64
    %v302 = vpop.permute.xlu0 %301
    %vm303 = vcmask 261120
    %s304 = scalar_lea.vmem %s1, 66
    %305 = vst.msk [vmem:[%s304] ss:$4 sm:$0xff] %vm303, %v302
    %s306 = scalar_lea.vmem [#allocation0], 2
    %v307 = vld [vmem:[%s306] ss:$8 sm:$0xf]
    %s308 = scalar_lea.vmem [#allocation0], 2
    %v309 = vld [vmem:[%s308] ss:$8 sm:$0xf0]
    %vm310 = vcmask 1047556
    %v311 = vsel %vm310, %v309, %v307
    %312 = vrot.lane.b32.xlu0 %v311, 64
    %v313 = vpop.permute.xlu0 %312
    %vm314 = vcmask 261120
    %s315 = scalar_lea.vmem %s1, 130
    %316 = vst.msk [vmem:[%s315] ss:$4 sm:$0xff] %vm314, %v313
    %s317 = scalar_lea.vmem [#allocation0], 64
    %v318 = vld [vmem:[%s317] ss:$8 sm:$0xf]
    %s319 = scalar_lea.vmem [#allocation0], 64
    %v320 = vld [vmem:[%s319] ss:$8 sm:$0xf0]
    %vm321 = vcmask 1047556
    %v322 = vsel %vm321, %v320, %v318
    %323 = vrot.lane.b32.xlu0 %v322, 64
    %v324 = vpop.permute.xlu0 %323
    %vm325 = vcmask 261120
    %s326 = scalar_lea.vmem %s1, 34
    %327 = vst.msk [vmem:[%s326] ss:$4 sm:$0xff] %vm325, %v324
    %s328 = scalar_lea.vmem [#allocation0], 65
    %v329 = vld [vmem:[%s328] ss:$8 sm:$0xf]
    %s330 = scalar_lea.vmem [#allocation0], 65
    %v331 = vld [vmem:[%s330] ss:$8 sm:$0xf0]
    %vm332 = vcmask 1047556
    %v333 = vsel %vm332, %v331, %v329
    %334 = vrot.lane.b32.xlu0 %v333, 64
    %v335 = vpop.permute.xlu0 %334
    %vm336 = vcmask 261120
    %s337 = scalar_lea.vmem %s1, 98
    %338 = vst.msk [vmem:[%s337] ss:$4 sm:$0xff] %vm336, %v335
    %s339 = scalar_lea.vmem [#allocation0], 66
    %v340 = vld [vmem:[%s339] ss:$8 sm:$0xf]
    %s341 = scalar_lea.vmem [#allocation0], 66
    %v342 = vld [vmem:[%s341] ss:$8 sm:$0xf0]
    %vm343 = vcmask 1047556
    %v344 = vsel %vm343, %v342, %v340
    %345 = vrot.lane.b32.xlu0 %v344, 64
    %v346 = vpop.permute.xlu0 %345
    %vm347 = vcmask 261120
    %s348 = scalar_lea.vmem %s1, 162
    %349 = vst.msk [vmem:[%s348] ss:$4 sm:$0xff] %vm347, %v346
    %v350 = vld [vmem:[#allocation0] ss:$8 sm:$0xf]
    %v351 = vld [vmem:[#allocation0] ss:$8 sm:$0xf0]
    %vm352 = vcmask 1047556
    %v353 = vsel %vm352, %v351, %v350
    %354 = vrot.lane.b32.xlu0 %v353, 32
    %v355 = vpop.permute.xlu0 %354
    %vm356 = vcmask 261120
    %s357 = scalar_lea.vmem %s1, 3
    %358 = vst.msk [vmem:[%s357] ss:$4 sm:$0xff] %vm356, %v355
    %s359 = scalar_lea.vmem [#allocation0], 1
    %v360 = vld [vmem:[%s359] ss:$8 sm:$0xf]
    %s361 = scalar_lea.vmem [#allocation0], 1
    %v362 = vld [vmem:[%s361] ss:$8 sm:$0xf0]
    %vm363 = vcmask 1047556
    %v364 = vsel %vm363, %v362, %v360
    %365 = vrot.lane.b32.xlu0 %v364, 32
    %v366 = vpop.permute.xlu0 %365
    %vm367 = vcmask 261120
    %s368 = scalar_lea.vmem %s1, 67
    %369 = vst.msk [vmem:[%s368] ss:$4 sm:$0xff] %vm367, %v366
    %s370 = scalar_lea.vmem [#allocation0], 2
    %v371 = vld [vmem:[%s370] ss:$8 sm:$0xf]
    %s372 = scalar_lea.vmem [#allocation0], 2
    %v373 = vld [vmem:[%s372] ss:$8 sm:$0xf0]
    %vm374 = vcmask 1047556
    %v375 = vsel %vm374, %v373, %v371
    %376 = vrot.lane.b32.xlu0 %v375, 32
    %v377 = vpop.permute.xlu0 %376
    %vm378 = vcmask 261120
    %s379 = scalar_lea.vmem %s1, 131
    %380 = vst.msk [vmem:[%s379] ss:$4 sm:$0xff] %vm378, %v377
    %s381 = scalar_lea.vmem [#allocation0], 64
    %v382 = vld [vmem:[%s381] ss:$8 sm:$0xf]
    %s383 = scalar_lea.vmem [#allocation0], 64
    %v384 = vld [vmem:[%s383] ss:$8 sm:$0xf0]
    %vm385 = vcmask 1047556
    %v386 = vsel %vm385, %v384, %v382
    %387 = vrot.lane.b32.xlu0 %v386, 32
    %v388 = vpop.permute.xlu0 %387
    %vm389 = vcmask 261120
    %s390 = scalar_lea.vmem %s1, 35
    %391 = vst.msk [vmem:[%s390] ss:$4 sm:$0xff] %vm389, %v388
    %s392 = scalar_lea.vmem [#allocation0], 65
    %v393 = vld [vmem:[%s392] ss:$8 sm:$0xf]
    %s394 = scalar_lea.vmem [#allocation0], 65
    %v395 = vld [vmem:[%s394] ss:$8 sm:$0xf0]
    %vm396 = vcmask 1047556
    %v397 = vsel %vm396, %v395, %v393
    %398 = vrot.lane.b32.xlu0 %v397, 32
    %v399 = vpop.permute.xlu0 %398
    %vm400 = vcmask 261120
    %s401 = scalar_lea.vmem %s1, 99
    %402 = vst.msk [vmem:[%s401] ss:$4 sm:$0xff] %vm400, %v399
    %s403 = scalar_lea.vmem [#allocation0], 66
    %v404 = vld [vmem:[%s403] ss:$8 sm:$0xf]
    %s405 = scalar_lea.vmem [#allocation0], 66
    %v406 = vld [vmem:[%s405] ss:$8 sm:$0xf0]
    %vm407 = vcmask 1047556
    %v408 = vsel %vm407, %v406, %v404
    %409 = vrot.lane.b32.xlu0 %v408, 32
    %v410 = vpop.permute.xlu0 %409
    %vm411 = vcmask 261120
    %s412 = scalar_lea.vmem %s1, 163
    %413 = vst.msk [vmem:[%s412] ss:$4 sm:$0xff] %vm411, %v410

</llo_original>
